<compile_context>
chip_gen: v6e
topology: v6e:2x2x1
jax: 0.10.0
libtpu: 0.0.40
codegen_flags: <defaults>
</compile_context>

<pallas_src>
import functools

import jax
import jax.numpy as jnp
from jax.experimental import pallas as pl
from jax.experimental.pallas import tpu as pltpu


# ------------------------------ helpers ------------------------------------ #

def _round_up(x, m):
    return (x + m - 1) // m * m


def _pick_tm(m):
    """Largest row tile that divides m, keeps >=2 grid steps, sublane friendly."""
    for cand in (1024, 512, 256, 128, 64, 32, 16):
        if m % cand == 0 and m // cand >= 2:
            return cand
    return m  # single block fallback (still correct)


def _pick_th(ho, wo, max_rows=2048):
    """Output-row tile: divides ho, >=2 row steps, (th*wo)%8==0, bounded size."""
    for th in range(ho, 0, -1):
        if ho % th:
            continue
        if th * wo <= max_rows and ho // th >= 2 and (th * wo) % 8 == 0:
            return th
    return ho  # single row block fallback (block == full dim, still legal)


def _tap_parities(ksize, stride):
    """Sorted list of (kh%stride, kw%stride) parities actually used by the taps."""
    return sorted({(kh % stride, kw % stride)
                   for kh in range(ksize) for kw in range(ksize)})


def _pack_weights(w, cin_p, cout_p):
    """(kH, kW, Cin, Cout) f32 -> (kH*kW, Cin_p, Cout_p) bf16, zero padded."""
    kh, kw, cin, cout = w.shape
    wt = jnp.zeros((kh * kw, cin_p, cout_p), jnp.float32)
    wt = wt.at[:, :cin, :cout].set(w.reshape(kh * kw, cin, cout))
    return wt.astype(jnp.bfloat16)


@functools.lru_cache(maxsize=1)
def _conv_vmem_limit():
    """Generation-aware VMEM budget for the conv pallas_calls."""
    try:
        cap = int(pltpu.get_tpu_info().vmem_capacity_bytes)
    except Exception:
        return 64 * 1024 * 1024
    if cap >= 128 * 1024 * 1024:          # v5e / v6e: 128 MiB physical VMEM
        return 80 * 1024 * 1024
    # v7x-class (64 MiB per TensorCore): leave headroom for double buffering.
    return min(cap, max(32 * 1024 * 1024, cap * 2 // 3))


# ----------------------------- Pallas kernels ------------------------------ #

def _conv_bnstat_kernel(xw_ref, w_ref, o_ref, sum_ref, ssq_ref, acc_ref, *,
                        ksize, stride, th, wo, th_in):
    """Direct conv over kernel taps on a row-window + fused BN statistics.

    xw_ref : (1, 1, P*th_in, Wq, Cin_p) bf16  halo'd row window (P parity planes)
    w_ref  : (T, Cin_p, tn)             bf16  per-tap weight slices (T=ksize^2)
    o_ref  : (1, th*wo, tn)             bf16  conv output row tile
    sum_ref/ssq_ref : (1, 1, tn)        f32   per-image channel sum / sum-of-sq,
                                              resident & accumulated across the
                                              row-tile grid axis (pl.when init)
    acc_ref: (th*wo, tn)                f32   VMEM scratch accumulator
    """
    r = pl.program_id(2)
    cin_p = xw_ref.shape[-1]
    pidx = {ab: i for i, ab in enumerate(_tap_parities(ksize, stride))}

    first = True
    for kh in range(ksize):
        for kw in range(ksize):
            t = kh * ksize + kw
            p = pidx[(kh % stride, kw % stride)]
            ro, co = kh // stride, kw // stride
            base = p * th_in + ro
            # TODO(synk): replace the sublane-unaligned co slice with a
            #             pltpu.roll based shift / tap folding along K.
            xwin = xw_ref[0, 0, base:base + th, co:co + wo, :]   # (th, wo, Cin_p)
            xmat = xwin.reshape(th * wo, cin_p)                  # bf16
            part = jnp.dot(xmat, w_ref[t], preferred_element_type=jnp.float32)
            if first:
                acc_ref[...] = part
                first = False
            else:
                acc_ref[...] += part

    acc = acc_ref[...]
    o_ref[0] = acc.astype(o_ref.dtype)

    s_blk = jnp.sum(acc, axis=0, keepdims=True)          # (1, tn)
    q_blk = jnp.sum(acc * acc, axis=0, keepdims=True)    # (1, tn)

    @pl.when(r == 0)
    def _():
        sum_ref[0] = s_blk
        ssq_ref[0] = q_blk

    @pl.when(r > 0)
    def _():
        sum_ref[0] = sum_ref[0] + s_blk
        ssq_ref[0] = ssq_ref[0] + q_blk


def _bn_relu_kernel(x_ref, s_ref, b_ref, o_ref):
    # relu(x * scale + bias), scale/bias broadcast over rows, bf16 output.
    o_ref[...] = jnp.maximum(x_ref[...] * s_ref[...] + b_ref[...],
                             0.0).astype(o_ref.dtype)


def _bn_add_relu_proj_kernel(a_ref, r_ref, sa_ref, ba_ref, sr_ref, br_ref, o_ref):
    # relu( bn2(conv2_out) + bn_s(shortcut_conv_out) ), bf16 output.
    o_ref[...] = jnp.maximum(
        a_ref[...] * sa_ref[...] + ba_ref[...]
        + r_ref[...] * sr_ref[...] + br_ref[...],
        0.0,
    ).astype(o_ref.dtype)


def _bn_add_relu_id_kernel(a_ref, r_ref, sa_ref, ba_ref, o_ref):
    # relu( bn2(conv2_out) + x ) -- identity shortcut specialisation, bf16 out.
    o_ref[...] = jnp.maximum(
        a_ref[...] * sa_ref[...] + ba_ref[...] + r_ref[...], 0.0
    ).astype(o_ref.dtype)


# --------------------------- pallas_call wrappers --------------------------- #

_EW_PARAMS = pltpu.CompilerParams(
    dimension_semantics=("parallel",),
    vmem_limit_bytes=32 * 1024 * 1024,
)


def _build_conv_windows(xp, *, ksize, stride, ho, wo, th):
    """Build halo'd output-row windows (and stride parity planes) in XLA.

    xp : (N, Hp, Wp, Cin_p) bf16, already spatially zero-padded.
    Returns wins (N, R, P*th_in, Wq, Cin_p) bf16 plus (P, th_in, Wq).
    The pad / parity-slice / window-stack fuse into ~one pass over the input;
    windows duplicate only halo/th of the rows (no 9x im2col blowup).
    """
    n = xp.shape[0]
    cin_p = xp.shape[-1]
    halo = (ksize - 1) // stride
    th_in = th + halo
    parities = _tap_parities(ksize, stride)
    p_planes = len(parities)
    need_h, need_w = ho + halo, wo + halo

    planes = []
    for (a, b) in parities:
        sub = xp[:, a::stride, b::stride, :]
        ph, pw = sub.shape[1], sub.shape[2]
        if ph < need_h or pw < need_w:
            sub = jnp.pad(sub, ((0, 0), (0, max(0, need_h - ph)),
                                (0, max(0, need_w - pw)), (0, 0)))
        planes.append(sub[:, :need_h, :need_w, :])
    xt = jnp.stack(planes, axis=1)                    # (N, P, need_h, need_w, C)

    r_steps = ho // th
    wins = jnp.stack([xt[:, :, r * th:r * th + th_in] for r in range(r_steps)],
                     axis=1)                          # (N, R, P, th_in, need_w, C)
    wins = wins.reshape(n, r_steps, p_planes * th_in, need_w, cin_p)
    return wins, p_planes, th_in, need_w


def conv2d_bn_stats(x_nhwc, w_taps, *, ksize, stride, pad):
    """Conv (NHWC, channel-padded, bf16) + fused per-image BN partial statistics.

    Returns out (N, Ho*Wo, Cout_p) bf16, psum (N,1,Cout_p) f32,
            pssq (N,1,Cout_p) f32, (Ho, Wo).
    """
    n, h, w, cin_p = x_nhwc.shape
    n_taps, w_cin, cout_p = w_taps.shape
    assert w_cin == cin_p and n_taps == ksize * ksize

    ho = (h + 2 * pad - ksize) // stride + 1
    wo = (w + 2 * pad - ksize) // stride + 1
    th = _pick_th(ho, wo)
    r_steps = ho // th

    xp = x_nhwc
    if pad:
        xp = jnp.pad(xp, ((0, 0), (pad, pad), (pad, pad), (0, 0)))
    wins, p_planes, th_in, wq = _build_conv_windows(
        xp, ksize=ksize, stride=stride, ho=ho, wo=wo, th=th)

    tn = 256 if cout_p % 256 == 0 else 128            # 256-wide MXU friendly
    j_tiles = cout_p // tn
    grid = (j_tiles, n, r_steps)                      # cout OUTERMOST -> weights
                                                      # fetched once per cout tile

    kern = functools.partial(_conv_bnstat_kernel, ksize=ksize, stride=stride,
                             th=th, wo=wo, th_in=th_in)

    flops = 2 * n_taps * n * ho * wo * cin_p * cout_p
    bytes_acc = (wins.size * 2) * j_tiles + w_taps.size * 2 \
        + n * ho * wo * cout_p * 2 + 2 * n * cout_p * 4
    cost = pl.CostEstimate(flops=flops, transcendentals=0,
                           bytes_accessed=bytes_acc)

    out, psum, pssq = pl.pallas_call(
        kern,
        out_shape=(
            jax.ShapeDtypeStruct((n, ho * wo, cout_p), jnp.bfloat16),
            jax.ShapeDtypeStruct((n, 1, cout_p), jnp.float32),
            jax.ShapeDtypeStruct((n, 1, cout_p), jnp.float32),
        ),
        grid=grid,
        in_specs=[
            pl.BlockSpec((1, 1, p_planes * th_in, wq, cin_p),
                         lambda j, i, r: (i, r, 0, 0, 0)),
            pl.BlockSpec((n_taps, cin_p, tn), lambda j, i, r: (0, 0, j)),
        ],
        out_specs=(
            pl.BlockSpec((1, th * wo, tn), lambda j, i, r: (i, r, j)),
            pl.BlockSpec((1, 1, tn), lambda j, i, r: (i, 0, j)),
            pl.BlockSpec((1, 1, tn), lambda j, i, r: (i, 0, j)),
        ),
        scratch_shapes=[pltpu.VMEM((th * wo, tn), jnp.float32)],
        compiler_params=pltpu.CompilerParams(
            dimension_semantics=("parallel", "parallel", "arbitrary"),
            vmem_limit_bytes=_conv_vmem_limit(),
        ),
        cost_estimate=cost,
    )(wins, w_taps)
    return out, psum, pssq, (ho, wo)


def bn_relu(x2d, scale, bias):
    m, c = x2d.shape
    tm = _pick_tm(m)
    return pl.pallas_call(
        _bn_relu_kernel,
        out_shape=jax.ShapeDtypeStruct((m, c), jnp.bfloat16),
        grid=(m // tm,),
        in_specs=[
            pl.BlockSpec((tm, c), lambda i: (i, 0)),
            pl.BlockSpec((1, c), lambda i: (0, 0)),
            pl.BlockSpec((1, c), lambda i: (0, 0)),
        ],
        out_specs=pl.BlockSpec((tm, c), lambda i: (i, 0)),
        compiler_params=_EW_PARAMS,
    )(x2d, scale.reshape(1, c), bias.reshape(1, c))


def bn_add_relu(a2d, sa, ba, r2d, sr=None, br=None):
    m, c = a2d.shape
    tm = _pick_tm(m)
    row = pl.BlockSpec((tm, c), lambda i: (i, 0))
    vec = pl.BlockSpec((1, c), lambda i: (0, 0))
    if sr is None:  # identity shortcut: no extra FMA / broadcast operands
        return pl.pallas_call(
            _bn_add_relu_id_kernel,
            out_shape=jax.ShapeDtypeStruct((m, c), jnp.bfloat16),
            grid=(m // tm,),
            in_specs=[row, row, vec, vec],
            out_specs=row,
            compiler_params=_EW_PARAMS,
        )(a2d, r2d, sa.reshape(1, c), ba.reshape(1, c))
    return pl.pallas_call(
        _bn_add_relu_proj_kernel,
        out_shape=jax.ShapeDtypeStruct((m, c), jnp.bfloat16),
        grid=(m // tm,),
        in_specs=[row, row, vec, vec, vec, vec],
        out_specs=row,
        compiler_params=_EW_PARAMS,
    )(a2d, r2d, sa.reshape(1, c), ba.reshape(1, c),
      sr.reshape(1, c), br.reshape(1, c))


# -------------------------------- JAX glue --------------------------------- #

def _fold_bn(psum, pssq, count, gamma, beta, cout_p, eps=1e-5):
    """Fold batch statistics (from fused kernel partials) into scale/bias.

    Padded channels get gamma=beta=0 -> scale=bias=0 (they stay exactly zero).
    """
    tot = jnp.sum(psum, axis=0).reshape(cout_p)
    tot2 = jnp.sum(pssq, axis=0).reshape(cout_p)
    mean = tot / count
    var = jnp.maximum(tot2 / count - mean * mean, 0.0)   # biased, f32 acc
    g = jnp.pad(gamma, (0, cout_p - gamma.shape[0]))     # pad with 0
    b = jnp.pad(beta, (0, cout_p - beta.shape[0]))
    scale = g * jax.lax.rsqrt(var + eps)
    bias = b - mean * scale
    return scale, bias


def init_basic_block_params(key, in_planes, planes, stride):
    ks = jax.random.split(key, 8)
    params = {
        "w1": 0.1 * jax.random.normal(ks[0], (3, 3, in_planes, planes), jnp.float32),
        "gamma1": 1.0 + 0.1 * jax.random.normal(ks[1], (planes,), jnp.float32),
        "beta1": 0.1 * jax.random.normal(ks[2], (planes,), jnp.float32),
        "w2": 0.1 * jax.random.normal(ks[3], (3, 3, planes, planes), jnp.float32),
        "gamma2": 1.0 + 0.1 * jax.random.normal(ks[4], (planes,), jnp.float32),
        "beta2": 0.1 * jax.random.normal(ks[5], (planes,), jnp.float32),
        "stride": stride,
    }
    if stride != 1 or in_planes != planes:  # projection shortcut (1x1 conv + BN)
        params["ws"] = 0.1 * jax.random.normal(ks[6], (1, 1, in_planes, planes),
                                               jnp.float32)
        params["gammas"] = 1.0 + 0.1 * jax.random.normal(ks[7], (planes,), jnp.float32)
        params["betas"] = jnp.zeros((planes,), jnp.float32)
    return params


def basic_block_forward(x, params):
    """Mirrors BasicBlock.forward: accepts x (NCHW) or (x, output_list) tuple,
    returns (out_NCHW, output_list) with out appended."""
    if isinstance(x, tuple):
        x, output_list = x
    else:
        output_list = []

    stride = params["stride"]
    cin, planes = params["w1"].shape[2], params["w1"].shape[3]
    cin_p = _round_up(cin, 128)      # lane-dense channel padding
    cout_p = _round_up(planes, 128)

    # NCHW f32 -> NHWC bf16 (cast before the channel/spatial pads: half bytes)
    xh = jnp.transpose(x, (0, 2, 3, 1)).astype(jnp.bfloat16)
    n, h, w, _ = xh.shape
    xh_p = jnp.pad(xh, ((0, 0), (0, 0), (0, 0), (0, cin_p - cin)))

    # --- conv1 (3x3, stride) with fused BN statistics ----------------------- #
    w1t = _pack_weights(params["w1"], cin_p, cout_p)
    c1, ps1, pq1, (ho, wo) = conv2d_bn_stats(xh_p, w1t, ksize=3, stride=stride, pad=1)
    s1, b1 = _fold_bn(ps1, pq1, n * ho * wo, params["gamma1"], params["beta1"], cout_p)

    # --- bn1 + relu (bf16 output feeds conv2) ------------------------------- #
    y1 = bn_relu(c1.reshape(n * ho * wo, cout_p), s1, b1).reshape(n, ho, wo, cout_p)

    # --- conv2 (3x3, stride 1) with fused BN statistics --------------------- #
    # (spatial zero-pad for conv2 is fused by XLA with the window-stack pass)
    w2t = _pack_weights(params["w2"], cout_p, cout_p)
    c2, ps2, pq2, _ = conv2d_bn_stats(y1, w2t, ksize=3, stride=1, pad=1)
    s2, b2 = _fold_bn(ps2, pq2, n * ho * wo, params["gamma2"], params["beta2"], cout_p)
    c2_2d = c2.reshape(n * ho * wo, cout_p)

    # --- shortcut + final fused bn2 + add + relu ----------------------------- #
    if "ws" in params:  # projection shortcut: 1x1 conv (stride) + BN
        wst = _pack_weights(params["ws"], cin_p, cout_p)
        cs, pss, pqs, _ = conv2d_bn_stats(xh_p, wst, ksize=1, stride=stride, pad=0)
        ss, bs = _fold_bn(pss, pqs, n * ho * wo, params["gammas"], params["betas"], cout_p)
        out2d = bn_add_relu(c2_2d, s2, b2, cs.reshape(n * ho * wo, cout_p), ss, bs)
    else:               # identity shortcut (stride==1, cin==planes)
        r2d = xh_p.reshape(n * ho * wo, cout_p)
        out2d = bn_add_relu(c2_2d, s2, b2, r2d)

    out_nhwc = out2d.reshape(n, ho, wo, cout_p)[..., :planes]
    out = jnp.transpose(out_nhwc, (0, 3, 1, 2)).astype(jnp.float32)  # -> NCHW f32

    output_list.append(out)
    return out, output_list


# --------------------------- pure-JAX reference ----------------------------- #

def _block_ref(x, params, eps=1e-5):
    """f32 XLA reference of BasicBlock.forward (train-mode BN, biased var)."""
    def conv(v, wt, stride, pad):
        return jax.lax.conv_general_dilated(
            v, wt, window_strides=(stride, stride),
            padding=((pad, pad), (pad, pad)),
            dimension_numbers=("NCHW", "HWIO", "NCHW"))

    def bn(v, gamma, beta):
        mean = jnp.mean(v, axis=(0, 2, 3), keepdims=True)
        var = jnp.mean((v - mean) ** 2, axis=(0, 2, 3), keepdims=True)
        g = gamma.reshape(1, -1, 1, 1)
        b = beta.reshape(1, -1, 1, 1)
        return g * (v - mean) * jax.lax.rsqrt(var + eps) + b

    s = params["stride"]
    out = jax.nn.relu(bn(conv(x, params["w1"], s, 1), params["gamma1"], params["beta1"]))
    out = bn(conv(out, params["w2"], 1, 1), params["gamma2"], params["beta2"])
    if "ws" in params:
        short = bn(conv(x, params["ws"], s, 0), params["gammas"], params["betas"])
    else:
        short = x
    return jax.nn.relu(out + short)


# ---------------------------------- main ----------------------------------- #

if __name__ == "__main__":
    key = jax.random.PRNGKey(0)
    k_x, k_p1, k_p2 = jax.random.split(key, 3)

    in_planes, planes, stride = 4, 8, 2
    x = jax.random.normal(k_x, (2, in_planes, 16, 16), jnp.float32)  # NCHW

    # Block 1: projection-shortcut path (stride 2).  Block 2: identity path,
    # fed the (out, output_list) tuple exactly like stacked BasicBlocks.
    params1 = init_basic_block_params(k_p1, in_planes, planes, stride)
    params2 = init_basic_block_params(k_p2, planes, planes, 1)

    fwd1 = jax.jit(functools.partial(basic_block_forward, params=params1))
    fwd2 = jax.jit(functools.partial(basic_block_forward, params=params2))

    out1, lst1 = fwd1(x)
    out2, lst2 = fwd2((out1, lst1))
    out2 = jax.block_until_ready(out2)

    assert out1.shape == (2, planes, 16 // stride, 16 // stride)
    assert out2.shape == (2, planes, 16 // stride, 16 // stride)
    assert len(lst2) == 2

    # Correctness vs. pure-JAX f32 reference (bf16 MXU inputs -> loose tol).
    ref1 = _block_ref(x, params1)
    ref2 = _block_ref(ref1, params2)
    err1 = float(jnp.max(jnp.abs(out1 - ref1)))
    err2 = float(jnp.max(jnp.abs(out2 - ref2)))
    assert err1 < 0.35, ("block1 mismatch", err1)
    assert err2 < 0.35, ("block2 mismatch", err2)

    print("KERNEL_OK")
</pallas_src>

<mosaic_0001>
module attributes {stable_mosaic.version = 11 : i64} {
  func.func @_conv_bnstat_kernel(%arg0: i32, %arg1: i32, %arg2: i32, %arg3: memref<1x1x4x8x128xbf16, #tpu.memory_space<vmem>>, %arg4: memref<1x128x128xbf16, #tpu.memory_space<vmem>>, %arg5: memref<1x32x128xbf16, #tpu.memory_space<vmem>>, %arg6: memref<1x1x128xf32, #tpu.memory_space<vmem>>, %arg7: memref<1x1x128xf32, #tpu.memory_space<vmem>>, %arg8: memref<32x128xf32, #tpu.memory_space<vmem>>) attributes {dimension_semantics = [#tpu.dimension_semantics<parallel>, #tpu.dimension_semantics<parallel>, #tpu.dimension_semantics<arbitrary>], iteration_bounds = array<i64: 1, 2, 2>, scalar_prefetch = 0 : i64, scratch_operands = 1 : i64, tpu.core_type = #tpu.core_type<tc>, window_params = [{transform_indices = @transform_0, window_bounds = array<i64: 1, 1, 4, 8, 128>}, {transform_indices = @transform_1, window_bounds = array<i64: 1, 128, 128>}, {transform_indices = @transform_2, window_bounds = array<i64: 1, 32, 128>}, {transform_indices = @transform_3, window_bounds = array<i64: 1, 1, 128>}, {transform_indices = @transform_4, window_bounds = array<i64: 1, 1, 128>}]} {
    %c0 = arith.constant 0 : index
    %c0_0 = arith.constant 0 : index
    %c0_1 = arith.constant 0 : index
    %c0_2 = arith.constant 0 : index
    %c0_3 = arith.constant 0 : index
    %0 = vector.load %arg3[%c0, %c0_0, %c0_1, %c0_2, %c0_3] : memref<1x1x4x8x128xbf16, #tpu.memory_space<vmem>>, vector<1x1x4x8x128xbf16>
    %1 = vector.shape_cast %0 : vector<1x1x4x8x128xbf16> to vector<4x8x128xbf16>
    %2 = vector.shape_cast %1 : vector<4x8x128xbf16> to vector<32x128xbf16>
    %c0_4 = arith.constant 0 : index
    %c0_5 = arith.constant 0 : index
    %c0_6 = arith.constant 0 : index
    %3 = vector.load %arg4[%c0_4, %c0_5, %c0_6] : memref<1x128x128xbf16, #tpu.memory_space<vmem>>, vector<1x128x128xbf16>
    %4 = vector.shape_cast %3 : vector<1x128x128xbf16> to vector<128x128xbf16>
    %cst = arith.constant dense<0.000000e+00> : vector<32x128xf32>
    %5 = tpu.matmul %2, %4, %cst {dimension_numbers = #tpu.dot_dimension_numbers<[1], [0], [0], [1], [0, 0, 1, 1], [], []>} : vector<32x128xbf16>, vector<128x128xbf16>, vector<32x128xf32> -> vector<32x128xf32>
    %c0_7 = arith.constant 0 : index
    %c0_8 = arith.constant 0 : index
    %6 = vector.load %arg8[%c0_7, %c0_8] : memref<32x128xf32, #tpu.memory_space<vmem>>, vector<32x128xf32>
    tpu.vector_store %arg8[%c0_7, %c0_8], %5 {strides = array<i32>} : memref<32x128xf32, #tpu.memory_space<vmem>>, vector<32x128xf32>,
    %c0_9 = arith.constant 0 : index
    %c0_10 = arith.constant 0 : index
    %7 = vector.load %arg8[%c0_9, %c0_10] : memref<32x128xf32, #tpu.memory_space<vmem>>, vector<32x128xf32>
    %8 = arith.truncf %7 : vector<32x128xf32> to vector<32x128xbf16>
    %c0_11 = arith.constant 0 : index
    %c0_12 = arith.constant 0 : index
    %c0_13 = arith.constant 0 : index
    %9 = vector.load %arg5[%c0_11, %c0_12, %c0_13] : memref<1x32x128xbf16, #tpu.memory_space<vmem>>, vector<1x32x128xbf16>
    %10 = vector.shape_cast %9 : vector<1x32x128xbf16> to vector<32x128xbf16>
    %11 = vector.shape_cast %8 : vector<32x128xbf16> to vector<1x32x128xbf16>
    tpu.vector_store %arg5[%c0_11, %c0_12, %c0_13], %11 {strides = array<i32>} : memref<1x32x128xbf16, #tpu.memory_space<vmem>>, vector<1x32x128xbf16>,
    %cst_14 = arith.constant dense<0.000000e+00> : vector<128xf32>
    %12 = vector.multi_reduction <add>, %7, %cst_14 [0] : vector<32x128xf32> to vector<128xf32>
    %13 = vector.shape_cast %12 : vector<128xf32> to vector<1x128xf32>
    %14 = arith.mulf %7, %7 : vector<32x128xf32>
    %cst_15 = arith.constant dense<0.000000e+00> : vector<128xf32>
    %15 = vector.multi_reduction <add>, %14, %cst_15 [0] : vector<32x128xf32> to vector<128xf32>
    %16 = vector.shape_cast %15 : vector<128xf32> to vector<1x128xf32>
    %c0_i32 = arith.constant 0 : i32
    %17 = arith.cmpi eq, %arg2, %c0_i32 : i32
    %18 = arith.extui %17 : i1 to i32
    %c0_i32_16 = arith.constant 0 : i32
    %19 = arith.cmpi ne, %18, %c0_i32_16 : i32
    scf.if %19 {
      %c0_19 = arith.constant 0 : index
      %c0_20 = arith.constant 0 : index
      %c0_21 = arith.constant 0 : index
      %23 = vector.load %arg6[%c0_19, %c0_20, %c0_21] : memref<1x1x128xf32, #tpu.memory_space<vmem>>, vector<1x1x128xf32>
      %24 = vector.shape_cast %23 : vector<1x1x128xf32> to vector<1x128xf32>
      %25 = vector.shape_cast %13 : vector<1x128xf32> to vector<1x1x128xf32>
      tpu.vector_store %arg6[%c0_19, %c0_20, %c0_21], %25 {strides = array<i32>} : memref<1x1x128xf32, #tpu.memory_space<vmem>>, vector<1x1x128xf32>,
      %c0_22 = arith.constant 0 : index
      %c0_23 = arith.constant 0 : index
      %c0_24 = arith.constant 0 : index
      %26 = vector.load %arg7[%c0_22, %c0_23, %c0_24] : memref<1x1x128xf32, #tpu.memory_space<vmem>>, vector<1x1x128xf32>
      %27 = vector.shape_cast %26 : vector<1x1x128xf32> to vector<1x128xf32>
      %28 = vector.shape_cast %16 : vector<1x128xf32> to vector<1x1x128xf32>
      tpu.vector_store %arg7[%c0_22, %c0_23, %c0_24], %28 {strides = array<i32>} : memref<1x1x128xf32, #tpu.memory_space<vmem>>, vector<1x1x128xf32>,
    } else {
    }
    %c0_i32_17 = arith.constant 0 : i32
    %20 = arith.cmpi sgt, %arg2, %c0_i32_17 : i32
    %21 = arith.extui %20 : i1 to i32
    %c0_i32_18 = arith.constant 0 : i32
    %22 = arith.cmpi ne, %21, %c0_i32_18 : i32
    scf.if %22 {
      %c0_19 = arith.constant 0 : index
      %c0_20 = arith.constant 0 : index
      %c0_21 = arith.constant 0 : index
      %23 = vector.load %arg6[%c0_19, %c0_20, %c0_21] : memref<1x1x128xf32, #tpu.memory_space<vmem>>, vector<1x1x128xf32>
      %24 = vector.shape_cast %23 : vector<1x1x128xf32> to vector<1x128xf32>
      %25 = arith.addf %24, %13 : vector<1x128xf32>
      %c0_22 = arith.constant 0 : index
      %c0_23 = arith.constant 0 : index
      %c0_24 = arith.constant 0 : index
      %26 = vector.load %arg6[%c0_22, %c0_23, %c0_24] : memref<1x1x128xf32, #tpu.memory_space<vmem>>, vector<1x1x128xf32>
      %27 = vector.shape_cast %26 : vector<1x1x128xf32> to vector<1x128xf32>
      %28 = vector.shape_cast %25 : vector<1x128xf32> to vector<1x1x128xf32>
      tpu.vector_store %arg6[%c0_22, %c0_23, %c0_24], %28 {strides = array<i32>} : memref<1x1x128xf32, #tpu.memory_space<vmem>>, vector<1x1x128xf32>,
      %c0_25 = arith.constant 0 : index
      %c0_26 = arith.constant 0 : index
      %c0_27 = arith.constant 0 : index
      %29 = vector.load %arg7[%c0_25, %c0_26, %c0_27] : memref<1x1x128xf32, #tpu.memory_space<vmem>>, vector<1x1x128xf32>
      %30 = vector.shape_cast %29 : vector<1x1x128xf32> to vector<1x128xf32>
      %31 = arith.addf %30, %16 : vector<1x128xf32>
      %c0_28 = arith.constant 0 : index
      %c0_29 = arith.constant 0 : index
      %c0_30 = arith.constant 0 : index
      %32 = vector.load %arg7[%c0_28, %c0_29, %c0_30] : memref<1x1x128xf32, #tpu.memory_space<vmem>>, vector<1x1x128xf32>
      %33 = vector.shape_cast %32 : vector<1x1x128xf32> to vector<1x128xf32>
      %34 = vector.shape_cast %31 : vector<1x128xf32> to vector<1x1x128xf32>
      tpu.vector_store %arg7[%c0_28, %c0_29, %c0_30], %34 {strides = array<i32>} : memref<1x1x128xf32, #tpu.memory_space<vmem>>, vector<1x1x128xf32>,
    } else {
    }
    return
  }
  func.func @transform_0(%arg0: i32, %arg1: i32, %arg2: i32) -> (i32, i32, i32, i32, i32) {
    %c0_i32 = arith.constant 0 : i32
    %c0_i32_0 = arith.constant 0 : i32
    %c0_i32_1 = arith.constant 0 : i32
    %c0_i32_2 = arith.constant 0 : i32
    return %arg1, %arg2, %c0_i32, %c0_i32_0, %c0_i32_1 : i32, i32, i32, i32, i32
  }
  func.func @transform_1(%arg0: i32, %arg1: i32, %arg2: i32) -> (i32, i32, i32) {
    %c0_i32 = arith.constant 0 : i32
    %c0_i32_0 = arith.constant 0 : i32
    %c0_i32_1 = arith.constant 0 : i32
    return %c0_i32, %c0_i32_0, %arg0 : i32, i32, i32
  }
  func.func @transform_2(%arg0: i32, %arg1: i32, %arg2: i32) -> (i32, i32, i32) {
    %c0_i32 = arith.constant 0 : i32
    return %arg1, %arg2, %arg0 : i32, i32, i32
  }
  func.func @transform_3(%arg0: i32, %arg1: i32, %arg2: i32) -> (i32, i32, i32) {
    %c0_i32 = arith.constant 0 : i32
    %c0_i32_0 = arith.constant 0 : i32
    return %arg1, %c0_i32, %arg0 : i32, i32, i32
  }
  func.func @transform_4(%arg0: i32, %arg1: i32, %arg2: i32) -> (i32, i32, i32) {
    %c0_i32 = arith.constant 0 : i32
    %c0_i32_0 = arith.constant 0 : i32
    return %arg1, %c0_i32, %arg0 : i32, i32, i32
  }
}

module attributes {stable_mosaic.version = 11 : i64} {
  func.func @_bn_relu_kernel(%arg0: i32, %arg1: memref<64x128xbf16, #tpu.memory_space<vmem>>, %arg2: memref<1x128xf32, #tpu.memory_space<vmem>>, %arg3: memref<1x128xf32, #tpu.memory_space<vmem>>, %arg4: memref<64x128xbf16, #tpu.memory_space<vmem>>) attributes {dimension_semantics = [#tpu.dimension_semantics<parallel>], iteration_bounds = array<i64: 2>, scalar_prefetch = 0 : i64, scratch_operands = 0 : i64, tpu.core_type = #tpu.core_type<tc>, window_params = [{transform_indices = @transform_0, window_bounds = array<i64: 64, 128>}, {pipeline_mode = #tpu.pipeline_mode<synchronous>, transform_indices = @transform_1, window_bounds = array<i64: 1, 128>}, {pipeline_mode = #tpu.pipeline_mode<synchronous>, transform_indices = @transform_2, window_bounds = array<i64: 1, 128>}, {transform_indices = @transform_3, window_bounds = array<i64: 64, 128>}]} {
    %c0 = arith.constant 0 : index
    %c0_0 = arith.constant 0 : index
    %0 = vector.load %arg1[%c0, %c0_0] : memref<64x128xbf16, #tpu.memory_space<vmem>>, vector<64x128xbf16>
    %c0_1 = arith.constant 0 : index
    %c0_2 = arith.constant 0 : index
    %1 = vector.load %arg2[%c0_1, %c0_2] : memref<1x128xf32, #tpu.memory_space<vmem>>, vector<1x128xf32>
    %2 = arith.extf %0 : vector<64x128xbf16> to vector<64x128xf32>
    %3 = vector.broadcast %1 : vector<1x128xf32> to vector<64x128xf32>
    %4 = arith.mulf %2, %3 : vector<64x128xf32>
    %c0_3 = arith.constant 0 : index
    %c0_4 = arith.constant 0 : index
    %5 = vector.load %arg3[%c0_3, %c0_4] : memref<1x128xf32, #tpu.memory_space<vmem>>, vector<1x128xf32>
    %6 = vector.broadcast %5 : vector<1x128xf32> to vector<64x128xf32>
    %7 = arith.addf %4, %6 : vector<64x128xf32>
    %cst = arith.constant 0.000000e+00 : f32
    %8 = vector.broadcast %cst : f32 to vector<64x128xf32>
    %9 = arith.maximumf %7, %8 : vector<64x128xf32>
    %10 = arith.truncf %9 : vector<64x128xf32> to vector<64x128xbf16>
    %c0_5 = arith.constant 0 : index
    %c0_6 = arith.constant 0 : index
    %11 = vector.load %arg4[%c0_5, %c0_6] : memref<64x128xbf16, #tpu.memory_space<vmem>>, vector<64x128xbf16>
    tpu.vector_store %arg4[%c0_5, %c0_6], %10 {strides = array<i32>} : memref<64x128xbf16, #tpu.memory_space<vmem>>, vector<64x128xbf16>,
    return
  }
  func.func @transform_0(%arg0: i32) -> (i32, i32) {
    %c0_i32 = arith.constant 0 : i32
    %c0_i32_0 = arith.constant 0 : i32
    return %arg0, %c0_i32 : i32, i32
  }
  func.func @transform_1(%arg0: i32) -> (i32, i32) {
    %c0_i32 = arith.constant 0 : i32
    %c0_i32_0 = arith.constant 0 : i32
    %c0_i32_1 = arith.constant 0 : i32
    return %c0_i32, %c0_i32_0 : i32, i32
  }
  func.func @transform_2(%arg0: i32) -> (i32, i32) {
    %c0_i32 = arith.constant 0 : i32
    %c0_i32_0 = arith.constant 0 : i32
    %c0_i32_1 = arith.constant 0 : i32
    return %c0_i32, %c0_i32_0 : i32, i32
  }
  func.func @transform_3(%arg0: i32) -> (i32, i32) {
    %c0_i32 = arith.constant 0 : i32
    %c0_i32_0 = arith.constant 0 : i32
    return %arg0, %c0_i32 : i32, i32
  }
}

module attributes {stable_mosaic.version = 11 : i64} {
  func.func @_conv_bnstat_kernel(%arg0: i32, %arg1: i32, %arg2: i32, %arg3: memref<1x1x20x9x128xbf16, #tpu.memory_space<vmem>>, %arg4: memref<9x128x128xbf16, #tpu.memory_space<vmem>>, %arg5: memref<1x32x128xbf16, #tpu.memory_space<vmem>>, %arg6: memref<1x1x128xf32, #tpu.memory_space<vmem>>, %arg7: memref<1x1x128xf32, #tpu.memory_space<vmem>>, %arg8: memref<32x128xf32, #tpu.memory_space<vmem>>) attributes {dimension_semantics = [#tpu.dimension_semantics<parallel>, #tpu.dimension_semantics<parallel>, #tpu.dimension_semantics<arbitrary>], iteration_bounds = array<i64: 1, 2, 2>, scalar_prefetch = 0 : i64, scratch_operands = 1 : i64, tpu.core_type = #tpu.core_type<tc>, window_params = [{transform_indices = @transform_0, window_bounds = array<i64: 1, 1, 20, 9, 128>}, {transform_indices = @transform_1, window_bounds = array<i64: 9, 128, 128>}, {transform_indices = @transform_2, window_bounds = array<i64: 1, 32, 128>}, {transform_indices = @transform_3, window_bounds = array<i64: 1, 1, 128>}, {transform_indices = @transform_4, window_bounds = array<i64: 1, 1, 128>}]} {
    %c0 = arith.constant 0 : index
    %c0_0 = arith.constant 0 : index
    %c0_1 = arith.constant 0 : index
    %c0_2 = arith.constant 0 : index
    %c0_3 = arith.constant 0 : index
    %0 = vector.load %arg3[%c0, %c0_0, %c0_1, %c0_2, %c0_3] : memref<1x1x20x9x128xbf16, #tpu.memory_space<vmem>>, vector<1x1x4x8x128xbf16>
    %1 = vector.shape_cast %0 : vector<1x1x4x8x128xbf16> to vector<4x8x128xbf16>
    %2 = vector.shape_cast %1 : vector<4x8x128xbf16> to vector<32x128xbf16>
    %c0_4 = arith.constant 0 : index
    %c0_5 = arith.constant 0 : index
    %c0_6 = arith.constant 0 : index
    %3 = vector.load %arg4[%c0_4, %c0_5, %c0_6] : memref<9x128x128xbf16, #tpu.memory_space<vmem>>, vector<1x128x128xbf16>
    %4 = vector.shape_cast %3 : vector<1x128x128xbf16> to vector<128x128xbf16>
    %cst = arith.constant dense<0.000000e+00> : vector<32x128xf32>
    %5 = tpu.matmul %2, %4, %cst {dimension_numbers = #tpu.dot_dimension_numbers<[1], [0], [0], [1], [0, 0, 1, 1], [], []>} : vector<32x128xbf16>, vector<128x128xbf16>, vector<32x128xf32> -> vector<32x128xf32>
    %c0_7 = arith.constant 0 : index
    %c0_8 = arith.constant 0 : index
    %6 = vector.load %arg8[%c0_7, %c0_8] : memref<32x128xf32, #tpu.memory_space<vmem>>, vector<32x128xf32>
    tpu.vector_store %arg8[%c0_7, %c0_8], %5 {strides = array<i32>} : memref<32x128xf32, #tpu.memory_space<vmem>>, vector<32x128xf32>,
    %c0_9 = arith.constant 0 : index
    %c0_10 = arith.constant 0 : index
    %c5 = arith.constant 5 : index
    %c0_11 = arith.constant 0 : index
    %c0_12 = arith.constant 0 : index
    %7 = vector.load %arg3[%c0_9, %c0_10, %c5, %c0_11, %c0_12] : memref<1x1x20x9x128xbf16, #tpu.memory_space<vmem>>, vector<1x1x4x8x128xbf16>
    %8 = vector.shape_cast %7 : vector<1x1x4x8x128xbf16> to vector<4x8x128xbf16>
    %9 = vector.shape_cast %8 : vector<4x8x128xbf16> to vector<32x128xbf16>
    %c1 = arith.constant 1 : index
    %c0_13 = arith.constant 0 : index
    %c0_14 = arith.constant 0 : index
    %10 = vector.load %arg4[%c1, %c0_13, %c0_14] : memref<9x128x128xbf16, #tpu.memory_space<vmem>>, vector<1x128x128xbf16>
    %11 = vector.shape_cast %10 : vector<1x128x128xbf16> to vector<128x128xbf16>
    %cst_15 = arith.constant dense<0.000000e+00> : vector<32x128xf32>
    %12 = tpu.matmul %9, %11, %cst_15 {dimension_numbers = #tpu.dot_dimension_numbers<[1], [0], [0], [1], [0, 0, 1, 1], [], []>} : vector<32x128xbf16>, vector<128x128xbf16>, vector<32x128xf32> -> vector<32x128xf32>
    %c0_16 = arith.constant 0 : index
    %c0_17 = arith.constant 0 : index
    %13 = vector.load %arg8[%c0_16, %c0_17] : memref<32x128xf32, #tpu.memory_space<vmem>>, vector<32x128xf32>
    %14 = arith.addf %13, %12 : vector<32x128xf32>
    %c0_18 = arith.constant 0 : index
    %c0_19 = arith.constant 0 : index
    %15 = vector.load %arg8[%c0_18, %c0_19] : memref<32x128xf32, #tpu.memory_space<vmem>>, vector<32x128xf32>
    tpu.vector_store %arg8[%c0_18, %c0_19], %14 {strides = array<i32>} : memref<32x128xf32, #tpu.memory_space<vmem>>, vector<32x128xf32>,
    %c0_20 = arith.constant 0 : index
    %c0_21 = arith.constant 0 : index
    %c0_22 = arith.constant 0 : index
    %c1_23 = arith.constant 1 : index
    %c0_24 = arith.constant 0 : index
    %16 = vector.load %arg3[%c0_20, %c0_21, %c0_22, %c1_23, %c0_24] : memref<1x1x20x9x128xbf16, #tpu.memory_space<vmem>>, vector<1x1x4x8x128xbf16>
    %17 = vector.shape_cast %16 : vector<1x1x4x8x128xbf16> to vector<4x8x128xbf16>
    %18 = vector.shape_cast %17 : vector<4x8x128xbf16> to vector<32x128xbf16>
    %c2 = arith.constant 2 : index
    %c0_25 = arith.constant 0 : index
    %c0_26 = arith.constant 0 : index
    %19 = vector.load %arg4[%c2, %c0_25, %c0_26] : memref<9x128x128xbf16, #tpu.memory_space<vmem>>, vector<1x128x128xbf16>
    %20 = vector.shape_cast %19 : vector<1x128x128xbf16> to vector<128x128xbf16>
    %cst_27 = arith.constant dense<0.000000e+00> : vector<32x128xf32>
    %21 = tpu.matmul %18, %20, %cst_27 {dimension_numbers = #tpu.dot_dimension_numbers<[1], [0], [0], [1], [0, 0, 1, 1], [], []>} : vector<32x128xbf16>, vector<128x128xbf16>, vector<32x128xf32> -> vector<32x128xf32>
    %c0_28 = arith.constant 0 : index
    %c0_29 = arith.constant 0 : index
    %22 = vector.load %arg8[%c0_28, %c0_29] : memref<32x128xf32, #tpu.memory_space<vmem>>, vector<32x128xf32>
    %23 = arith.addf %22, %21 : vector<32x128xf32>
    %c0_30 = arith.constant 0 : index
    %c0_31 = arith.constant 0 : index
    %24 = vector.load %arg8[%c0_30, %c0_31] : memref<32x128xf32, #tpu.memory_space<vmem>>, vector<32x128xf32>
    tpu.vector_store %arg8[%c0_30, %c0_31], %23 {strides = array<i32>} : memref<32x128xf32, #tpu.memory_space<vmem>>, vector<32x128xf32>,
    %c0_32 = arith.constant 0 : index
    %c0_33 = arith.constant 0 : index
    %c10 = arith.constant 10 : index
    %c0_34 = arith.constant 0 : index
    %c0_35 = arith.constant 0 : index
    %25 = vector.load %arg3[%c0_32, %c0_33, %c10, %c0_34, %c0_35] : memref<1x1x20x9x128xbf16, #tpu.memory_space<vmem>>, vector<1x1x4x8x128xbf16>
    %26 = vector.shape_cast %25 : vector<1x1x4x8x128xbf16> to vector<4x8x128xbf16>
    %27 = vector.shape_cast %26 : vector<4x8x128xbf16> to vector<32x128xbf16>
    %c3 = arith.constant 3 : index
    %c0_36 = arith.constant 0 : index
    %c0_37 = arith.constant 0 : index
    %28 = vector.load %arg4[%c3, %c0_36, %c0_37] : memref<9x128x128xbf16, #tpu.memory_space<vmem>>, vector<1x128x128xbf16>
    %29 = vector.shape_cast %28 : vector<1x128x128xbf16> to vector<128x128xbf16>
    %cst_38 = arith.constant dense<0.000000e+00> : vector<32x128xf32>
    %30 = tpu.matmul %27, %29, %cst_38 {dimension_numbers = #tpu.dot_dimension_numbers<[1], [0], [0], [1], [0, 0, 1, 1], [], []>} : vector<32x128xbf16>, vector<128x128xbf16>, vector<32x128xf32> -> vector<32x128xf32>
    %c0_39 = arith.constant 0 : index
    %c0_40 = arith.constant 0 : index
    %31 = vector.load %arg8[%c0_39, %c0_40] : memref<32x128xf32, #tpu.memory_space<vmem>>, vector<32x128xf32>
    %32 = arith.addf %31, %30 : vector<32x128xf32>
    %c0_41 = arith.constant 0 : index
    %c0_42 = arith.constant 0 : index
    %33 = vector.load %arg8[%c0_41, %c0_42] : memref<32x128xf32, #tpu.memory_space<vmem>>, vector<32x128xf32>
    tpu.vector_store %arg8[%c0_41, %c0_42], %32 {strides = array<i32>} : memref<32x128xf32, #tpu.memory_space<vmem>>, vector<32x128xf32>,
    %c0_43 = arith.constant 0 : index
    %c0_44 = arith.constant 0 : index
    %c15 = arith.constant 15 : index
    %c0_45 = arith.constant 0 : index
    %c0_46 = arith.constant 0 : index
    %34 = vector.load %arg3[%c0_43, %c0_44, %c15, %c0_45, %c0_46] : memref<1x1x20x9x128xbf16, #tpu.memory_space<vmem>>, vector<1x1x4x8x128xbf16>
    %35 = vector.shape_cast %34 : vector<1x1x4x8x128xbf16> to vector<4x8x128xbf16>
    %36 = vector.shape_cast %35 : vector<4x8x128xbf16> to vector<32x128xbf16>
    %c4 = arith.constant 4 : index
    %c0_47 = arith.constant 0 : index
    %c0_48 = arith.constant 0 : index
    %37 = vector.load %arg4[%c4, %c0_47, %c0_48] : memref<9x128x128xbf16, #tpu.memory_space<vmem>>, vector<1x128x128xbf16>
    %38 = vector.shape_cast %37 : vector<1x128x128xbf16> to vector<128x128xbf16>
    %cst_49 = arith.constant dense<0.000000e+00> : vector<32x128xf32>
    %39 = tpu.matmul %36, %38, %cst_49 {dimension_numbers = #tpu.dot_dimension_numbers<[1], [0], [0], [1], [0, 0, 1, 1], [], []>} : vector<32x128xbf16>, vector<128x128xbf16>, vector<32x128xf32> -> vector<32x128xf32>
    %c0_50 = arith.constant 0 : index
    %c0_51 = arith.constant 0 : index
    %40 = vector.load %arg8[%c0_50, %c0_51] : memref<32x128xf32, #tpu.memory_space<vmem>>, vector<32x128xf32>
    %41 = arith.addf %40, %39 : vector<32x128xf32>
    %c0_52 = arith.constant 0 : index
    %c0_53 = arith.constant 0 : index
    %42 = vector.load %arg8[%c0_52, %c0_53] : memref<32x128xf32, #tpu.memory_space<vmem>>, vector<32x128xf32>
    tpu.vector_store %arg8[%c0_52, %c0_53], %41 {strides = array<i32>} : memref<32x128xf32, #tpu.memory_space<vmem>>, vector<32x128xf32>,
    %c0_54 = arith.constant 0 : index
    %c0_55 = arith.constant 0 : index
    %c10_56 = arith.constant 10 : index
    %c1_57 = arith.constant 1 : index
    %c0_58 = arith.constant 0 : index
    %43 = vector.load %arg3[%c0_54, %c0_55, %c10_56, %c1_57, %c0_58] : memref<1x1x20x9x128xbf16, #tpu.memory_space<vmem>>, vector<1x1x4x8x128xbf16>
    %44 = vector.shape_cast %43 : vector<1x1x4x8x128xbf16> to vector<4x8x128xbf16>
    %45 = vector.shape_cast %44 : vector<4x8x128xbf16> to vector<32x128xbf16>
    %c5_59 = arith.constant 5 : index
    %c0_60 = arith.constant 0 : index
    %c0_61 = arith.constant 0 : index
    %46 = vector.load %arg4[%c5_59, %c0_60, %c0_61] : memref<9x128x128xbf16, #tpu.memory_space<vmem>>, vector<1x128x128xbf16>
    %47 = vector.shape_cast %46 : vector<1x128x128xbf16> to vector<128x128xbf16>
    %cst_62 = arith.constant dense<0.000000e+00> : vector<32x128xf32>
    %48 = tpu.matmul %45, %47, %cst_62 {dimension_numbers = #tpu.dot_dimension_numbers<[1], [0], [0], [1], [0, 0, 1, 1], [], []>} : vector<32x128xbf16>, vector<128x128xbf16>, vector<32x128xf32> -> vector<32x128xf32>
    %c0_63 = arith.constant 0 : index
    %c0_64 = arith.constant 0 : index
    %49 = vector.load %arg8[%c0_63, %c0_64] : memref<32x128xf32, #tpu.memory_space<vmem>>, vector<32x128xf32>
    %50 = arith.addf %49, %48 : vector<32x128xf32>
    %c0_65 = arith.constant 0 : index
    %c0_66 = arith.constant 0 : index
    %51 = vector.load %arg8[%c0_65, %c0_66] : memref<32x128xf32, #tpu.memory_space<vmem>>, vector<32x128xf32>
    tpu.vector_store %arg8[%c0_65, %c0_66], %50 {strides = array<i32>} : memref<32x128xf32, #tpu.memory_space<vmem>>, vector<32x128xf32>,
    %c0_67 = arith.constant 0 : index
    %c0_68 = arith.constant 0 : index
    %c1_69 = arith.constant 1 : index
    %c0_70 = arith.constant 0 : index
    %c0_71 = arith.constant 0 : index
    %52 = vector.load %arg3[%c0_67, %c0_68, %c1_69, %c0_70, %c0_71] : memref<1x1x20x9x128xbf16, #tpu.memory_space<vmem>>, vector<1x1x4x8x128xbf16>
    %53 = vector.shape_cast %52 : vector<1x1x4x8x128xbf16> to vector<4x8x128xbf16>
    %54 = vector.shape_cast %53 : vector<4x8x128xbf16> to vector<32x128xbf16>
    %c6 = arith.constant 6 : index
    %c0_72 = arith.constant 0 : index
    %c0_73 = arith.constant 0 : index
    %55 = vector.load %arg4[%c6, %c0_72, %c0_73] : memref<9x128x128xbf16, #tpu.memory_space<vmem>>, vector<1x128x128xbf16>
    %56 = vector.shape_cast %55 : vector<1x128x128xbf16> to vector<128x128xbf16>
    %cst_74 = arith.constant dense<0.000000e+00> : vector<32x128xf32>
    %57 = tpu.matmul %54, %56, %cst_74 {dimension_numbers = #tpu.dot_dimension_numbers<[1], [0], [0], [1], [0, 0, 1, 1], [], []>} : vector<32x128xbf16>, vector<128x128xbf16>, vector<32x128xf32> -> vector<32x128xf32>
    %c0_75 = arith.constant 0 : index
    %c0_76 = arith.constant 0 : index
    %58 = vector.load %arg8[%c0_75, %c0_76] : memref<32x128xf32, #tpu.memory_space<vmem>>, vector<32x128xf32>
    %59 = arith.addf %58, %57 : vector<32x128xf32>
    %c0_77 = arith.constant 0 : index
    %c0_78 = arith.constant 0 : index
    %60 = vector.load %arg8[%c0_77, %c0_78] : memref<32x128xf32, #tpu.memory_space<vmem>>, vector<32x128xf32>
    tpu.vector_store %arg8[%c0_77, %c0_78], %59 {strides = array<i32>} : memref<32x128xf32, #tpu.memory_space<vmem>>, vector<32x128xf32>,
    %c0_79 = arith.constant 0 : index
    %c0_80 = arith.constant 0 : index
    %c6_81 = arith.constant 6 : index
    %c0_82 = arith.constant 0 : index
    %c0_83 = arith.constant 0 : index
    %61 = vector.load %arg3[%c0_79, %c0_80, %c6_81, %c0_82, %c0_83] : memref<1x1x20x9x128xbf16, #tpu.memory_space<vmem>>, vector<1x1x4x8x128xbf16>
    %62 = vector.shape_cast %61 : vector<1x1x4x8x128xbf16> to vector<4x8x128xbf16>
    %63 = vector.shape_cast %62 : vector<4x8x128xbf16> to vector<32x128xbf16>
    %c7 = arith.constant 7 : index
    %c0_84 = arith.constant 0 : index
    %c0_85 = arith.constant 0 : index
    %64 = vector.load %arg4[%c7, %c0_84, %c0_85] : memref<9x128x128xbf16, #tpu.memory_space<vmem>>, vector<1x128x128xbf16>
    %65 = vector.shape_cast %64 : vector<1x128x128xbf16> to vector<128x128xbf16>
    %cst_86 = arith.constant dense<0.000000e+00> : vector<32x128xf32>
    %66 = tpu.matmul %63, %65, %cst_86 {dimension_numbers = #tpu.dot_dimension_numbers<[1], [0], [0], [1], [0, 0, 1, 1], [], []>} : vector<32x128xbf16>, vector<128x128xbf16>, vector<32x128xf32> -> vector<32x128xf32>
    %c0_87 = arith.constant 0 : index
    %c0_88 = arith.constant 0 : index
    %67 = vector.load %arg8[%c0_87, %c0_88] : memref<32x128xf32, #tpu.memory_space<vmem>>, vector<32x128xf32>
    %68 = arith.addf %67, %66 : vector<32x128xf32>
    %c0_89 = arith.constant 0 : index
    %c0_90 = arith.constant 0 : index
    %69 = vector.load %arg8[%c0_89, %c0_90] : memref<32x128xf32, #tpu.memory_space<vmem>>, vector<32x128xf32>
    tpu.vector_store %arg8[%c0_89, %c0_90], %68 {strides = array<i32>} : memref<32x128xf32, #tpu.memory_space<vmem>>, vector<32x128xf32>,
    %c0_91 = arith.constant 0 : index
    %c0_92 = arith.constant 0 : index
    %c1_93 = arith.constant 1 : index
    %c1_94 = arith.constant 1 : index
    %c0_95 = arith.constant 0 : index
    %70 = vector.load %arg3[%c0_91, %c0_92, %c1_93, %c1_94, %c0_95] : memref<1x1x20x9x128xbf16, #tpu.memory_space<vmem>>, vector<1x1x4x8x128xbf16>
    %71 = vector.shape_cast %70 : vector<1x1x4x8x128xbf16> to vector<4x8x128xbf16>
    %72 = vector.shape_cast %71 : vector<4x8x128xbf16> to vector<32x128xbf16>
    %c8 = arith.constant 8 : index
    %c0_96 = arith.constant 0 : index
    %c0_97 = arith.constant 0 : index
    %73 = vector.load %arg4[%c8, %c0_96, %c0_97] : memref<9x128x128xbf16, #tpu.memory_space<vmem>>, vector<1x128x128xbf16>
    %74 = vector.shape_cast %73 : vector<1x128x128xbf16> to vector<128x128xbf16>
    %cst_98 = arith.constant dense<0.000000e+00> : vector<32x128xf32>
    %75 = tpu.matmul %72, %74, %cst_98 {dimension_numbers = #tpu.dot_dimension_numbers<[1], [0], [0], [1], [0, 0, 1, 1], [], []>} : vector<32x128xbf16>, vector<128x128xbf16>, vector<32x128xf32> -> vector<32x128xf32>
    %c0_99 = arith.constant 0 : index
    %c0_100 = arith.constant 0 : index
    %76 = vector.load %arg8[%c0_99, %c0_100] : memref<32x128xf32, #tpu.memory_space<vmem>>, vector<32x128xf32>
    %77 = arith.addf %76, %75 : vector<32x128xf32>
    %c0_101 = arith.constant 0 : index
    %c0_102 = arith.constant 0 : index
    %78 = vector.load %arg8[%c0_101, %c0_102] : memref<32x128xf32, #tpu.memory_space<vmem>>, vector<32x128xf32>
    tpu.vector_store %arg8[%c0_101, %c0_102], %77 {strides = array<i32>} : memref<32x128xf32, #tpu.memory_space<vmem>>, vector<32x128xf32>,
    %c0_103 = arith.constant 0 : index
    %c0_104 = arith.constant 0 : index
    %79 = vector.load %arg8[%c0_103, %c0_104] : memref<32x128xf32, #tpu.memory_space<vmem>>, vector<32x128xf32>
    %80 = arith.truncf %79 : vector<32x128xf32> to vector<32x128xbf16>
    %c0_105 = arith.constant 0 : index
    %c0_106 = arith.constant 0 : index
    %c0_107 = arith.constant 0 : index
    %81 = vector.load %arg5[%c0_105, %c0_106, %c0_107] : memref<1x32x128xbf16, #tpu.memory_space<vmem>>, vector<1x32x128xbf16>
    %82 = vector.shape_cast %81 : vector<1x32x128xbf16> to vector<32x128xbf16>
    %83 = vector.shape_cast %80 : vector<32x128xbf16> to vector<1x32x128xbf16>
    tpu.vector_store %arg5[%c0_105, %c0_106, %c0_107], %83 {strides = array<i32>} : memref<1x32x128xbf16, #tpu.memory_space<vmem>>, vector<1x32x128xbf16>,
    %cst_108 = arith.constant dense<0.000000e+00> : vector<128xf32>
    %84 = vector.multi_reduction <add>, %79, %cst_108 [0] : vector<32x128xf32> to vector<128xf32>
    %85 = vector.shape_cast %84 : vector<128xf32> to vector<1x128xf32>
    %86 = arith.mulf %79, %79 : vector<32x128xf32>
    %cst_109 = arith.constant dense<0.000000e+00> : vector<128xf32>
    %87 = vector.multi_reduction <add>, %86, %cst_109 [0] : vector<32x128xf32> to vector<128xf32>
    %88 = vector.shape_cast %87 : vector<128xf32> to vector<1x128xf32>
    %c0_i32 = arith.constant 0 : i32
    %89 = arith.cmpi eq, %arg2, %c0_i32 : i32
    %90 = arith.extui %89 : i1 to i32
    %c0_i32_110 = arith.constant 0 : i32
    %91 = arith.cmpi ne, %90, %c0_i32_110 : i32
    scf.if %91 {
      %c0_113 = arith.constant 0 : index
      %c0_114 = arith.constant 0 : index
      %c0_115 = arith.constant 0 : index
      %95 = vector.load %arg6[%c0_113, %c0_114, %c0_115] : memref<1x1x128xf32, #tpu.memory_space<vmem>>, vector<1x1x128xf32>
      %96 = vector.shape_cast %95 : vector<1x1x128xf32> to vector<1x128xf32>
      %97 = vector.shape_cast %85 : vector<1x128xf32> to vector<1x1x128xf32>
      tpu.vector_store %arg6[%c0_113, %c0_114, %c0_115], %97 {strides = array<i32>} : memref<1x1x128xf32, #tpu.memory_space<vmem>>, vector<1x1x128xf32>,
      %c0_116 = arith.constant 0 : index
      %c0_117 = arith.constant 0 : index
      %c0_118 = arith.constant 0 : index
      %98 = vector.load %arg7[%c0_116, %c0_117, %c0_118] : memref<1x1x128xf32, #tpu.memory_space<vmem>>, vector<1x1x128xf32>
      %99 = vector.shape_cast %98 : vector<1x1x128xf32> to vector<1x128xf32>
      %100 = vector.shape_cast %88 : vector<1x128xf32> to vector<1x1x128xf32>
      tpu.vector_store %arg7[%c0_116, %c0_117, %c0_118], %100 {strides = array<i32>} : memref<1x1x128xf32, #tpu.memory_space<vmem>>, vector<1x1x128xf32>,
    } else {
    }
    %c0_i32_111 = arith.constant 0 : i32
    %92 = arith.cmpi sgt, %arg2, %c0_i32_111 : i32
    %93 = arith.extui %92 : i1 to i32
    %c0_i32_112 = arith.constant 0 : i32
    %94 = arith.cmpi ne, %93, %c0_i32_112 : i32
    scf.if %94 {
      %c0_113 = arith.constant 0 : index
      %c0_114 = arith.constant 0 : index
      %c0_115 = arith.constant 0 : index
      %95 = vector.load %arg6[%c0_113, %c0_114, %c0_115] : memref<1x1x128xf32, #tpu.memory_space<vmem>>, vector<1x1x128xf32>
      %96 = vector.shape_cast %95 : vector<1x1x128xf32> to vector<1x128xf32>
      %97 = arith.addf %96, %85 : vector<1x128xf32>
      %c0_116 = arith.constant 0 : index
      %c0_117 = arith.constant 0 : index
      %c0_118 = arith.constant 0 : index
      %98 = vector.load %arg6[%c0_116, %c0_117, %c0_118] : memref<1x1x128xf32, #tpu.memory_space<vmem>>, vector<1x1x128xf32>
      %99 = vector.shape_cast %98 : vector<1x1x128xf32> to vector<1x128xf32>
      %100 = vector.shape_cast %97 : vector<1x128xf32> to vector<1x1x128xf32>
      tpu.vector_store %arg6[%c0_116, %c0_117, %c0_118], %100 {strides = array<i32>} : memref<1x1x128xf32, #tpu.memory_space<vmem>>, vector<1x1x128xf32>,
      %c0_119 = arith.constant 0 : index
      %c0_120 = arith.constant 0 : index
      %c0_121 = arith.constant 0 : index
      %101 = vector.load %arg7[%c0_119, %c0_120, %c0_121] : memref<1x1x128xf32, #tpu.memory_space<vmem>>, vector<1x1x128xf32>
      %102 = vector.shape_cast %101 : vector<1x1x128xf32> to vector<1x128xf32>
      %103 = arith.addf %102, %88 : vector<1x128xf32>
      %c0_122 = arith.constant 0 : index
      %c0_123 = arith.constant 0 : index
      %c0_124 = arith.constant 0 : index
      %104 = vector.load %arg7[%c0_122, %c0_123, %c0_124] : memref<1x1x128xf32, #tpu.memory_space<vmem>>, vector<1x1x128xf32>
      %105 = vector.shape_cast %104 : vector<1x1x128xf32> to vector<1x128xf32>
      %106 = vector.shape_cast %103 : vector<1x128xf32> to vector<1x1x128xf32>
      tpu.vector_store %arg7[%c0_122, %c0_123, %c0_124], %106 {strides = array<i32>} : memref<1x1x128xf32, #tpu.memory_space<vmem>>, vector<1x1x128xf32>,
    } else {
    }
    return
  }
  func.func @transform_0(%arg0: i32, %arg1: i32, %arg2: i32) -> (i32, i32, i32, i32, i32) {
    %c0_i32 = arith.constant 0 : i32
    %c0_i32_0 = arith.constant 0 : i32
    %c0_i32_1 = arith.constant 0 : i32
    %c0_i32_2 = arith.constant 0 : i32
    return %arg1, %arg2, %c0_i32, %c0_i32_0, %c0_i32_1 : i32, i32, i32, i32, i32
  }
  func.func @transform_1(%arg0: i32, %arg1: i32, %arg2: i32) -> (i32, i32, i32) {
    %c0_i32 = arith.constant 0 : i32
    %c0_i32_0 = arith.constant 0 : i32
    %c0_i32_1 = arith.constant 0 : i32
    return %c0_i32, %c0_i32_0, %arg0 : i32, i32, i32
  }
  func.func @transform_2(%arg0: i32, %arg1: i32, %arg2: i32) -> (i32, i32, i32) {
    %c0_i32 = arith.constant 0 : i32
    return %arg1, %arg2, %arg0 : i32, i32, i32
  }
  func.func @transform_3(%arg0: i32, %arg1: i32, %arg2: i32) -> (i32, i32, i32) {
    %c0_i32 = arith.constant 0 : i32
    %c0_i32_0 = arith.constant 0 : i32
    return %arg1, %c0_i32, %arg0 : i32, i32, i32
  }
  func.func @transform_4(%arg0: i32, %arg1: i32, %arg2: i32) -> (i32, i32, i32) {
    %c0_i32 = arith.constant 0 : i32
    %c0_i32_0 = arith.constant 0 : i32
    return %arg1, %c0_i32, %arg0 : i32, i32, i32
  }
}

module attributes {stable_mosaic.version = 11 : i64} {
  func.func @_conv_bnstat_kernel(%arg0: i32, %arg1: i32, %arg2: i32, %arg3: memref<1x1x6x10x128xbf16, #tpu.memory_space<vmem>>, %arg4: memref<9x128x128xbf16, #tpu.memory_space<vmem>>, %arg5: memref<1x32x128xbf16, #tpu.memory_space<vmem>>, %arg6: memref<1x1x128xf32, #tpu.memory_space<vmem>>, %arg7: memref<1x1x128xf32, #tpu.memory_space<vmem>>, %arg8: memref<32x128xf32, #tpu.memory_space<vmem>>) attributes {dimension_semantics = [#tpu.dimension_semantics<parallel>, #tpu.dimension_semantics<parallel>, #tpu.dimension_semantics<arbitrary>], iteration_bounds = array<i64: 1, 2, 2>, scalar_prefetch = 0 : i64, scratch_operands = 1 : i64, tpu.core_type = #tpu.core_type<tc>, window_params = [{transform_indices = @transform_0, window_bounds = array<i64: 1, 1, 6, 10, 128>}, {transform_indices = @transform_1, window_bounds = array<i64: 9, 128, 128>}, {transform_indices = @transform_2, window_bounds = array<i64: 1, 32, 128>}, {transform_indices = @transform_3, window_bounds = array<i64: 1, 1, 128>}, {transform_indices = @transform_4, window_bounds = array<i64: 1, 1, 128>}]} {
    %c0 = arith.constant 0 : index
    %c0_0 = arith.constant 0 : index
    %c0_1 = arith.constant 0 : index
    %c0_2 = arith.constant 0 : index
    %c0_3 = arith.constant 0 : index
    %0 = vector.load %arg3[%c0, %c0_0, %c0_1, %c0_2, %c0_3] : memref<1x1x6x10x128xbf16, #tpu.memory_space<vmem>>, vector<1x1x4x8x128xbf16>
    %1 = vector.shape_cast %0 : vector<1x1x4x8x128xbf16> to vector<4x8x128xbf16>
    %2 = vector.shape_cast %1 : vector<4x8x128xbf16> to vector<32x128xbf16>
    %c0_4 = arith.constant 0 : index
    %c0_5 = arith.constant 0 : index
    %c0_6 = arith.constant 0 : index
    %3 = vector.load %arg4[%c0_4, %c0_5, %c0_6] : memref<9x128x128xbf16, #tpu.memory_space<vmem>>, vector<1x128x128xbf16>
    %4 = vector.shape_cast %3 : vector<1x128x128xbf16> to vector<128x128xbf16>
    %cst = arith.constant dense<0.000000e+00> : vector<32x128xf32>
    %5 = tpu.matmul %2, %4, %cst {dimension_numbers = #tpu.dot_dimension_numbers<[1], [0], [0], [1], [0, 0, 1, 1], [], []>} : vector<32x128xbf16>, vector<128x128xbf16>, vector<32x128xf32> -> vector<32x128xf32>
    %c0_7 = arith.constant 0 : index
    %c0_8 = arith.constant 0 : index
    %6 = vector.load %arg8[%c0_7, %c0_8] : memref<32x128xf32, #tpu.memory_space<vmem>>, vector<32x128xf32>
    tpu.vector_store %arg8[%c0_7, %c0_8], %5 {strides = array<i32>} : memref<32x128xf32, #tpu.memory_space<vmem>>, vector<32x128xf32>,
    %c0_9 = arith.constant 0 : index
    %c0_10 = arith.constant 0 : index
    %c0_11 = arith.constant 0 : index
    %c1 = arith.constant 1 : index
    %c0_12 = arith.constant 0 : index
    %7 = vector.load %arg3[%c0_9, %c0_10, %c0_11, %c1, %c0_12] : memref<1x1x6x10x128xbf16, #tpu.memory_space<vmem>>, vector<1x1x4x8x128xbf16>
    %8 = vector.shape_cast %7 : vector<1x1x4x8x128xbf16> to vector<4x8x128xbf16>
    %9 = vector.shape_cast %8 : vector<4x8x128xbf16> to vector<32x128xbf16>
    %c1_13 = arith.constant 1 : index
    %c0_14 = arith.constant 0 : index
    %c0_15 = arith.constant 0 : index
    %10 = vector.load %arg4[%c1_13, %c0_14, %c0_15] : memref<9x128x128xbf16, #tpu.memory_space<vmem>>, vector<1x128x128xbf16>
    %11 = vector.shape_cast %10 : vector<1x128x128xbf16> to vector<128x128xbf16>
    %cst_16 = arith.constant dense<0.000000e+00> : vector<32x128xf32>
    %12 = tpu.matmul %9, %11, %cst_16 {dimension_numbers = #tpu.dot_dimension_numbers<[1], [0], [0], [1], [0, 0, 1, 1], [], []>} : vector<32x128xbf16>, vector<128x128xbf16>, vector<32x128xf32> -> vector<32x128xf32>
    %c0_17 = arith.constant 0 : index
    %c0_18 = arith.constant 0 : index
    %13 = vector.load %arg8[%c0_17, %c0_18] : memref<32x128xf32, #tpu.memory_space<vmem>>, vector<32x128xf32>
    %14 = arith.addf %13, %12 : vector<32x128xf32>
    %c0_19 = arith.constant 0 : index
    %c0_20 = arith.constant 0 : index
    %15 = vector.load %arg8[%c0_19, %c0_20] : memref<32x128xf32, #tpu.memory_space<vmem>>, vector<32x128xf32>
    tpu.vector_store %arg8[%c0_19, %c0_20], %14 {strides = array<i32>} : memref<32x128xf32, #tpu.memory_space<vmem>>, vector<32x128xf32>,
    %c0_21 = arith.constant 0 : index
    %c0_22 = arith.constant 0 : index
    %c0_23 = arith.constant 0 : index
    %c2 = arith.constant 2 : index
    %c0_24 = arith.constant 0 : index
    %16 = vector.load %arg3[%c0_21, %c0_22, %c0_23, %c2, %c0_24] : memref<1x1x6x10x128xbf16, #tpu.memory_space<vmem>>, vector<1x1x4x8x128xbf16>
    %17 = vector.shape_cast %16 : vector<1x1x4x8x128xbf16> to vector<4x8x128xbf16>
    %18 = vector.shape_cast %17 : vector<4x8x128xbf16> to vector<32x128xbf16>
    %c2_25 = arith.constant 2 : index
    %c0_26 = arith.constant 0 : index
    %c0_27 = arith.constant 0 : index
    %19 = vector.load %arg4[%c2_25, %c0_26, %c0_27] : memref<9x128x128xbf16, #tpu.memory_space<vmem>>, vector<1x128x128xbf16>
    %20 = vector.shape_cast %19 : vector<1x128x128xbf16> to vector<128x128xbf16>
    %cst_28 = arith.constant dense<0.000000e+00> : vector<32x128xf32>
    %21 = tpu.matmul %18, %20, %cst_28 {dimension_numbers = #tpu.dot_dimension_numbers<[1], [0], [0], [1], [0, 0, 1, 1], [], []>} : vector<32x128xbf16>, vector<128x128xbf16>, vector<32x128xf32> -> vector<32x128xf32>
    %c0_29 = arith.constant 0 : index
    %c0_30 = arith.constant 0 : index
    %22 = vector.load %arg8[%c0_29, %c0_30] : memref<32x128xf32, #tpu.memory_space<vmem>>, vector<32x128xf32>
    %23 = arith.addf %22, %21 : vector<32x128xf32>
    %c0_31 = arith.constant 0 : index
    %c0_32 = arith.constant 0 : index
    %24 = vector.load %arg8[%c0_31, %c0_32] : memref<32x128xf32, #tpu.memory_space<vmem>>, vector<32x128xf32>
    tpu.vector_store %arg8[%c0_31, %c0_32], %23 {strides = array<i32>} : memref<32x128xf32, #tpu.memory_space<vmem>>, vector<32x128xf32>,
    %c0_33 = arith.constant 0 : index
    %c0_34 = arith.constant 0 : index
    %c1_35 = arith.constant 1 : index
    %c0_36 = arith.constant 0 : index
    %c0_37 = arith.constant 0 : index
    %25 = vector.load %arg3[%c0_33, %c0_34, %c1_35, %c0_36, %c0_37] : memref<1x1x6x10x128xbf16, #tpu.memory_space<vmem>>, vector<1x1x4x8x128xbf16>
    %26 = vector.shape_cast %25 : vector<1x1x4x8x128xbf16> to vector<4x8x128xbf16>
    %27 = vector.shape_cast %26 : vector<4x8x128xbf16> to vector<32x128xbf16>
    %c3 = arith.constant 3 : index
    %c0_38 = arith.constant 0 : index
    %c0_39 = arith.constant 0 : index
    %28 = vector.load %arg4[%c3, %c0_38, %c0_39] : memref<9x128x128xbf16, #tpu.memory_space<vmem>>, vector<1x128x128xbf16>
    %29 = vector.shape_cast %28 : vector<1x128x128xbf16> to vector<128x128xbf16>
    %cst_40 = arith.constant dense<0.000000e+00> : vector<32x128xf32>
    %30 = tpu.matmul %27, %29, %cst_40 {dimension_numbers = #tpu.dot_dimension_numbers<[1], [0], [0], [1], [0, 0, 1, 1], [], []>} : vector<32x128xbf16>, vector<128x128xbf16>, vector<32x128xf32> -> vector<32x128xf32>
    %c0_41 = arith.constant 0 : index
    %c0_42 = arith.constant 0 : index
    %31 = vector.load %arg8[%c0_41, %c0_42] : memref<32x128xf32, #tpu.memory_space<vmem>>, vector<32x128xf32>
    %32 = arith.addf %31, %30 : vector<32x128xf32>
    %c0_43 = arith.constant 0 : index
    %c0_44 = arith.constant 0 : index
    %33 = vector.load %arg8[%c0_43, %c0_44] : memref<32x128xf32, #tpu.memory_space<vmem>>, vector<32x128xf32>
    tpu.vector_store %arg8[%c0_43, %c0_44], %32 {strides = array<i32>} : memref<32x128xf32, #tpu.memory_space<vmem>>, vector<32x128xf32>,
    %c0_45 = arith.constant 0 : index
    %c0_46 = arith.constant 0 : index
    %c1_47 = arith.constant 1 : index
    %c1_48 = arith.constant 1 : index
    %c0_49 = arith.constant 0 : index
    %34 = vector.load %arg3[%c0_45, %c0_46, %c1_47, %c1_48, %c0_49] : memref<1x1x6x10x128xbf16, #tpu.memory_space<vmem>>, vector<1x1x4x8x128xbf16>
    %35 = vector.shape_cast %34 : vector<1x1x4x8x128xbf16> to vector<4x8x128xbf16>
    %36 = vector.shape_cast %35 : vector<4x8x128xbf16> to vector<32x128xbf16>
    %c4 = arith.constant 4 : index
    %c0_50 = arith.constant 0 : index
    %c0_51 = arith.constant 0 : index
    %37 = vector.load %arg4[%c4, %c0_50, %c0_51] : memref<9x128x128xbf16, #tpu.memory_space<vmem>>, vector<1x128x128xbf16>
    %38 = vector.shape_cast %37 : vector<1x128x128xbf16> to vector<128x128xbf16>
    %cst_52 = arith.constant dense<0.000000e+00> : vector<32x128xf32>
    %39 = tpu.matmul %36, %38, %cst_52 {dimension_numbers = #tpu.dot_dimension_numbers<[1], [0], [0], [1], [0, 0, 1, 1], [], []>} : vector<32x128xbf16>, vector<128x128xbf16>, vector<32x128xf32> -> vector<32x128xf32>
    %c0_53 = arith.constant 0 : index
    %c0_54 = arith.constant 0 : index
    %40 = vector.load %arg8[%c0_53, %c0_54] : memref<32x128xf32, #tpu.memory_space<vmem>>, vector<32x128xf32>
    %41 = arith.addf %40, %39 : vector<32x128xf32>
    %c0_55 = arith.constant 0 : index
    %c0_56 = arith.constant 0 : index
    %42 = vector.load %arg8[%c0_55, %c0_56] : memref<32x128xf32, #tpu.memory_space<vmem>>, vector<32x128xf32>
    tpu.vector_store %arg8[%c0_55, %c0_56], %41 {strides = array<i32>} : memref<32x128xf32, #tpu.memory_space<vmem>>, vector<32x128xf32>,
    %c0_57 = arith.constant 0 : index
    %c0_58 = arith.constant 0 : index
    %c1_59 = arith.constant 1 : index
    %c2_60 = arith.constant 2 : index
    %c0_61 = arith.constant 0 : index
    %43 = vector.load %arg3[%c0_57, %c0_58, %c1_59, %c2_60, %c0_61] : memref<1x1x6x10x128xbf16, #tpu.memory_space<vmem>>, vector<1x1x4x8x128xbf16>
    %44 = vector.shape_cast %43 : vector<1x1x4x8x128xbf16> to vector<4x8x128xbf16>
    %45 = vector.shape_cast %44 : vector<4x8x128xbf16> to vector<32x128xbf16>
    %c5 = arith.constant 5 : index
    %c0_62 = arith.constant 0 : index
    %c0_63 = arith.constant 0 : index
    %46 = vector.load %arg4[%c5, %c0_62, %c0_63] : memref<9x128x128xbf16, #tpu.memory_space<vmem>>, vector<1x128x128xbf16>
    %47 = vector.shape_cast %46 : vector<1x128x128xbf16> to vector<128x128xbf16>
    %cst_64 = arith.constant dense<0.000000e+00> : vector<32x128xf32>
    %48 = tpu.matmul %45, %47, %cst_64 {dimension_numbers = #tpu.dot_dimension_numbers<[1], [0], [0], [1], [0, 0, 1, 1], [], []>} : vector<32x128xbf16>, vector<128x128xbf16>, vector<32x128xf32> -> vector<32x128xf32>
    %c0_65 = arith.constant 0 : index
    %c0_66 = arith.constant 0 : index
    %49 = vector.load %arg8[%c0_65, %c0_66] : memref<32x128xf32, #tpu.memory_space<vmem>>, vector<32x128xf32>
    %50 = arith.addf %49, %48 : vector<32x128xf32>
    %c0_67 = arith.constant 0 : index
    %c0_68 = arith.constant 0 : index
    %51 = vector.load %arg8[%c0_67, %c0_68] : memref<32x128xf32, #tpu.memory_space<vmem>>, vector<32x128xf32>
    tpu.vector_store %arg8[%c0_67, %c0_68], %50 {strides = array<i32>} : memref<32x128xf32, #tpu.memory_space<vmem>>, vector<32x128xf32>,
    %c0_69 = arith.constant 0 : index
    %c0_70 = arith.constant 0 : index
    %c2_71 = arith.constant 2 : index
    %c0_72 = arith.constant 0 : index
    %c0_73 = arith.constant 0 : index
    %52 = vector.load %arg3[%c0_69, %c0_70, %c2_71, %c0_72, %c0_73] : memref<1x1x6x10x128xbf16, #tpu.memory_space<vmem>>, vector<1x1x4x8x128xbf16>
    %53 = vector.shape_cast %52 : vector<1x1x4x8x128xbf16> to vector<4x8x128xbf16>
    %54 = vector.shape_cast %53 : vector<4x8x128xbf16> to vector<32x128xbf16>
    %c6 = arith.constant 6 : index
    %c0_74 = arith.constant 0 : index
    %c0_75 = arith.constant 0 : index
    %55 = vector.load %arg4[%c6, %c0_74, %c0_75] : memref<9x128x128xbf16, #tpu.memory_space<vmem>>, vector<1x128x128xbf16>
    %56 = vector.shape_cast %55 : vector<1x128x128xbf16> to vector<128x128xbf16>
    %cst_76 = arith.constant dense<0.000000e+00> : vector<32x128xf32>
    %57 = tpu.matmul %54, %56, %cst_76 {dimension_numbers = #tpu.dot_dimension_numbers<[1], [0], [0], [1], [0, 0, 1, 1], [], []>} : vector<32x128xbf16>, vector<128x128xbf16>, vector<32x128xf32> -> vector<32x128xf32>
    %c0_77 = arith.constant 0 : index
    %c0_78 = arith.constant 0 : index
    %58 = vector.load %arg8[%c0_77, %c0_78] : memref<32x128xf32, #tpu.memory_space<vmem>>, vector<32x128xf32>
    %59 = arith.addf %58, %57 : vector<32x128xf32>
    %c0_79 = arith.constant 0 : index
    %c0_80 = arith.constant 0 : index
    %60 = vector.load %arg8[%c0_79, %c0_80] : memref<32x128xf32, #tpu.memory_space<vmem>>, vector<32x128xf32>
    tpu.vector_store %arg8[%c0_79, %c0_80], %59 {strides = array<i32>} : memref<32x128xf32, #tpu.memory_space<vmem>>, vector<32x128xf32>,
    %c0_81 = arith.constant 0 : index
    %c0_82 = arith.constant 0 : index
    %c2_83 = arith.constant 2 : index
    %c1_84 = arith.constant 1 : index
    %c0_85 = arith.constant 0 : index
    %61 = vector.load %arg3[%c0_81, %c0_82, %c2_83, %c1_84, %c0_85] : memref<1x1x6x10x128xbf16, #tpu.memory_space<vmem>>, vector<1x1x4x8x128xbf16>
    %62 = vector.shape_cast %61 : vector<1x1x4x8x128xbf16> to vector<4x8x128xbf16>
    %63 = vector.shape_cast %62 : vector<4x8x128xbf16> to vector<32x128xbf16>
    %c7 = arith.constant 7 : index
    %c0_86 = arith.constant 0 : index
    %c0_87 = arith.constant 0 : index
    %64 = vector.load %arg4[%c7, %c0_86, %c0_87] : memref<9x128x128xbf16, #tpu.memory_space<vmem>>, vector<1x128x128xbf16>
    %65 = vector.shape_cast %64 : vector<1x128x128xbf16> to vector<128x128xbf16>
    %cst_88 = arith.constant dense<0.000000e+00> : vector<32x128xf32>
    %66 = tpu.matmul %63, %65, %cst_88 {dimension_numbers = #tpu.dot_dimension_numbers<[1], [0], [0], [1], [0, 0, 1, 1], [], []>} : vector<32x128xbf16>, vector<128x128xbf16>, vector<32x128xf32> -> vector<32x128xf32>
    %c0_89 = arith.constant 0 : index
    %c0_90 = arith.constant 0 : index
    %67 = vector.load %arg8[%c0_89, %c0_90] : memref<32x128xf32, #tpu.memory_space<vmem>>, vector<32x128xf32>
    %68 = arith.addf %67, %66 : vector<32x128xf32>
    %c0_91 = arith.constant 0 : index
    %c0_92 = arith.constant 0 : index
    %69 = vector.load %arg8[%c0_91, %c0_92] : memref<32x128xf32, #tpu.memory_space<vmem>>, vector<32x128xf32>
    tpu.vector_store %arg8[%c0_91, %c0_92], %68 {strides = array<i32>} : memref<32x128xf32, #tpu.memory_space<vmem>>, vector<32x128xf32>,
    %c0_93 = arith.constant 0 : index
    %c0_94 = arith.constant 0 : index
    %c2_95 = arith.constant 2 : index
    %c2_96 = arith.constant 2 : index
    %c0_97 = arith.constant 0 : index
    %70 = vector.load %arg3[%c0_93, %c0_94, %c2_95, %c2_96, %c0_97] : memref<1x1x6x10x128xbf16, #tpu.memory_space<vmem>>, vector<1x1x4x8x128xbf16>
    %71 = vector.shape_cast %70 : vector<1x1x4x8x128xbf16> to vector<4x8x128xbf16>
    %72 = vector.shape_cast %71 : vector<4x8x128xbf16> to vector<32x128xbf16>
    %c8 = arith.constant 8 : index
    %c0_98 = arith.constant 0 : index
    %c0_99 = arith.constant 0 : index
    %73 = vector.load %arg4[%c8, %c0_98, %c0_99] : memref<9x128x128xbf16, #tpu.memory_space<vmem>>, vector<1x128x128xbf16>
    %74 = vector.shape_cast %73 : vector<1x128x128xbf16> to vector<128x128xbf16>
    %cst_100 = arith.constant dense<0.000000e+00> : vector<32x128xf32>
    %75 = tpu.matmul %72, %74, %cst_100 {dimension_numbers = #tpu.dot_dimension_numbers<[1], [0], [0], [1], [0, 0, 1, 1], [], []>} : vector<32x128xbf16>, vector<128x128xbf16>, vector<32x128xf32> -> vector<32x128xf32>
    %c0_101 = arith.constant 0 : index
    %c0_102 = arith.constant 0 : index
    %76 = vector.load %arg8[%c0_101, %c0_102] : memref<32x128xf32, #tpu.memory_space<vmem>>, vector<32x128xf32>
    %77 = arith.addf %76, %75 : vector<32x128xf32>
    %c0_103 = arith.constant 0 : index
    %c0_104 = arith.constant 0 : index
    %78 = vector.load %arg8[%c0_103, %c0_104] : memref<32x128xf32, #tpu.memory_space<vmem>>, vector<32x128xf32>
    tpu.vector_store %arg8[%c0_103, %c0_104], %77 {strides = array<i32>} : memref<32x128xf32, #tpu.memory_space<vmem>>, vector<32x128xf32>,
    %c0_105 = arith.constant 0 : index
    %c0_106 = arith.constant 0 : index
    %79 = vector.load %arg8[%c0_105, %c0_106] : memref<32x128xf32, #tpu.memory_space<vmem>>, vector<32x128xf32>
    %80 = arith.truncf %79 : vector<32x128xf32> to vector<32x128xbf16>
    %c0_107 = arith.constant 0 : index
    %c0_108 = arith.constant 0 : index
    %c0_109 = arith.constant 0 : index
    %81 = vector.load %arg5[%c0_107, %c0_108, %c0_109] : memref<1x32x128xbf16, #tpu.memory_space<vmem>>, vector<1x32x128xbf16>
    %82 = vector.shape_cast %81 : vector<1x32x128xbf16> to vector<32x128xbf16>
    %83 = vector.shape_cast %80 : vector<32x128xbf16> to vector<1x32x128xbf16>
    tpu.vector_store %arg5[%c0_107, %c0_108, %c0_109], %83 {strides = array<i32>} : memref<1x32x128xbf16, #tpu.memory_space<vmem>>, vector<1x32x128xbf16>,
    %cst_110 = arith.constant dense<0.000000e+00> : vector<128xf32>
    %84 = vector.multi_reduction <add>, %79, %cst_110 [0] : vector<32x128xf32> to vector<128xf32>
    %85 = vector.shape_cast %84 : vector<128xf32> to vector<1x128xf32>
    %86 = arith.mulf %79, %79 : vector<32x128xf32>
    %cst_111 = arith.constant dense<0.000000e+00> : vector<128xf32>
    %87 = vector.multi_reduction <add>, %86, %cst_111 [0] : vector<32x128xf32> to vector<128xf32>
    %88 = vector.shape_cast %87 : vector<128xf32> to vector<1x128xf32>
    %c0_i32 = arith.constant 0 : i32
    %89 = arith.cmpi eq, %arg2, %c0_i32 : i32
    %90 = arith.extui %89 : i1 to i32
    %c0_i32_112 = arith.constant 0 : i32
    %91 = arith.cmpi ne, %90, %c0_i32_112 : i32
    scf.if %91 {
      %c0_115 = arith.constant 0 : index
      %c0_116 = arith.constant 0 : index
      %c0_117 = arith.constant 0 : index
      %95 = vector.load %arg6[%c0_115, %c0_116, %c0_117] : memref<1x1x128xf32, #tpu.memory_space<vmem>>, vector<1x1x128xf32>
      %96 = vector.shape_cast %95 : vector<1x1x128xf32> to vector<1x128xf32>
      %97 = vector.shape_cast %85 : vector<1x128xf32> to vector<1x1x128xf32>
      tpu.vector_store %arg6[%c0_115, %c0_116, %c0_117], %97 {strides = array<i32>} : memref<1x1x128xf32, #tpu.memory_space<vmem>>, vector<1x1x128xf32>,
      %c0_118 = arith.constant 0 : index
      %c0_119 = arith.constant 0 : index
      %c0_120 = arith.constant 0 : index
      %98 = vector.load %arg7[%c0_118, %c0_119, %c0_120] : memref<1x1x128xf32, #tpu.memory_space<vmem>>, vector<1x1x128xf32>
      %99 = vector.shape_cast %98 : vector<1x1x128xf32> to vector<1x128xf32>
      %100 = vector.shape_cast %88 : vector<1x128xf32> to vector<1x1x128xf32>
      tpu.vector_store %arg7[%c0_118, %c0_119, %c0_120], %100 {strides = array<i32>} : memref<1x1x128xf32, #tpu.memory_space<vmem>>, vector<1x1x128xf32>,
    } else {
    }
    %c0_i32_113 = arith.constant 0 : i32
    %92 = arith.cmpi sgt, %arg2, %c0_i32_113 : i32
    %93 = arith.extui %92 : i1 to i32
    %c0_i32_114 = arith.constant 0 : i32
    %94 = arith.cmpi ne, %93, %c0_i32_114 : i32
    scf.if %94 {
      %c0_115 = arith.constant 0 : index
      %c0_116 = arith.constant 0 : index
      %c0_117 = arith.constant 0 : index
      %95 = vector.load %arg6[%c0_115, %c0_116, %c0_117] : memref<1x1x128xf32, #tpu.memory_space<vmem>>, vector<1x1x128xf32>
      %96 = vector.shape_cast %95 : vector<1x1x128xf32> to vector<1x128xf32>
      %97 = arith.addf %96, %85 : vector<1x128xf32>
      %c0_118 = arith.constant 0 : index
      %c0_119 = arith.constant 0 : index
      %c0_120 = arith.constant 0 : index
      %98 = vector.load %arg6[%c0_118, %c0_119, %c0_120] : memref<1x1x128xf32, #tpu.memory_space<vmem>>, vector<1x1x128xf32>
      %99 = vector.shape_cast %98 : vector<1x1x128xf32> to vector<1x128xf32>
      %100 = vector.shape_cast %97 : vector<1x128xf32> to vector<1x1x128xf32>
      tpu.vector_store %arg6[%c0_118, %c0_119, %c0_120], %100 {strides = array<i32>} : memref<1x1x128xf32, #tpu.memory_space<vmem>>, vector<1x1x128xf32>,
      %c0_121 = arith.constant 0 : index
      %c0_122 = arith.constant 0 : index
      %c0_123 = arith.constant 0 : index
      %101 = vector.load %arg7[%c0_121, %c0_122, %c0_123] : memref<1x1x128xf32, #tpu.memory_space<vmem>>, vector<1x1x128xf32>
      %102 = vector.shape_cast %101 : vector<1x1x128xf32> to vector<1x128xf32>
      %103 = arith.addf %102, %88 : vector<1x128xf32>
      %c0_124 = arith.constant 0 : index
      %c0_125 = arith.constant 0 : index
      %c0_126 = arith.constant 0 : index
      %104 = vector.load %arg7[%c0_124, %c0_125, %c0_126] : memref<1x1x128xf32, #tpu.memory_space<vmem>>, vector<1x1x128xf32>
      %105 = vector.shape_cast %104 : vector<1x1x128xf32> to vector<1x128xf32>
      %106 = vector.shape_cast %103 : vector<1x128xf32> to vector<1x1x128xf32>
      tpu.vector_store %arg7[%c0_124, %c0_125, %c0_126], %106 {strides = array<i32>} : memref<1x1x128xf32, #tpu.memory_space<vmem>>, vector<1x1x128xf32>,
    } else {
    }
    return
  }
  func.func @transform_0(%arg0: i32, %arg1: i32, %arg2: i32) -> (i32, i32, i32, i32, i32) {
    %c0_i32 = arith.constant 0 : i32
    %c0_i32_0 = arith.constant 0 : i32
    %c0_i32_1 = arith.constant 0 : i32
    %c0_i32_2 = arith.constant 0 : i32
    return %arg1, %arg2, %c0_i32, %c0_i32_0, %c0_i32_1 : i32, i32, i32, i32, i32
  }
  func.func @transform_1(%arg0: i32, %arg1: i32, %arg2: i32) -> (i32, i32, i32) {
    %c0_i32 = arith.constant 0 : i32
    %c0_i32_0 = arith.constant 0 : i32
    %c0_i32_1 = arith.constant 0 : i32
    return %c0_i32, %c0_i32_0, %arg0 : i32, i32, i32
  }
  func.func @transform_2(%arg0: i32, %arg1: i32, %arg2: i32) -> (i32, i32, i32) {
    %c0_i32 = arith.constant 0 : i32
    return %arg1, %arg2, %arg0 : i32, i32, i32
  }
  func.func @transform_3(%arg0: i32, %arg1: i32, %arg2: i32) -> (i32, i32, i32) {
    %c0_i32 = arith.constant 0 : i32
    %c0_i32_0 = arith.constant 0 : i32
    return %arg1, %c0_i32, %arg0 : i32, i32, i32
  }
  func.func @transform_4(%arg0: i32, %arg1: i32, %arg2: i32) -> (i32, i32, i32) {
    %c0_i32 = arith.constant 0 : i32
    %c0_i32_0 = arith.constant 0 : i32
    return %arg1, %c0_i32, %arg0 : i32, i32, i32
  }
}

module attributes {stable_mosaic.version = 11 : i64} {
  func.func @_bn_add_relu_proj_kernel(%arg0: i32, %arg1: memref<64x128xbf16, #tpu.memory_space<vmem>>, %arg2: memref<64x128xbf16, #tpu.memory_space<vmem>>, %arg3: memref<1x128xf32, #tpu.memory_space<vmem>>, %arg4: memref<1x128xf32, #tpu.memory_space<vmem>>, %arg5: memref<1x128xf32, #tpu.memory_space<vmem>>, %arg6: memref<1x128xf32, #tpu.memory_space<vmem>>, %arg7: memref<64x128xbf16, #tpu.memory_space<vmem>>) attributes {dimension_semantics = [#tpu.dimension_semantics<parallel>], iteration_bounds = array<i64: 2>, scalar_prefetch = 0 : i64, scratch_operands = 0 : i64, tpu.core_type = #tpu.core_type<tc>, window_params = [{transform_indices = @transform_0, window_bounds = array<i64: 64, 128>}, {transform_indices = @transform_1, window_bounds = array<i64: 64, 128>}, {pipeline_mode = #tpu.pipeline_mode<synchronous>, transform_indices = @transform_2, window_bounds = array<i64: 1, 128>}, {pipeline_mode = #tpu.pipeline_mode<synchronous>, transform_indices = @transform_3, window_bounds = array<i64: 1, 128>}, {pipeline_mode = #tpu.pipeline_mode<synchronous>, transform_indices = @transform_4, window_bounds = array<i64: 1, 128>}, {pipeline_mode = #tpu.pipeline_mode<synchronous>, transform_indices = @transform_5, window_bounds = array<i64: 1, 128>}, {transform_indices = @transform_6, window_bounds = array<i64: 64, 128>}]} {
    %c0 = arith.constant 0 : index
    %c0_0 = arith.constant 0 : index
    %0 = vector.load %arg1[%c0, %c0_0] : memref<64x128xbf16, #tpu.memory_space<vmem>>, vector<64x128xbf16>
    %c0_1 = arith.constant 0 : index
    %c0_2 = arith.constant 0 : index
    %1 = vector.load %arg3[%c0_1, %c0_2] : memref<1x128xf32, #tpu.memory_space<vmem>>, vector<1x128xf32>
    %2 = arith.extf %0 : vector<64x128xbf16> to vector<64x128xf32>
    %3 = vector.broadcast %1 : vector<1x128xf32> to vector<64x128xf32>
    %4 = arith.mulf %2, %3 : vector<64x128xf32>
    %c0_3 = arith.constant 0 : index
    %c0_4 = arith.constant 0 : index
    %5 = vector.load %arg4[%c0_3, %c0_4] : memref<1x128xf32, #tpu.memory_space<vmem>>, vector<1x128xf32>
    %6 = vector.broadcast %5 : vector<1x128xf32> to vector<64x128xf32>
    %7 = arith.addf %4, %6 : vector<64x128xf32>
    %c0_5 = arith.constant 0 : index
    %c0_6 = arith.constant 0 : index
    %8 = vector.load %arg2[%c0_5, %c0_6] : memref<64x128xbf16, #tpu.memory_space<vmem>>, vector<64x128xbf16>
    %c0_7 = arith.constant 0 : index
    %c0_8 = arith.constant 0 : index
    %9 = vector.load %arg5[%c0_7, %c0_8] : memref<1x128xf32, #tpu.memory_space<vmem>>, vector<1x128xf32>
    %10 = arith.extf %8 : vector<64x128xbf16> to vector<64x128xf32>
    %11 = vector.broadcast %9 : vector<1x128xf32> to vector<64x128xf32>
    %12 = arith.mulf %10, %11 : vector<64x128xf32>
    %13 = arith.addf %7, %12 : vector<64x128xf32>
    %c0_9 = arith.constant 0 : index
    %c0_10 = arith.constant 0 : index
    %14 = vector.load %arg6[%c0_9, %c0_10] : memref<1x128xf32, #tpu.memory_space<vmem>>, vector<1x128xf32>
    %15 = vector.broadcast %14 : vector<1x128xf32> to vector<64x128xf32>
    %16 = arith.addf %13, %15 : vector<64x128xf32>
    %cst = arith.constant 0.000000e+00 : f32
    %17 = vector.broadcast %cst : f32 to vector<64x128xf32>
    %18 = arith.maximumf %16, %17 : vector<64x128xf32>
    %19 = arith.truncf %18 : vector<64x128xf32> to vector<64x128xbf16>
    %c0_11 = arith.constant 0 : index
    %c0_12 = arith.constant 0 : index
    %20 = vector.load %arg7[%c0_11, %c0_12] : memref<64x128xbf16, #tpu.memory_space<vmem>>, vector<64x128xbf16>
    tpu.vector_store %arg7[%c0_11, %c0_12], %19 {strides = array<i32>} : memref<64x128xbf16, #tpu.memory_space<vmem>>, vector<64x128xbf16>,
    return
  }
  func.func @transform_0(%arg0: i32) -> (i32, i32) {
    %c0_i32 = arith.constant 0 : i32
    %c0_i32_0 = arith.constant 0 : i32
    return %arg0, %c0_i32 : i32, i32
  }
  func.func @transform_1(%arg0: i32) -> (i32, i32) {
    %c0_i32 = arith.constant 0 : i32
    %c0_i32_0 = arith.constant 0 : i32
    return %arg0, %c0_i32 : i32, i32
  }
  func.func @transform_2(%arg0: i32) -> (i32, i32) {
    %c0_i32 = arith.constant 0 : i32
    %c0_i32_0 = arith.constant 0 : i32
    %c0_i32_1 = arith.constant 0 : i32
    return %c0_i32, %c0_i32_0 : i32, i32
  }
  func.func @transform_3(%arg0: i32) -> (i32, i32) {
    %c0_i32 = arith.constant 0 : i32
    %c0_i32_0 = arith.constant 0 : i32
    %c0_i32_1 = arith.constant 0 : i32
    return %c0_i32, %c0_i32_0 : i32, i32
  }
  func.func @transform_4(%arg0: i32) -> (i32, i32) {
    %c0_i32 = arith.constant 0 : i32
    %c0_i32_0 = arith.constant 0 : i32
    %c0_i32_1 = arith.constant 0 : i32
    return %c0_i32, %c0_i32_0 : i32, i32
  }
  func.func @transform_5(%arg0: i32) -> (i32, i32) {
    %c0_i32 = arith.constant 0 : i32
    %c0_i32_0 = arith.constant 0 : i32
    %c0_i32_1 = arith.constant 0 : i32
    return %c0_i32, %c0_i32_0 : i32, i32
  }
  func.func @transform_6(%arg0: i32) -> (i32, i32) {
    %c0_i32 = arith.constant 0 : i32
    %c0_i32_0 = arith.constant 0 : i32
    return %arg0, %c0_i32 : i32, i32
  }
}

</mosaic_0001>

<llo_original>
// kernel: basic_block_forward.8
$region0: #{basic_block_forward.8}
  #allocation0 [shape = 'u32[]', space=smem, size = 0x4, offset = 0x4, fixed_abs, tag = 'smem constant byte address 0x4 - core index']
  #allocation1 [shape = 'u32[144,128]{1,0:T(1,128)}', space=vmem, size = 0x12000, scoped, tag = 'internal scratch']
  #allocation2 [shape = 'f32[32,128]{1,0:T(8,128)}', space=vmem, size = 0x4000, scoped, tag = 'scratch operand']
  %s0 = inlined_call_operand.vmem [shape: bf16[2,2,4,8,128], index: 0, kind: input, shape index: {}]
  %s1 = inlined_call_operand.vmem [shape: bf16[1,128,128], index: 1, kind: input, shape index: {}]
  %s2 = inlined_call_operand.vmem [shape: bf16[2,64,128], index: 2, kind: output, shape index: {0}]
  %s3 = inlined_call_operand.vmem [shape: f32[2,1,128], index: 3, kind: output, shape index: {1}]
  %s4 = inlined_call_operand.vmem [shape: f32[2,1,128], index: 4, kind: output, shape index: {2}]
  %5 = xla_tuple %s2, %s3, %s4
  %s6 = sld [smem:[#allocation0]]
  $region65: #{basic_block_forward.8} parent=0
    _
  %s8 = ssub.s32 1, %s6
  %s9 = scalar_select 0, %s8, %s6
  loop: start=0, step=1, limit=6
  $region2: #{basic_block_forward.8} parent=0 // loop_pre_header
    _
  $region3: #{basic_block_forward.8} parent=0 // loop_header
    %s11 = sphi 0, %s15
    %p12 = scmp.ge.s32.totalorder %s11, 6
    %s18 = sphi 0, %s37
    %s19 = sphi 0, %s33
    %s20 = sphi 0, %s29
    %s21 = sphi 0, %s18
    %s22 = sphi 0, %s19
    %s23 = sphi 0, %s20
    %s24 = sphi 0, %s21
    %s25 = sphi 0, %s22
    %s26 = sphi 0, %s23
    %s42 = sphi 0, %s44
    %s45 = sphi 0, %s42
    %s46 = sphi 0, %s45
    %s62 = sphi 0, %s46
    %s68 = sphi 0, %s70
    %s71 = sphi 0, %s68
    %s72 = sphi 0, %s71
    %s88 = sphi 0, %s72
    %s98 = sphi 0, %s100
    %s101 = sphi 0, %s98
    %s102 = sphi 0, %s101
    %s118 = sphi 0, %s102
    %s126 = sphi 0, %s128
    %s129 = sphi 0, %s126
    %s130 = sphi 0, %s129
    %s146 = sphi 0, %s130
    %s154 = sphi 0, %s156
    %s157 = sphi 0, %s154
    %s158 = sphi 0, %s157
    %s174 = sphi 0, %s158
  $region4: #{basic_block_forward.8} parent=0 // loop_header_branch
    %14 = sbr.rel (%p12) target = $region8
  $region5: #{basic_block_forward.8} parent=0 // loop_body
    %s16 = ssub.s32 %s11, 1
    %s17 = ssub.s32 %s11, 2
    %s27 = sadd.s32 1, %s20
    %p28 = scmp.ge.s32.totalorder %s27, 2
    %s29 = scalar_select %p28, 0, %s27
    %s30 = sadd.s32 1, %s19
    %s31 = scalar_select %p28, %s30, %s19
    %p32 = scmp.ge.s32.totalorder %s31, 2
    %s33 = scalar_select %p32, 0, %s31
    %s34 = sadd.s32 1, %s18
    %s35 = scalar_select %p32, %s34, %s18
    %p36 = scmp.ge.s32.totalorder %s35, 1
    %s37 = scalar_select %p36, 0, %s35
    %s38 = ssub.s32 %s19, %s33
    %s39 = ssub.s32 %s20, %s29
    %s40 = sor.u32 %s38, %s39
    %p41 = scmp.eq.s32.totalorder %s40, 0
    %s43 = sadd.s32 %s42, 1
    %s44 = scalar_select %p41, %s42, %s43
    %p47 = pneg %p41
    %p48 = scmp.eq.s32.totalorder %s11, 3
    %p49 = por %p47, %p48
    %p50 = scmp.ne.s32.totalorder %s42, %s45
    %p51 = scmp.eq.s32.totalorder %s11, 0
    %p52 = por %p50, %p51
    %p53 = scmp.ne.s32.totalorder %s42, %s45
    %p54 = scmp.eq.s32.totalorder %s16, 3
    %p55 = por %p53, %p54
    %p56 = scmp.ne.s32.totalorder %s45, %s46
    %p57 = scmp.eq.s32.totalorder %s16, 0
    %p58 = por %p56, %p57
    %p59 = scmp.ne.s32.totalorder %s45, %s46
    %p60 = scmp.eq.s32.totalorder %s17, 3
    %p61 = por %p59, %p60
    %p63 = scmp.ne.s32.totalorder %s46, %s62
    %p64 = scmp.eq.s32.totalorder %s17, 0
    %p65 = por %p63, %p64
    %s66 = ssub.s32 %s18, %s37
    %p67 = scmp.eq.s32.totalorder %s66, 0
    %s69 = sadd.s32 %s68, 1
    %s70 = scalar_select %p67, %s68, %s69
    %p73 = pneg %p67
    %p74 = scmp.eq.s32.totalorder %s11, 3
    %p75 = por %p73, %p74
    %p76 = scmp.ne.s32.totalorder %s68, %s71
    %p77 = scmp.eq.s32.totalorder %s11, 0
    %p78 = por %p76, %p77
    %p79 = scmp.ne.s32.totalorder %s68, %s71
    %p80 = scmp.eq.s32.totalorder %s16, 3
    %p81 = por %p79, %p80
    %p82 = scmp.ne.s32.totalorder %s71, %s72
    %p83 = scmp.eq.s32.totalorder %s16, 0
    %p84 = por %p82, %p83
    %p85 = scmp.ne.s32.totalorder %s71, %s72
    %p86 = scmp.eq.s32.totalorder %s17, 3
    %p87 = por %p85, %p86
    %p89 = scmp.ne.s32.totalorder %s72, %s88
    %p90 = scmp.eq.s32.totalorder %s17, 0
    %p91 = por %p89, %p90
    %s92 = ssub.s32 %s19, %s33
    %s93 = ssub.s32 %s20, %s29
    %s94 = sor.u32 %s92, %s93
    %s95 = ssub.s32 %s18, %s37
    %s96 = sor.u32 %s94, %s95
    %p97 = scmp.eq.s32.totalorder %s96, 0
    %s99 = sadd.s32 %s98, 1
    %s100 = scalar_select %p97, %s98, %s99
    %p103 = pneg %p97
    %p104 = scmp.eq.s32.totalorder %s11, 3
    %p105 = por %p103, %p104
    %p106 = scmp.ne.s32.totalorder %s98, %s101
    %p107 = scmp.eq.s32.totalorder %s11, 0
    %p108 = por %p106, %p107
    %p109 = scmp.ne.s32.totalorder %s98, %s101
    %p110 = scmp.eq.s32.totalorder %s16, 3
    %p111 = por %p109, %p110
    %p112 = scmp.ne.s32.totalorder %s101, %s102
    %p113 = scmp.eq.s32.totalorder %s16, 0
    %p114 = por %p112, %p113
    %p115 = scmp.ne.s32.totalorder %s101, %s102
    %p116 = scmp.eq.s32.totalorder %s17, 3
    %p117 = por %p115, %p116
    %p119 = scmp.ne.s32.totalorder %s102, %s118
    %p120 = scmp.eq.s32.totalorder %s17, 0
    %p121 = por %p119, %p120
    %s122 = ssub.s32 %s19, %s33
    %s123 = ssub.s32 %s18, %s37
    %s124 = sor.u32 %s122, %s123
    %p125 = scmp.eq.s32.totalorder %s124, 0
    %s127 = sadd.s32 %s126, 1
    %s128 = scalar_select %p125, %s126, %s127
    %p131 = pneg %p125
    %p132 = scmp.eq.s32.totalorder %s11, 3
    %p133 = por %p131, %p132
    %p134 = scmp.ne.s32.totalorder %s126, %s129
    %p135 = scmp.eq.s32.totalorder %s11, 0
    %p136 = por %p134, %p135
    %p137 = scmp.ne.s32.totalorder %s126, %s129
    %p138 = scmp.eq.s32.totalorder %s16, 3
    %p139 = por %p137, %p138
    %p140 = scmp.ne.s32.totalorder %s129, %s130
    %p141 = scmp.eq.s32.totalorder %s16, 0
    %p142 = por %p140, %p141
    %p143 = scmp.ne.s32.totalorder %s129, %s130
    %p144 = scmp.eq.s32.totalorder %s17, 3
    %p145 = por %p143, %p144
    %p147 = scmp.ne.s32.totalorder %s130, %s146
    %p148 = scmp.eq.s32.totalorder %s17, 0
    %p149 = por %p147, %p148
    %s150 = ssub.s32 %s19, %s33
    %s151 = ssub.s32 %s18, %s37
    %s152 = sor.u32 %s150, %s151
    %p153 = scmp.eq.s32.totalorder %s152, 0
    %s155 = sadd.s32 %s154, 1
    %s156 = scalar_select %p153, %s154, %s155
    %p159 = pneg %p153
    %p160 = scmp.eq.s32.totalorder %s11, 3
    %p161 = por %p159, %p160
    %p162 = scmp.ne.s32.totalorder %s154, %s157
    %p163 = scmp.eq.s32.totalorder %s11, 0
    %p164 = por %p162, %p163
    %p165 = scmp.ne.s32.totalorder %s154, %s157
    %p166 = scmp.eq.s32.totalorder %s16, 3
    %p167 = por %p165, %p166
    %p168 = scmp.ne.s32.totalorder %s157, %s158
    %p169 = scmp.eq.s32.totalorder %s16, 0
    %p170 = por %p168, %p169
    %p171 = scmp.ne.s32.totalorder %s157, %s158
    %p172 = scmp.eq.s32.totalorder %s17, 3
    %p173 = por %p171, %p172
    %p175 = scmp.ne.s32.totalorder %s158, %s174
    %p176 = scmp.eq.s32.totalorder %s17, 0
    %p177 = por %p175, %p176
    %p178 = scmp.le.s32.totalorder 1, %s11
    %p179 = scmp.lt.s32.totalorder %s11, 5
    %p180 = pnand %p178, %p179
    %p181 = pneg %p180
    // Predicated region
    $region9: #{basic_block_forward.8} parent=5 // pred_check
      _
    $region10: #{basic_block_forward.8} parent=5 // pred_check_branch
      %183 = sbr.rel (%p180) target = $region12
    $region11: #{basic_block_forward.8} parent=5 // pred_region
      %s184 = ssub.s32 %s11, 1
      // Predicated region
      $region13: #{basic_block_forward.8} parent=11 // pred_check
        %p185 = pneg %p84
      $region14: #{basic_block_forward.8} parent=11 // pred_check_branch
        %187 = sbr.rel (%p185) target = $region16
      $region15: #{basic_block_forward.8} parent=11 // pred_region
        %p188 = scmp.lt.s32.totalorder %s21, 0
        %s189 = scalar_select %p188, %s21, 0
        %s190 = smul.addr %s189, 4
        %s191 = scalar_lea.vmem %s1, %s190
      $region16: #{basic_block_forward.8} parent=11 // pred_fallthru
        _
    $region12: #{basic_block_forward.8} parent=5 // pred_fallthru
      _
    %p192 = scmp.lt.s32.totalorder %s11, 4
    // Predicated region
    $region17: #{basic_block_forward.8} parent=5 // pred_check
      %p193 = pneg %p192
    $region18: #{basic_block_forward.8} parent=5 // pred_check_branch
      %195 = sbr.rel (%p193) target = $region20
    $region19: #{basic_block_forward.8} parent=5 // pred_region
      // Predicated region
      $region21: #{basic_block_forward.8} parent=19 // pred_check
        %p196 = pneg %p52
      $region22: #{basic_block_forward.8} parent=19 // pred_check_branch
        %198 = sbr.rel (%p196) target = $region24
      $region23: #{basic_block_forward.8} parent=19 // pred_region
        %p199 = scmp.lt.s32.totalorder %s19, 1
        %s200 = scalar_select %p199, %s19, 1
        %p201 = scmp.lt.s32.totalorder %s20, 1
        %s202 = scalar_select %p201, %s20, 1
        %s203 = smul.addr %s202, 4
        %s204 = smul.addr %s200, 8
        %s205 = sadd.s32 %s203, %s204
        %s206 = smul.addr %s205, 4
        %s207 = scalar_lea.vmem %s0, %s206
      $region24: #{basic_block_forward.8} parent=19 // pred_fallthru
        _
    $region20: #{basic_block_forward.8} parent=5 // pred_fallthru
      _
    %p208 = scmp.le.s32.totalorder 1, %s11
    %p209 = scmp.lt.s32.totalorder %s11, 5
    %p210 = pnand %p208, %p209
    %p211 = pneg %p210
    // Predicated region
    $region25: #{basic_block_forward.8} parent=5 // pred_check
      _
    $region26: #{basic_block_forward.8} parent=5 // pred_check_branch
      %213 = sbr.rel (%p210) target = $region28
    $region27: #{basic_block_forward.8} parent=5 // pred_region
      %s214 = ssub.s32 %s11, 1
      %p215 = scmp.lt.s32.totalorder %s22, 1
      %s216 = scalar_select %p215, %s22, 1
      %p217 = scmp.lt.s32.totalorder %s23, 1
      %s218 = scalar_select %p217, %s23, 1
      %s219 = smul.addr %s218, 4
      %s220 = smul.addr %s216, 8
      %s221 = sadd.s32 %s219, %s220
      %s222 = smul.addr %s221, 4
      %s223 = scalar_lea.vmem %s0, %s222
      %p224 = pneg %p58
      %p225 = pneg %p55
      %p226 = scmp.lt.s32.totalorder %s21, 0
      %s227 = scalar_select %p226, %s21, 0
      %s228 = smul.addr %s227, 4
      %s229 = scalar_lea.vmem %s1, %s228
      %p230 = pneg %p84
      %p231 = pneg %p81
      %p232 = pneg %p114
      %p233 = pneg %p111
      %s234 = smul.u32 4, %s23
      %p235 = scmp.lt.s32.totalorder %s22, 1
      %s236 = scalar_select %p235, %s22, 1
      %p237 = scmp.lt.s32.totalorder %s234, 7
      %s238 = scalar_select %p237, %s234, 7
      %p239 = scmp.lt.s32.totalorder %s21, 0
      %s240 = scalar_select %p239, %s21, 0
      %s241 = sadd.s32 %s240, %s238
      %s242 = smul.addr %s236, 8
      %s243 = sadd.s32 %s241, %s242
      %s244 = smul.addr %s243, 4
      %s245 = scalar_lea.vmem %s2, %s244
      %p246 = pneg %p142
      %p247 = pneg %p139
      %p248 = scmp.lt.s32.totalorder %s22, 1
      %s249 = scalar_select %p248, %s22, 1
      %p250 = scmp.lt.s32.totalorder %s21, 0
      %s251 = scalar_select %p250, %s21, 0
      %s252 = sadd.s32 %s251, %s249
      %s253 = scalar_lea.vmem %s3, %s252
      %p254 = pneg %p170
      %p255 = pneg %p167
      %p256 = scmp.lt.s32.totalorder %s22, 1
      %s257 = scalar_select %p256, %s22, 1
      %p258 = scmp.lt.s32.totalorder %s21, 0
      %s259 = scalar_select %p258, %s21, 0
      %s260 = sadd.s32 %s259, %s257
      %s261 = scalar_lea.vmem %s4, %s260
      %p262 = scmp.lt.s32.totalorder %s22, 1
      %s263 = scalar_select %p262, %s22, 1
      %p264 = scmp.lt.s32.totalorder %s23, 1
      %s265 = scalar_select %p264, %s23, 1
      %s266 = smul.addr %s265, 4
      %s267 = smul.addr %s263, 8
      %s268 = sadd.s32 %s266, %s267
      %s269 = smul.addr %s268, 4
      %s270 = scalar_lea.vmem %s0, %s269
      %p271 = scmp.lt.s32.totalorder %s21, 0
      %s272 = scalar_select %p271, %s21, 0
      %s273 = smul.addr %s272, 4
      %s274 = scalar_lea.vmem %s1, %s273
      %s275 = smul.u32 4, %s23
      %p276 = scmp.lt.s32.totalorder %s22, 1
      %s277 = scalar_select %p276, %s22, 1
      %p278 = scmp.lt.s32.totalorder %s275, 7
      %s279 = scalar_select %p278, %s275, 7
      %p280 = scmp.lt.s32.totalorder %s21, 0
      %s281 = scalar_select %p280, %s21, 0
      %s282 = sadd.s32 %s281, %s279
      %s283 = smul.addr %s277, 8
      %s284 = sadd.s32 %s282, %s283
      %s285 = smul.addr %s284, 4
      %s286 = scalar_lea.vmem %s2, %s285
      %s287 = smul.u32 4, %s23
      %p288 = scmp.lt.s32.totalorder %s22, 1
      %s289 = scalar_select %p288, %s22, 1
      %p290 = scmp.lt.s32.totalorder %s21, 0
      %s291 = scalar_select %p290, %s21, 0
      %s292 = sadd.s32 %s291, %s289
      %s293 = scalar_lea.vmem %s3, %s292
      %p294 = scmp.lt.s32.totalorder %s22, 1
      %s295 = scalar_select %p294, %s22, 1
      %p296 = scmp.lt.s32.totalorder %s21, 0
      %s297 = scalar_select %p296, %s21, 0
      %s298 = sadd.s32 %s297, %s295
      %s299 = scalar_lea.vmem %s4, %s298
      %v301 = vld [vmem:[%s270] sm:$0xf]
      %v302 = vld [vmem:[%s270 + $0x4] sm:$0xf]
      %v303 = vld [vmem:[%s270 + $0x8] sm:$0xf]
      %v304 = vld [vmem:[%s270 + $0xc] sm:$0xf]
      %v305 = vld [vmem:[%s274] sm:$0xf]
      %v306 = vld [vmem:[%s274 + $0x4] sm:$0xf]
      %v307 = vld [vmem:[%s274 + $0x8] sm:$0xf]
      %v308 = vld [vmem:[%s274 + $0xc] sm:$0xf]
      %v309 = vld [vmem:[%s274 + $0x10] sm:$0xf]
      %v310 = vld [vmem:[%s274 + $0x14] sm:$0xf]
      %v311 = vld [vmem:[%s274 + $0x18] sm:$0xf]
      %v312 = vld [vmem:[%s274 + $0x1c] sm:$0xf]
      %v313 = vld [vmem:[%s274 + $0x20] sm:$0xf]
      %v314 = vld [vmem:[%s274 + $0x24] sm:$0xf]
      %v315 = vld [vmem:[%s274 + $0x28] sm:$0xf]
      %v316 = vld [vmem:[%s274 + $0x2c] sm:$0xf]
      %v317 = vld [vmem:[%s274 + $0x30] sm:$0xf]
      %v318 = vld [vmem:[%s274 + $0x34] sm:$0xf]
      %v319 = vld [vmem:[%s274 + $0x38] sm:$0xf]
      %v320 = vld [vmem:[%s274 + $0x3c] sm:$0xf]
      %v325 = vunpack.c.l.b16 %v301
      %v326 = vunpack.c.l.b16 %v302
      %v327 = vunpack.c.l.b16 %v303
      %v328 = vunpack.c.l.b16 %v304
      %v329 = vpack.c.b16 %v326, %v325
      %v330 = vpack.c.b16 %v328, %v327
      %v349 = vunpack.c.l.b16 %v305
      %v350 = vunpack.c.l.b16 %v306
      %v351 = vunpack.c.l.b16 %v307
      %v352 = vunpack.c.l.b16 %v308
      %v353 = vunpack.c.l.b16 %v309
      %v354 = vunpack.c.l.b16 %v310
      %v355 = vunpack.c.l.b16 %v311
      %v356 = vunpack.c.l.b16 %v312
      %v357 = vunpack.c.l.b16 %v313
      %v358 = vunpack.c.l.b16 %v314
      %v359 = vunpack.c.l.b16 %v315
      %v360 = vunpack.c.l.b16 %v316
      %v361 = vunpack.c.l.b16 %v317
      %v362 = vunpack.c.l.b16 %v318
      %v363 = vunpack.c.l.b16 %v319
      %v364 = vunpack.c.l.b16 %v320
      %v365 = vpack.c.b16 %v350, %v349
      %v366 = vpack.c.b16 %v352, %v351
      %v367 = vpack.c.b16 %v354, %v353
      %v368 = vpack.c.b16 %v356, %v355
      %v369 = vpack.c.b16 %v358, %v357
      %v370 = vpack.c.b16 %v360, %v359
      %v371 = vpack.c.b16 %v362, %v361
      %v372 = vpack.c.b16 %v364, %v363
      %381 = vmatprep.subr.bf16.mxu0 0
      %382 = vmatpush1.bf16.msra.mxu0 %v372
      %383 = vmatprep.subr.bf16.mxu0 0
      %384 = vmatpush1.bf16.msra.mxu0 %v371
      %385 = vmatprep.subr.bf16.mxu0 0
      %386 = vmatpush1.bf16.msra.mxu0 %v370
      %387 = vmatprep.subr.bf16.mxu0 0
      %388 = vmatpush1.bf16.msra.mxu0 %v369
      %389 = vmatprep.subr.bf16.mxu0 0
      %390 = vmatpush1.bf16.msra.mxu0 %v368
      %391 = vmatprep.subr.bf16.mxu0 0
      %392 = vmatpush1.bf16.msra.mxu0 %v367
      %393 = vmatprep.subr.bf16.mxu0 0
      %394 = vmatpush1.bf16.msra.mxu0 %v366
      %395 = vmatprep.subr.bf16.mxu0 0
      %396 = vmatpush1.bf16.msra.mxu0 %v365
      %397 = vmatprep.subr.bf16.mxu0 0
      %398 = vmatpush2.bf16.msra.mxu0 0
      %399 = vmatprep.subr.bf16.mxu0 0
      %400 = vmatpush2.bf16.msra.mxu0 0
      %401 = vmatprep.subr.bf16.mxu0 0
      %402 = vmatpush2.bf16.msra.mxu0 0
      %403 = vmatprep.subr.bf16.mxu0 0
      %404 = vmatpush2.bf16.msra.mxu0 0
      %405 = vmatprep.subr.bf16.mxu0 0
      %406 = vmatpush2.bf16.msra.mxu0 0
      %407 = vmatprep.subr.bf16.mxu0 0
      %408 = vmatpush2.bf16.msra.mxu0 0
      %409 = vmatprep.subr.bf16.mxu0 0
      %410 = vmatpush2.bf16.msra.mxu0 0
      %411 = vmatprep.subr.bf16.mxu0 0
      %412 = vmatpush2.bf16.msra.mxu0 0
      %413 = vmatprep.mubr.bf16.mxu0 0
      %414 = vmatmul.mubr.bf16.gmra.mxu0 %v329
      %v415 = vpop.f32.mrf.mxu0
      %v416 = vadd.f32 0.0, %v415
      %v417 = vpop.f32.mrf.mxu0
      %v418 = vpop.f32.mrf.mxu0
      %v419 = vadd.f32 0.0, %v418
      %v420 = vpop.f32.mrf.mxu0
      %421 = vmatprep.mubr.bf16.mxu0 0
      %422 = vmatmul.mubr.bf16.gmra.mxu0 %v330
      %v423 = vpop.f32.mrf.mxu0
      %v424 = vadd.f32 0.0, %v423
      %v425 = vpop.f32.mrf.mxu0
      %v426 = vpop.f32.mrf.mxu0
      %v427 = vadd.f32 0.0, %v426
      %v428 = vpop.f32.mrf.mxu0
      %429 = vdwg.mxu0
      %430 = vst [vmem:[#allocation2] sm:$0xff] %v416
      %431 = vst [vmem:[#allocation2 + $0x8] sm:$0xff] %v419
      %432 = vst [vmem:[#allocation2 + $0x10] sm:$0xff] %v424
      %433 = vst [vmem:[#allocation2 + $0x18] sm:$0xff] %v427
      %v434 = vld [vmem:[#allocation2] sm:$0xff]
      %v435 = vld [vmem:[#allocation2 + $0x8] sm:$0xff]
      %v436 = vld [vmem:[#allocation2 + $0x10] sm:$0xff]
      %v437 = vld [vmem:[#allocation2 + $0x18] sm:$0xff]
      %v438 = vpack.c.bf16 %v435, %v434
      %v439 = vpack.c.bf16 %v437, %v436
      %v442 = vunpack.c.l.b16 %v438
      %v443 = vunpack.c.h.b16 %v438
      %v444 = vunpack.c.l.b16 %v439
      %v445 = vunpack.c.h.b16 %v439
      %v446 = vpack.c.b16 %v442, %v442
      %v447 = vpack.c.b16 %v443, %v443
      %v448 = vpack.c.b16 %v444, %v444
      %v449 = vpack.c.b16 %v445, %v445
      %454 = vst [vmem:[%s286] sm:$0xf] %v446
      %455 = vst [vmem:[%s286 + $0x4] sm:$0xf] %v447
      %456 = vst [vmem:[%s286 + $0x8] sm:$0xf] %v448
      %457 = vst [vmem:[%s286 + $0xc] sm:$0xf] %v449
      %v458 = vadd.f32 %v434, %v435
      %v459 = vadd.f32 %v458, %v436
      %v460 = vadd.f32 %v459, %v437
      %v461 = vrot.slane %v460, 4
      %v462 = vadd.f32 %v460, %v461
      %v463 = vrot.slane %v462, 2
      %v464 = vadd.f32 %v462, %v463
      %v465 = vrot.slane %v464, 1
      %v466 = vadd.f32 %v464, %v465
      %v467 = vmul.f32 %v434, %v434
      %v468 = vmul.f32 %v435, %v435
      %v469 = vmul.f32 %v436, %v436
      %v470 = vmul.f32 %v437, %v437
      %v471 = vadd.f32 %v467, %v468
      %v472 = vadd.f32 %v471, %v469
      %v473 = vadd.f32 %v472, %v470
      %v474 = vrot.slane %v473, 4
      %v475 = vadd.f32 %v473, %v474
      %v476 = vrot.slane %v475, 2
      %v477 = vadd.f32 %v475, %v476
      %v478 = vrot.slane %v477, 1
      %v479 = vadd.f32 %v477, %v478
      %p480 = scmp.eq.s32.totalorder %s23, 0
      // Predicated region
      $region29: #{basic_block_forward.8} parent=27 // pred_check
        %p481 = pneg %p480
      $region30: #{basic_block_forward.8} parent=27 // pred_check_branch
        %483 = sbr.rel (%p481) target = $region32
      $region31: #{basic_block_forward.8} parent=27 // pred_region
        %484 = vst [vmem:[%s293] sm:$0x1] %v466
        %485 = vst [vmem:[%s299] sm:$0x1] %v479
      $region32: #{basic_block_forward.8} parent=27 // pred_fallthru
        _
      %p486 = scmp.gt.s32.totalorder %s23, 0
      // Predicated region
      $region33: #{basic_block_forward.8} parent=27 // pred_check
        %p487 = pneg %p486
      $region34: #{basic_block_forward.8} parent=27 // pred_check_branch
        %489 = sbr.rel (%p487) target = $region36
      $region35: #{basic_block_forward.8} parent=27 // pred_region
        %v490 = vld [vmem:[%s293] sm:$0x1]
        %v491 = vadd.f32 %v490, %v466
        %492 = vst [vmem:[%s293] sm:$0x1] %v491
        %v493 = vld [vmem:[%s299] sm:$0x1]
        %v494 = vadd.f32 %v493, %v479
        %495 = vst [vmem:[%s299] sm:$0x1] %v494
      $region36: #{basic_block_forward.8} parent=27 // pred_fallthru
        _
      %s496 = smul.u32 4, %s23
      %p497 = scmp.lt.s32.totalorder %s22, 1
      %s498 = scalar_select %p497, %s22, 1
      %p499 = scmp.lt.s32.totalorder %s496, 7
      %s500 = scalar_select %p499, %s496, 7
      %p501 = scmp.lt.s32.totalorder %s21, 0
      %s502 = scalar_select %p501, %s21, 0
      %s503 = sadd.s32 %s502, %s500
      %s504 = smul.addr %s498, 8
      %s505 = sadd.s32 %s503, %s504
      %s506 = smul.addr %s505, 4
      %s507 = scalar_lea.vmem %s2, %s506
      %p508 = scmp.lt.s32.totalorder %s22, 1
      %s509 = scalar_select %p508, %s22, 1
      %p510 = scmp.lt.s32.totalorder %s21, 0
      %s511 = scalar_select %p510, %s21, 0
      %s512 = sadd.s32 %s511, %s509
      %s513 = scalar_lea.vmem %s3, %s512
      %p514 = scmp.lt.s32.totalorder %s22, 1
      %s515 = scalar_select %p514, %s22, 1
      %p516 = scmp.lt.s32.totalorder %s21, 0
      %s517 = scalar_select %p516, %s21, 0
      %s518 = sadd.s32 %s517, %s515
      %s519 = scalar_lea.vmem %s4, %s518
      // Predicated region
      $region37: #{basic_block_forward.8} parent=27 // pred_check
        %p520 = pneg %p111
      $region38: #{basic_block_forward.8} parent=27 // pred_check_branch
        %522 = sbr.rel (%p520) target = $region40
      $region39: #{basic_block_forward.8} parent=27 // pred_region
        %s523 = smul.u32 4, %s23
      $region40: #{basic_block_forward.8} parent=27 // pred_fallthru
        _
      // Predicated region
      $region41: #{basic_block_forward.8} parent=27 // pred_check
        %p524 = pneg %p139
      $region42: #{basic_block_forward.8} parent=27 // pred_check_branch
        %526 = sbr.rel (%p524) target = $region44
      $region43: #{basic_block_forward.8} parent=27 // pred_region
        _
      $region44: #{basic_block_forward.8} parent=27 // pred_fallthru
        _
      // Predicated region
      $region45: #{basic_block_forward.8} parent=27 // pred_check
        %p527 = pneg %p167
      $region46: #{basic_block_forward.8} parent=27 // pred_check_branch
        %529 = sbr.rel (%p527) target = $region48
      $region47: #{basic_block_forward.8} parent=27 // pred_region
        _
      $region48: #{basic_block_forward.8} parent=27 // pred_fallthru
        _
    $region28: #{basic_block_forward.8} parent=5 // pred_fallthru
      _
    %p530 = scmp.le.s32.totalorder 2, %s11
    // Predicated region
    $region49: #{basic_block_forward.8} parent=5 // pred_check
      %p531 = pneg %p530
    $region50: #{basic_block_forward.8} parent=5 // pred_check_branch
      %533 = sbr.rel (%p531) target = $region52
    $region51: #{basic_block_forward.8} parent=5 // pred_region
      %s534 = ssub.s32 %s11, 2
      // Predicated region
      $region53: #{basic_block_forward.8} parent=51 // pred_check
        %p535 = pneg %p117
      $region54: #{basic_block_forward.8} parent=51 // pred_check_branch
        %537 = sbr.rel (%p535) target = $region56
      $region55: #{basic_block_forward.8} parent=51 // pred_region
        %s538 = smul.u32 4, %s26
        %p539 = scmp.lt.s32.totalorder %s25, 1
        %s540 = scalar_select %p539, %s25, 1
        %p541 = scmp.lt.s32.totalorder %s538, 7
        %s542 = scalar_select %p541, %s538, 7
        %p543 = scmp.lt.s32.totalorder %s24, 0
        %s544 = scalar_select %p543, %s24, 0
        %s545 = sadd.s32 %s544, %s542
        %s546 = smul.addr %s540, 8
        %s547 = sadd.s32 %s545, %s546
        %s548 = smul.addr %s547, 4
        %s549 = scalar_lea.vmem %s2, %s548
      $region56: #{basic_block_forward.8} parent=51 // pred_fallthru
        _
      // Predicated region
      $region57: #{basic_block_forward.8} parent=51 // pred_check
        %p550 = pneg %p145
      $region58: #{basic_block_forward.8} parent=51 // pred_check_branch
        %552 = sbr.rel (%p550) target = $region60
      $region59: #{basic_block_forward.8} parent=51 // pred_region
        %p553 = scmp.lt.s32.totalorder %s25, 1
        %s554 = scalar_select %p553, %s25, 1
        %p555 = scmp.lt.s32.totalorder %s24, 0
        %s556 = scalar_select %p555, %s24, 0
        %s557 = sadd.s32 %s556, %s554
        %s558 = scalar_lea.vmem %s3, %s557
      $region60: #{basic_block_forward.8} parent=51 // pred_fallthru
        _
      // Predicated region
      $region61: #{basic_block_forward.8} parent=51 // pred_check
        %p559 = pneg %p173
      $region62: #{basic_block_forward.8} parent=51 // pred_check_branch
        %561 = sbr.rel (%p559) target = $region64
      $region63: #{basic_block_forward.8} parent=51 // pred_region
        %p562 = scmp.lt.s32.totalorder %s25, 1
        %s563 = scalar_select %p562, %s25, 1
        %p564 = scmp.lt.s32.totalorder %s24, 0
        %s565 = scalar_select %p564, %s24, 0
        %s566 = sadd.s32 %s565, %s563
        %s567 = scalar_lea.vmem %s4, %s566
      $region64: #{basic_block_forward.8} parent=51 // pred_fallthru
        _
    $region52: #{basic_block_forward.8} parent=5 // pred_fallthru
      _
  $region6: #{basic_block_forward.8} parent=0 // loop_footer
    %s15 = sadd.s32 1, %s11
  $region7: #{basic_block_forward.8} parent=0 // loop_footer_branch
    %10 = sbr.rel target = $region3
  $region8: #{basic_block_forward.8} parent=0 // loop_exit
    _

// kernel: basic_block_forward.6
$region0: #{basic_block_forward.6}
  #allocation0 [shape = 'u32[]', space=smem, size = 0x4, offset = 0x4, fixed_abs, tag = 'smem constant byte address 0x4 - core index']
  #allocation1 [shape = 'u32[144,128]{1,0:T(1,128)}', space=vmem, size = 0x12000, scoped, tag = 'internal scratch']
  %s0 = inlined_call_operand.vmem [shape: bf16[128,128], index: 0, kind: input, shape index: {}]
  %s1 = inlined_call_operand.vmem [shape: f32[1,128], index: 1, kind: input, shape index: {}]
  %s2 = inlined_call_operand.vmem [shape: f32[1,128], index: 2, kind: input, shape index: {}]
  %s3 = inlined_call_operand.vmem [shape: bf16[128,128], index: 3, kind: output, shape index: {}]
  %s4 = sld [smem:[#allocation0]]
  $region45: #{basic_block_forward.6} parent=0
    _
  %s6 = ssub.s32 1, %s4
  %s7 = scalar_select 0, %s6, %s4
  loop: start=0, step=1, limit=4
  $region2: #{basic_block_forward.6} parent=0 // loop_pre_header
    _
  $region3: #{basic_block_forward.6} parent=0 // loop_header
    %s9 = sphi 0, %s13
    %p10 = scmp.ge.s32.totalorder %s9, 4
    %s19 = sphi 0, %s21
    %s22 = sphi 0, %s19
    %s23 = sphi 0, %s22
    %s39 = sphi 0, %s23
    %s43 = sphi 0, %s43
    %s45 = sphi 0, %s43
    %s46 = sphi 0, %s45
    %s60 = sphi 0, %s46
    %s64 = sphi 0, %s64
    %s66 = sphi 0, %s64
    %s67 = sphi 0, %s66
    %s81 = sphi 0, %s67
    %s87 = sphi 0, %s89
    %s90 = sphi 0, %s87
    %s91 = sphi 0, %s90
    %s107 = sphi 0, %s91
  $region4: #{basic_block_forward.6} parent=0 // loop_header_branch
    %12 = sbr.rel (%p10) target = $region8
  $region5: #{basic_block_forward.6} parent=0 // loop_body
    %s14 = ssub.s32 %s9, 1
    %s15 = ssub.s32 %s9, 2
    %s16 = sadd.s32 %s9, 1
    %s17 = ssub.s32 %s9, %s16
    %p18 = scmp.eq.s32.totalorder %s17, 0
    %s20 = sadd.s32 %s19, 1
    %s21 = scalar_select %p18, %s19, %s20
    %p24 = pneg %p18
    %p25 = scmp.eq.s32.totalorder %s9, 1
    %p26 = por %p24, %p25
    %p27 = scmp.ne.s32.totalorder %s19, %s22
    %p28 = scmp.eq.s32.totalorder %s9, 0
    %p29 = por %p27, %p28
    %p30 = scmp.ne.s32.totalorder %s19, %s22
    %p31 = scmp.eq.s32.totalorder %s14, 1
    %p32 = por %p30, %p31
    %p33 = scmp.ne.s32.totalorder %s22, %s23
    %p34 = scmp.eq.s32.totalorder %s14, 0
    %p35 = por %p33, %p34
    %p36 = scmp.ne.s32.totalorder %s22, %s23
    %p37 = scmp.eq.s32.totalorder %s15, 1
    %p38 = por %p36, %p37
    %p40 = scmp.ne.s32.totalorder %s23, %s39
    %p41 = scmp.eq.s32.totalorder %s15, 0
    %p42 = por %p40, %p41
    %s44 = sadd.s32 %s43, 1
    %p47 = scmp.eq.s32.totalorder %s9, 1
    %p48 = scmp.ne.s32.totalorder %s43, %s45
    %p49 = scmp.eq.s32.totalorder %s9, 0
    %p50 = por %p48, %p49
    %p51 = scmp.ne.s32.totalorder %s43, %s45
    %p52 = scmp.eq.s32.totalorder %s14, 1
    %p53 = por %p51, %p52
    %p54 = scmp.ne.s32.totalorder %s45, %s46
    %p55 = scmp.eq.s32.totalorder %s14, 0
    %p56 = por %p54, %p55
    %p57 = scmp.ne.s32.totalorder %s45, %s46
    %p58 = scmp.eq.s32.totalorder %s15, 1
    %p59 = por %p57, %p58
    %p61 = scmp.ne.s32.totalorder %s46, %s60
    %p62 = scmp.eq.s32.totalorder %s15, 0
    %p63 = por %p61, %p62
    %s65 = sadd.s32 %s64, 1
    %p68 = scmp.eq.s32.totalorder %s9, 1
    %p69 = scmp.ne.s32.totalorder %s64, %s66
    %p70 = scmp.eq.s32.totalorder %s9, 0
    %p71 = por %p69, %p70
    %p72 = scmp.ne.s32.totalorder %s64, %s66
    %p73 = scmp.eq.s32.totalorder %s14, 1
    %p74 = por %p72, %p73
    %p75 = scmp.ne.s32.totalorder %s66, %s67
    %p76 = scmp.eq.s32.totalorder %s14, 0
    %p77 = por %p75, %p76
    %p78 = scmp.ne.s32.totalorder %s66, %s67
    %p79 = scmp.eq.s32.totalorder %s15, 1
    %p80 = por %p78, %p79
    %p82 = scmp.ne.s32.totalorder %s67, %s81
    %p83 = scmp.eq.s32.totalorder %s15, 0
    %p84 = por %p82, %p83
    %s85 = ssub.s32 %s9, %s16
    %p86 = scmp.eq.s32.totalorder %s85, 0
    %s88 = sadd.s32 %s87, 1
    %s89 = scalar_select %p86, %s87, %s88
    %p92 = pneg %p86
    %p93 = scmp.eq.s32.totalorder %s9, 1
    %p94 = por %p92, %p93
    %p95 = scmp.ne.s32.totalorder %s87, %s90
    %p96 = scmp.eq.s32.totalorder %s9, 0
    %p97 = por %p95, %p96
    %p98 = scmp.ne.s32.totalorder %s87, %s90
    %p99 = scmp.eq.s32.totalorder %s14, 1
    %p100 = por %p98, %p99
    %p101 = scmp.ne.s32.totalorder %s90, %s91
    %p102 = scmp.eq.s32.totalorder %s14, 0
    %p103 = por %p101, %p102
    %p104 = scmp.ne.s32.totalorder %s90, %s91
    %p105 = scmp.eq.s32.totalorder %s15, 1
    %p106 = por %p104, %p105
    %p108 = scmp.ne.s32.totalorder %s91, %s107
    %p109 = scmp.eq.s32.totalorder %s15, 0
    %p110 = por %p108, %p109
    %p111 = scmp.le.s32.totalorder 1, %s9
    %p112 = scmp.lt.s32.totalorder %s9, 3
    %p113 = pnand %p111, %p112
    %p114 = pneg %p113
    // Predicated region
    $region9: #{basic_block_forward.6} parent=5 // pred_check
      _
    $region10: #{basic_block_forward.6} parent=5 // pred_check_branch
      %116 = sbr.rel (%p113) target = $region12
    $region11: #{basic_block_forward.6} parent=5 // pred_region
      %s117 = ssub.s32 %s9, 1
      // Predicated region
      $region13: #{basic_block_forward.6} parent=11 // pred_check
        %p118 = pneg %p56
      $region14: #{basic_block_forward.6} parent=11 // pred_check_branch
        %120 = sbr.rel (%p118) target = $region16
      $region15: #{basic_block_forward.6} parent=11 // pred_region
        _
      $region16: #{basic_block_forward.6} parent=11 // pred_fallthru
        _
      // Predicated region
      $region17: #{basic_block_forward.6} parent=11 // pred_check
        %p121 = pneg %p77
      $region18: #{basic_block_forward.6} parent=11 // pred_check_branch
        %123 = sbr.rel (%p121) target = $region20
      $region19: #{basic_block_forward.6} parent=11 // pred_region
        _
      $region20: #{basic_block_forward.6} parent=11 // pred_fallthru
        _
    $region12: #{basic_block_forward.6} parent=5 // pred_fallthru
      _
    %p124 = scmp.lt.s32.totalorder %s9, 2
    // Predicated region
    $region21: #{basic_block_forward.6} parent=5 // pred_check
      %p125 = pneg %p124
    $region22: #{basic_block_forward.6} parent=5 // pred_check_branch
      %127 = sbr.rel (%p125) target = $region24
    $region23: #{basic_block_forward.6} parent=5 // pred_region
      // Predicated region
      $region25: #{basic_block_forward.6} parent=23 // pred_check
        %p128 = pneg %p29
      $region26: #{basic_block_forward.6} parent=23 // pred_check_branch
        %130 = sbr.rel (%p128) target = $region28
      $region27: #{basic_block_forward.6} parent=23 // pred_region
        %s131 = smul.u32 8, %s9
        %p132 = scmp.lt.s32.totalorder %s131, 15
        %s133 = scalar_select %p132, %s131, 15
        %s134 = smul.addr %s133, 4
        %s135 = scalar_lea.vmem %s0, %s134
        %s136 = smul.u32 8, %s9
      $region28: #{basic_block_forward.6} parent=23 // pred_fallthru
        _
    $region24: #{basic_block_forward.6} parent=5 // pred_fallthru
      _
    %p137 = scmp.le.s32.totalorder 1, %s9
    %p138 = scmp.lt.s32.totalorder %s9, 3
    %p139 = pnand %p137, %p138
    %p140 = pneg %p139
    // Predicated region
    $region29: #{basic_block_forward.6} parent=5 // pred_check
      _
    $region30: #{basic_block_forward.6} parent=5 // pred_check_branch
      %142 = sbr.rel (%p139) target = $region32
    $region31: #{basic_block_forward.6} parent=5 // pred_region
      %s143 = ssub.s32 %s9, 1
      %s144 = smul.u32 8, %s14
      %p145 = scmp.lt.s32.totalorder %s144, 15
      %s146 = scalar_select %p145, %s144, 15
      %s147 = smul.addr %s146, 4
      %s148 = scalar_lea.vmem %s0, %s147
      %p149 = pneg %p35
      %p150 = pneg %p32
      %p151 = pneg %p56
      %p152 = pneg %p53
      %p153 = pneg %p77
      %p154 = pneg %p74
      %p155 = pneg %p103
      %p156 = pneg %p100
      %s157 = smul.u32 8, %s14
      %p158 = scmp.lt.s32.totalorder %s157, 15
      %s159 = scalar_select %p158, %s157, 15
      %s160 = smul.addr %s159, 4
      %s161 = scalar_lea.vmem %s3, %s160
      %s162 = smul.u32 8, %s14
      %p163 = scmp.lt.s32.totalorder %s162, 15
      %s164 = scalar_select %p163, %s162, 15
      %s165 = smul.addr %s164, 4
      %s166 = scalar_lea.vmem %s0, %s165
      %s167 = smul.u32 8, %s14
      %s168 = smul.u32 8, %s14
      %p169 = scmp.lt.s32.totalorder %s168, 15
      %s170 = scalar_select %p169, %s168, 15
      %s171 = smul.addr %s170, 4
      %s172 = scalar_lea.vmem %s3, %s171
      %s173 = smul.u32 8, %s14
      %v174 = vld [vmem:[%s166] sm:$0xf]
      %v175 = vld [vmem:[%s166 + $0x4] sm:$0xf]
      %v176 = vld [vmem:[%s166 + $0x8] sm:$0xf]
      %v177 = vld [vmem:[%s166 + $0xc] sm:$0xf]
      %v178 = vld [vmem:[%s166 + $0x10] sm:$0xf]
      %v179 = vld [vmem:[%s166 + $0x14] sm:$0xf]
      %v180 = vld [vmem:[%s166 + $0x18] sm:$0xf]
      %v181 = vld [vmem:[%s166 + $0x1c] sm:$0xf]
      %v182 = vld [vmem:[%s1] sm:$0x1]
      %v183 = vunpack.c.l.bf16 %v174
      %v184 = vunpack.c.l.bf16 %v175
      %v185 = vunpack.c.l.bf16 %v176
      %v186 = vunpack.c.l.bf16 %v177
      %v187 = vunpack.c.l.bf16 %v178
      %v188 = vunpack.c.l.bf16 %v179
      %v189 = vunpack.c.l.bf16 %v180
      %v190 = vunpack.c.l.bf16 %v181
      %v192 = vlaneseq
      %v193 = vshrl.u32 %v192, 7
      %v194 = vsub.s32 0, %v193
      %v195 = vrot.slane %v182, %v194
      %v197 = vmul.f32 %v183, %v195
      %v198 = vmul.f32 %v184, %v195
      %v199 = vmul.f32 %v185, %v195
      %v200 = vmul.f32 %v186, %v195
      %v201 = vmul.f32 %v187, %v195
      %v202 = vmul.f32 %v188, %v195
      %v203 = vmul.f32 %v189, %v195
      %v204 = vmul.f32 %v190, %v195
      %v205 = vld [vmem:[%s2] sm:$0x1]
      %v207 = vlaneseq
      %v208 = vshrl.u32 %v207, 7
      %v209 = vsub.s32 0, %v208
      %v210 = vrot.slane %v205, %v209
      %v212 = vadd.f32 %v197, %v210
      %v213 = vadd.f32 %v198, %v210
      %v214 = vadd.f32 %v199, %v210
      %v215 = vadd.f32 %v200, %v210
      %v216 = vadd.f32 %v201, %v210
      %v217 = vadd.f32 %v202, %v210
      %v218 = vadd.f32 %v203, %v210
      %v219 = vadd.f32 %v204, %v210
      %v220 = vmax.f32 %v212, 0.0
      %v221 = vmax.f32 %v213, 0.0
      %v222 = vmax.f32 %v214, 0.0
      %v223 = vmax.f32 %v215, 0.0
      %v224 = vmax.f32 %v216, 0.0
      %v225 = vmax.f32 %v217, 0.0
      %v226 = vmax.f32 %v218, 0.0
      %v227 = vmax.f32 %v219, 0.0
      %v228 = vpack.c.bf16 %v221, %v220
      %v229 = vpack.c.bf16 %v223, %v222
      %v230 = vpack.c.bf16 %v225, %v224
      %v231 = vpack.c.bf16 %v227, %v226
      %v236 = vunpack.c.l.b16 %v228
      %v237 = vunpack.c.h.b16 %v228
      %v238 = vunpack.c.l.b16 %v229
      %v239 = vunpack.c.h.b16 %v229
      %v240 = vunpack.c.l.b16 %v230
      %v241 = vunpack.c.h.b16 %v230
      %v242 = vunpack.c.l.b16 %v231
      %v243 = vunpack.c.h.b16 %v231
      %v244 = vpack.c.b16 %v236, %v236
      %v245 = vpack.c.b16 %v237, %v237
      %v246 = vpack.c.b16 %v238, %v238
      %v247 = vpack.c.b16 %v239, %v239
      %v248 = vpack.c.b16 %v240, %v240
      %v249 = vpack.c.b16 %v241, %v241
      %v250 = vpack.c.b16 %v242, %v242
      %v251 = vpack.c.b16 %v243, %v243
      %260 = vst [vmem:[%s172] sm:$0xf] %v244
      %261 = vst [vmem:[%s172 + $0x4] sm:$0xf] %v245
      %262 = vst [vmem:[%s172 + $0x8] sm:$0xf] %v246
      %263 = vst [vmem:[%s172 + $0xc] sm:$0xf] %v247
      %264 = vst [vmem:[%s172 + $0x10] sm:$0xf] %v248
      %265 = vst [vmem:[%s172 + $0x14] sm:$0xf] %v249
      %266 = vst [vmem:[%s172 + $0x18] sm:$0xf] %v250
      %267 = vst [vmem:[%s172 + $0x1c] sm:$0xf] %v251
      %s268 = smul.u32 8, %s14
      %p269 = scmp.lt.s32.totalorder %s268, 15
      %s270 = scalar_select %p269, %s268, 15
      %s271 = smul.addr %s270, 4
      %s272 = scalar_lea.vmem %s3, %s271
      // Predicated region
      $region33: #{basic_block_forward.6} parent=31 // pred_check
        %p273 = pneg %p100
      $region34: #{basic_block_forward.6} parent=31 // pred_check_branch
        %275 = sbr.rel (%p273) target = $region36
      $region35: #{basic_block_forward.6} parent=31 // pred_region
        %s276 = smul.u32 8, %s14
      $region36: #{basic_block_forward.6} parent=31 // pred_fallthru
        _
    $region32: #{basic_block_forward.6} parent=5 // pred_fallthru
      _
    %p277 = scmp.le.s32.totalorder 2, %s9
    // Predicated region
    $region37: #{basic_block_forward.6} parent=5 // pred_check
      %p278 = pneg %p277
    $region38: #{basic_block_forward.6} parent=5 // pred_check_branch
      %280 = sbr.rel (%p278) target = $region40
    $region39: #{basic_block_forward.6} parent=5 // pred_region
      %s281 = ssub.s32 %s9, 2
      // Predicated region
      $region41: #{basic_block_forward.6} parent=39 // pred_check
        %p282 = pneg %p106
      $region42: #{basic_block_forward.6} parent=39 // pred_check_branch
        %284 = sbr.rel (%p282) target = $region44
      $region43: #{basic_block_forward.6} parent=39 // pred_region
        %s285 = smul.u32 8, %s15
        %p286 = scmp.lt.s32.totalorder %s285, 15
        %s287 = scalar_select %p286, %s285, 15
        %s288 = smul.addr %s287, 4
        %s289 = scalar_lea.vmem %s3, %s288
      $region44: #{basic_block_forward.6} parent=39 // pred_fallthru
        _
    $region40: #{basic_block_forward.6} parent=5 // pred_fallthru
      _
  $region6: #{basic_block_forward.6} parent=0 // loop_footer
    %s13 = sadd.s32 1, %s9
  $region7: #{basic_block_forward.6} parent=0 // loop_footer_branch
    %8 = sbr.rel target = $region3
  $region8: #{basic_block_forward.6} parent=0 // loop_exit
    _

// kernel: basic_block_forward.9
$region0: #{basic_block_forward.9}
  #allocation0 [shape = 'u32[]', space=smem, size = 0x4, offset = 0x4, fixed_abs, tag = 'smem constant byte address 0x4 - core index']
  #allocation1 [shape = 'u32[144,128]{1,0:T(1,128)}', space=vmem, size = 0x12000, scoped, tag = 'internal scratch']
  %s0 = inlined_call_operand.vmem [shape: bf16[128,128], index: 0, kind: input, shape index: {}]
  %s1 = inlined_call_operand.vmem [shape: bf16[128,128], index: 1, kind: input, shape index: {}]
  %s2 = inlined_call_operand.vmem [shape: f32[1,128], index: 2, kind: input, shape index: {}]
  %s3 = inlined_call_operand.vmem [shape: f32[1,128], index: 3, kind: input, shape index: {}]
  %s4 = inlined_call_operand.vmem [shape: f32[1,128], index: 4, kind: input, shape index: {}]
  %s5 = inlined_call_operand.vmem [shape: f32[1,128], index: 5, kind: input, shape index: {}]
  %s6 = inlined_call_operand.vmem [shape: bf16[128,128], index: 6, kind: output, shape index: {}]
  %s7 = sld [smem:[#allocation0]]
  $region57: #{basic_block_forward.9} parent=0
    _
  %s9 = ssub.s32 1, %s7
  %s10 = scalar_select 0, %s9, %s7
  loop: start=0, step=1, limit=4
  $region2: #{basic_block_forward.9} parent=0 // loop_pre_header
    _
  $region3: #{basic_block_forward.9} parent=0 // loop_header
    %s12 = sphi 0, %s16
    %p13 = scmp.ge.s32.totalorder %s12, 4
    %s22 = sphi 0, %s24
    %s25 = sphi 0, %s22
    %s26 = sphi 0, %s25
    %s42 = sphi 0, %s26
    %s48 = sphi 0, %s50
    %s51 = sphi 0, %s48
    %s52 = sphi 0, %s51
    %s68 = sphi 0, %s52
    %s72 = sphi 0, %s72
    %s74 = sphi 0, %s72
    %s75 = sphi 0, %s74
    %s89 = sphi 0, %s75
    %s93 = sphi 0, %s93
    %s95 = sphi 0, %s93
    %s96 = sphi 0, %s95
    %s110 = sphi 0, %s96
    %s114 = sphi 0, %s114
    %s116 = sphi 0, %s114
    %s117 = sphi 0, %s116
    %s131 = sphi 0, %s117
    %s135 = sphi 0, %s135
    %s137 = sphi 0, %s135
    %s138 = sphi 0, %s137
    %s152 = sphi 0, %s138
    %s158 = sphi 0, %s160
    %s161 = sphi 0, %s158
    %s162 = sphi 0, %s161
    %s178 = sphi 0, %s162
  $region4: #{basic_block_forward.9} parent=0 // loop_header_branch
    %15 = sbr.rel (%p13) target = $region8
  $region5: #{basic_block_forward.9} parent=0 // loop_body
    %s17 = ssub.s32 %s12, 1
    %s18 = ssub.s32 %s12, 2
    %s19 = sadd.s32 %s12, 1
    %s20 = ssub.s32 %s12, %s19
    %p21 = scmp.eq.s32.totalorder %s20, 0
    %s23 = sadd.s32 %s22, 1
    %s24 = scalar_select %p21, %s22, %s23
    %p27 = pneg %p21
    %p28 = scmp.eq.s32.totalorder %s12, 1
    %p29 = por %p27, %p28
    %p30 = scmp.ne.s32.totalorder %s22, %s25
    %p31 = scmp.eq.s32.totalorder %s12, 0
    %p32 = por %p30, %p31
    %p33 = scmp.ne.s32.totalorder %s22, %s25
    %p34 = scmp.eq.s32.totalorder %s17, 1
    %p35 = por %p33, %p34
    %p36 = scmp.ne.s32.totalorder %s25, %s26
    %p37 = scmp.eq.s32.totalorder %s17, 0
    %p38 = por %p36, %p37
    %p39 = scmp.ne.s32.totalorder %s25, %s26
    %p40 = scmp.eq.s32.totalorder %s18, 1
    %p41 = por %p39, %p40
    %p43 = scmp.ne.s32.totalorder %s26, %s42
    %p44 = scmp.eq.s32.totalorder %s18, 0
    %p45 = por %p43, %p44
    %s46 = ssub.s32 %s12, %s19
    %p47 = scmp.eq.s32.totalorder %s46, 0
    %s49 = sadd.s32 %s48, 1
    %s50 = scalar_select %p47, %s48, %s49
    %p53 = pneg %p47
    %p54 = scmp.eq.s32.totalorder %s12, 1
    %p55 = por %p53, %p54
    %p56 = scmp.ne.s32.totalorder %s48, %s51
    %p57 = scmp.eq.s32.totalorder %s12, 0
    %p58 = por %p56, %p57
    %p59 = scmp.ne.s32.totalorder %s48, %s51
    %p60 = scmp.eq.s32.totalorder %s17, 1
    %p61 = por %p59, %p60
    %p62 = scmp.ne.s32.totalorder %s51, %s52
    %p63 = scmp.eq.s32.totalorder %s17, 0
    %p64 = por %p62, %p63
    %p65 = scmp.ne.s32.totalorder %s51, %s52
    %p66 = scmp.eq.s32.totalorder %s18, 1
    %p67 = por %p65, %p66
    %p69 = scmp.ne.s32.totalorder %s52, %s68
    %p70 = scmp.eq.s32.totalorder %s18, 0
    %p71 = por %p69, %p70
    %s73 = sadd.s32 %s72, 1
    %p76 = scmp.eq.s32.totalorder %s12, 1
    %p77 = scmp.ne.s32.totalorder %s72, %s74
    %p78 = scmp.eq.s32.totalorder %s12, 0
    %p79 = por %p77, %p78
    %p80 = scmp.ne.s32.totalorder %s72, %s74
    %p81 = scmp.eq.s32.totalorder %s17, 1
    %p82 = por %p80, %p81
    %p83 = scmp.ne.s32.totalorder %s74, %s75
    %p84 = scmp.eq.s32.totalorder %s17, 0
    %p85 = por %p83, %p84
    %p86 = scmp.ne.s32.totalorder %s74, %s75
    %p87 = scmp.eq.s32.totalorder %s18, 1
    %p88 = por %p86, %p87
    %p90 = scmp.ne.s32.totalorder %s75, %s89
    %p91 = scmp.eq.s32.totalorder %s18, 0
    %p92 = por %p90, %p91
    %s94 = sadd.s32 %s93, 1
    %p97 = scmp.eq.s32.totalorder %s12, 1
    %p98 = scmp.ne.s32.totalorder %s93, %s95
    %p99 = scmp.eq.s32.totalorder %s12, 0
    %p100 = por %p98, %p99
    %p101 = scmp.ne.s32.totalorder %s93, %s95
    %p102 = scmp.eq.s32.totalorder %s17, 1
    %p103 = por %p101, %p102
    %p104 = scmp.ne.s32.totalorder %s95, %s96
    %p105 = scmp.eq.s32.totalorder %s17, 0
    %p106 = por %p104, %p105
    %p107 = scmp.ne.s32.totalorder %s95, %s96
    %p108 = scmp.eq.s32.totalorder %s18, 1
    %p109 = por %p107, %p108
    %p111 = scmp.ne.s32.totalorder %s96, %s110
    %p112 = scmp.eq.s32.totalorder %s18, 0
    %p113 = por %p111, %p112
    %s115 = sadd.s32 %s114, 1
    %p118 = scmp.eq.s32.totalorder %s12, 1
    %p119 = scmp.ne.s32.totalorder %s114, %s116
    %p120 = scmp.eq.s32.totalorder %s12, 0
    %p121 = por %p119, %p120
    %p122 = scmp.ne.s32.totalorder %s114, %s116
    %p123 = scmp.eq.s32.totalorder %s17, 1
    %p124 = por %p122, %p123
    %p125 = scmp.ne.s32.totalorder %s116, %s117
    %p126 = scmp.eq.s32.totalorder %s17, 0
    %p127 = por %p125, %p126
    %p128 = scmp.ne.s32.totalorder %s116, %s117
    %p129 = scmp.eq.s32.totalorder %s18, 1
    %p130 = por %p128, %p129
    %p132 = scmp.ne.s32.totalorder %s117, %s131
    %p133 = scmp.eq.s32.totalorder %s18, 0
    %p134 = por %p132, %p133
    %s136 = sadd.s32 %s135, 1
    %p139 = scmp.eq.s32.totalorder %s12, 1
    %p140 = scmp.ne.s32.totalorder %s135, %s137
    %p141 = scmp.eq.s32.totalorder %s12, 0
    %p142 = por %p140, %p141
    %p143 = scmp.ne.s32.totalorder %s135, %s137
    %p144 = scmp.eq.s32.totalorder %s17, 1
    %p145 = por %p143, %p144
    %p146 = scmp.ne.s32.totalorder %s137, %s138
    %p147 = scmp.eq.s32.totalorder %s17, 0
    %p148 = por %p146, %p147
    %p149 = scmp.ne.s32.totalorder %s137, %s138
    %p150 = scmp.eq.s32.totalorder %s18, 1
    %p151 = por %p149, %p150
    %p153 = scmp.ne.s32.totalorder %s138, %s152
    %p154 = scmp.eq.s32.totalorder %s18, 0
    %p155 = por %p153, %p154
    %s156 = ssub.s32 %s12, %s19
    %p157 = scmp.eq.s32.totalorder %s156, 0
    %s159 = sadd.s32 %s158, 1
    %s160 = scalar_select %p157, %s158, %s159
    %p163 = pneg %p157
    %p164 = scmp.eq.s32.totalorder %s12, 1
    %p165 = por %p163, %p164
    %p166 = scmp.ne.s32.totalorder %s158, %s161
    %p167 = scmp.eq.s32.totalorder %s12, 0
    %p168 = por %p166, %p167
    %p169 = scmp.ne.s32.totalorder %s158, %s161
    %p170 = scmp.eq.s32.totalorder %s17, 1
    %p171 = por %p169, %p170
    %p172 = scmp.ne.s32.totalorder %s161, %s162
    %p173 = scmp.eq.s32.totalorder %s17, 0
    %p174 = por %p172, %p173
    %p175 = scmp.ne.s32.totalorder %s161, %s162
    %p176 = scmp.eq.s32.totalorder %s18, 1
    %p177 = por %p175, %p176
    %p179 = scmp.ne.s32.totalorder %s162, %s178
    %p180 = scmp.eq.s32.totalorder %s18, 0
    %p181 = por %p179, %p180
    %p182 = scmp.le.s32.totalorder 1, %s12
    %p183 = scmp.lt.s32.totalorder %s12, 3
    %p184 = pnand %p182, %p183
    %p185 = pneg %p184
    // Predicated region
    $region9: #{basic_block_forward.9} parent=5 // pred_check
      _
    $region10: #{basic_block_forward.9} parent=5 // pred_check_branch
      %187 = sbr.rel (%p184) target = $region12
    $region11: #{basic_block_forward.9} parent=5 // pred_region
      %s188 = ssub.s32 %s12, 1
      // Predicated region
      $region13: #{basic_block_forward.9} parent=11 // pred_check
        %p189 = pneg %p85
      $region14: #{basic_block_forward.9} parent=11 // pred_check_branch
        %191 = sbr.rel (%p189) target = $region16
      $region15: #{basic_block_forward.9} parent=11 // pred_region
        _
      $region16: #{basic_block_forward.9} parent=11 // pred_fallthru
        _
      // Predicated region
      $region17: #{basic_block_forward.9} parent=11 // pred_check
        %p192 = pneg %p106
      $region18: #{basic_block_forward.9} parent=11 // pred_check_branch
        %194 = sbr.rel (%p192) target = $region20
      $region19: #{basic_block_forward.9} parent=11 // pred_region
        _
      $region20: #{basic_block_forward.9} parent=11 // pred_fallthru
        _
      // Predicated region
      $region21: #{basic_block_forward.9} parent=11 // pred_check
        %p195 = pneg %p127
      $region22: #{basic_block_forward.9} parent=11 // pred_check_branch
        %197 = sbr.rel (%p195) target = $region24
      $region23: #{basic_block_forward.9} parent=11 // pred_region
        _
      $region24: #{basic_block_forward.9} parent=11 // pred_fallthru
        _
      // Predicated region
      $region25: #{basic_block_forward.9} parent=11 // pred_check
        %p198 = pneg %p148
      $region26: #{basic_block_forward.9} parent=11 // pred_check_branch
        %200 = sbr.rel (%p198) target = $region28
      $region27: #{basic_block_forward.9} parent=11 // pred_region
        _
      $region28: #{basic_block_forward.9} parent=11 // pred_fallthru
        _
    $region12: #{basic_block_forward.9} parent=5 // pred_fallthru
      _
    %p201 = scmp.lt.s32.totalorder %s12, 2
    // Predicated region
    $region29: #{basic_block_forward.9} parent=5 // pred_check
      %p202 = pneg %p201
    $region30: #{basic_block_forward.9} parent=5 // pred_check_branch
      %204 = sbr.rel (%p202) target = $region32
    $region31: #{basic_block_forward.9} parent=5 // pred_region
      // Predicated region
      $region33: #{basic_block_forward.9} parent=31 // pred_check
        %p205 = pneg %p32
      $region34: #{basic_block_forward.9} parent=31 // pred_check_branch
        %207 = sbr.rel (%p205) target = $region36
      $region35: #{basic_block_forward.9} parent=31 // pred_region
        %s208 = smul.u32 8, %s12
        %p209 = scmp.lt.s32.totalorder %s208, 15
        %s210 = scalar_select %p209, %s208, 15
        %s211 = smul.addr %s210, 4
        %s212 = scalar_lea.vmem %s0, %s211
        %s213 = smul.u32 8, %s12
      $region36: #{basic_block_forward.9} parent=31 // pred_fallthru
        _
      // Predicated region
      $region37: #{basic_block_forward.9} parent=31 // pred_check
        %p214 = pneg %p58
      $region38: #{basic_block_forward.9} parent=31 // pred_check_branch
        %216 = sbr.rel (%p214) target = $region40
      $region39: #{basic_block_forward.9} parent=31 // pred_region
        %s217 = smul.u32 8, %s12
        %p218 = scmp.lt.s32.totalorder %s217, 15
        %s219 = scalar_select %p218, %s217, 15
        %s220 = smul.addr %s219, 4
        %s221 = scalar_lea.vmem %s1, %s220
        %s222 = smul.u32 8, %s12
      $region40: #{basic_block_forward.9} parent=31 // pred_fallthru
        _
    $region32: #{basic_block_forward.9} parent=5 // pred_fallthru
      _
    %p223 = scmp.le.s32.totalorder 1, %s12
    %p224 = scmp.lt.s32.totalorder %s12, 3
    %p225 = pnand %p223, %p224
    %p226 = pneg %p225
    // Predicated region
    $region41: #{basic_block_forward.9} parent=5 // pred_check
      _
    $region42: #{basic_block_forward.9} parent=5 // pred_check_branch
      %228 = sbr.rel (%p225) target = $region44
    $region43: #{basic_block_forward.9} parent=5 // pred_region
      %s229 = ssub.s32 %s12, 1
      %s230 = smul.u32 8, %s17
      %p231 = scmp.lt.s32.totalorder %s230, 15
      %s232 = scalar_select %p231, %s230, 15
      %s233 = smul.addr %s232, 4
      %s234 = scalar_lea.vmem %s0, %s233
      %p235 = pneg %p38
      %p236 = pneg %p35
      %s237 = smul.u32 8, %s17
      %p238 = scmp.lt.s32.totalorder %s237, 15
      %s239 = scalar_select %p238, %s237, 15
      %s240 = smul.addr %s239, 4
      %s241 = scalar_lea.vmem %s1, %s240
      %p242 = pneg %p64
      %p243 = pneg %p61
      %p244 = pneg %p85
      %p245 = pneg %p82
      %p246 = pneg %p106
      %p247 = pneg %p103
      %p248 = pneg %p127
      %p249 = pneg %p124
      %p250 = pneg %p148
      %p251 = pneg %p145
      %p252 = pneg %p174
      %p253 = pneg %p171
      %s254 = smul.u32 8, %s17
      %p255 = scmp.lt.s32.totalorder %s254, 15
      %s256 = scalar_select %p255, %s254, 15
      %s257 = smul.addr %s256, 4
      %s258 = scalar_lea.vmem %s6, %s257
      %s259 = smul.u32 8, %s17
      %p260 = scmp.lt.s32.totalorder %s259, 15
      %s261 = scalar_select %p260, %s259, 15
      %s262 = smul.addr %s261, 4
      %s263 = scalar_lea.vmem %s0, %s262
      %s264 = smul.u32 8, %s17
      %s265 = smul.u32 8, %s17
      %p266 = scmp.lt.s32.totalorder %s265, 15
      %s267 = scalar_select %p266, %s265, 15
      %s268 = smul.addr %s267, 4
      %s269 = scalar_lea.vmem %s1, %s268
      %s270 = smul.u32 8, %s17
      %s271 = smul.u32 8, %s17
      %p272 = scmp.lt.s32.totalorder %s271, 15
      %s273 = scalar_select %p272, %s271, 15
      %s274 = smul.addr %s273, 4
      %s275 = scalar_lea.vmem %s6, %s274
      %s276 = smul.u32 8, %s17
      %v277 = vld [vmem:[%s263] sm:$0xf]
      %v278 = vld [vmem:[%s263 + $0x4] sm:$0xf]
      %v279 = vld [vmem:[%s263 + $0x8] sm:$0xf]
      %v280 = vld [vmem:[%s263 + $0xc] sm:$0xf]
      %v281 = vld [vmem:[%s263 + $0x10] sm:$0xf]
      %v282 = vld [vmem:[%s263 + $0x14] sm:$0xf]
      %v283 = vld [vmem:[%s263 + $0x18] sm:$0xf]
      %v284 = vld [vmem:[%s263 + $0x1c] sm:$0xf]
      %v285 = vld [vmem:[%s2] sm:$0x1]
      %v286 = vunpack.c.l.bf16 %v277
      %v287 = vunpack.c.l.bf16 %v278
      %v288 = vunpack.c.l.bf16 %v279
      %v289 = vunpack.c.l.bf16 %v280
      %v290 = vunpack.c.l.bf16 %v281
      %v291 = vunpack.c.l.bf16 %v282
      %v292 = vunpack.c.l.bf16 %v283
      %v293 = vunpack.c.l.bf16 %v284
      %v295 = vlaneseq
      %v296 = vshrl.u32 %v295, 7
      %v297 = vsub.s32 0, %v296
      %v298 = vrot.slane %v285, %v297
      %v300 = vmul.f32 %v286, %v298
      %v301 = vmul.f32 %v287, %v298
      %v302 = vmul.f32 %v288, %v298
      %v303 = vmul.f32 %v289, %v298
      %v304 = vmul.f32 %v290, %v298
      %v305 = vmul.f32 %v291, %v298
      %v306 = vmul.f32 %v292, %v298
      %v307 = vmul.f32 %v293, %v298
      %v308 = vld [vmem:[%s3] sm:$0x1]
      %v310 = vlaneseq
      %v311 = vshrl.u32 %v310, 7
      %v312 = vsub.s32 0, %v311
      %v313 = vrot.slane %v308, %v312
      %v315 = vadd.f32 %v300, %v313
      %v316 = vadd.f32 %v301, %v313
      %v317 = vadd.f32 %v302, %v313
      %v318 = vadd.f32 %v303, %v313
      %v319 = vadd.f32 %v304, %v313
      %v320 = vadd.f32 %v305, %v313
      %v321 = vadd.f32 %v306, %v313
      %v322 = vadd.f32 %v307, %v313
      %v323 = vld [vmem:[%s269] sm:$0xf]
      %v324 = vld [vmem:[%s269 + $0x4] sm:$0xf]
      %v325 = vld [vmem:[%s269 + $0x8] sm:$0xf]
      %v326 = vld [vmem:[%s269 + $0xc] sm:$0xf]
      %v327 = vld [vmem:[%s269 + $0x10] sm:$0xf]
      %v328 = vld [vmem:[%s269 + $0x14] sm:$0xf]
      %v329 = vld [vmem:[%s269 + $0x18] sm:$0xf]
      %v330 = vld [vmem:[%s269 + $0x1c] sm:$0xf]
      %v331 = vld [vmem:[%s4] sm:$0x1]
      %v332 = vunpack.c.l.bf16 %v323
      %v333 = vunpack.c.l.bf16 %v324
      %v334 = vunpack.c.l.bf16 %v325
      %v335 = vunpack.c.l.bf16 %v326
      %v336 = vunpack.c.l.bf16 %v327
      %v337 = vunpack.c.l.bf16 %v328
      %v338 = vunpack.c.l.bf16 %v329
      %v339 = vunpack.c.l.bf16 %v330
      %v341 = vlaneseq
      %v342 = vshrl.u32 %v341, 7
      %v343 = vsub.s32 0, %v342
      %v344 = vrot.slane %v331, %v343
      %v346 = vmul.f32 %v332, %v344
      %v347 = vmul.f32 %v333, %v344
      %v348 = vmul.f32 %v334, %v344
      %v349 = vmul.f32 %v335, %v344
      %v350 = vmul.f32 %v336, %v344
      %v351 = vmul.f32 %v337, %v344
      %v352 = vmul.f32 %v338, %v344
      %v353 = vmul.f32 %v339, %v344
      %v354 = vadd.f32 %v315, %v346
      %v355 = vadd.f32 %v316, %v347
      %v356 = vadd.f32 %v317, %v348
      %v357 = vadd.f32 %v318, %v349
      %v358 = vadd.f32 %v319, %v350
      %v359 = vadd.f32 %v320, %v351
      %v360 = vadd.f32 %v321, %v352
      %v361 = vadd.f32 %v322, %v353
      %v362 = vld [vmem:[%s5] sm:$0x1]
      %v364 = vlaneseq
      %v365 = vshrl.u32 %v364, 7
      %v366 = vsub.s32 0, %v365
      %v367 = vrot.slane %v362, %v366
      %v369 = vadd.f32 %v354, %v367
      %v370 = vadd.f32 %v355, %v367
      %v371 = vadd.f32 %v356, %v367
      %v372 = vadd.f32 %v357, %v367
      %v373 = vadd.f32 %v358, %v367
      %v374 = vadd.f32 %v359, %v367
      %v375 = vadd.f32 %v360, %v367
      %v376 = vadd.f32 %v361, %v367
      %v377 = vmax.f32 %v369, 0.0
      %v378 = vmax.f32 %v370, 0.0
      %v379 = vmax.f32 %v371, 0.0
      %v380 = vmax.f32 %v372, 0.0
      %v381 = vmax.f32 %v373, 0.0
      %v382 = vmax.f32 %v374, 0.0
      %v383 = vmax.f32 %v375, 0.0
      %v384 = vmax.f32 %v376, 0.0
      %v385 = vpack.c.bf16 %v378, %v377
      %v386 = vpack.c.bf16 %v380, %v379
      %v387 = vpack.c.bf16 %v382, %v381
      %v388 = vpack.c.bf16 %v384, %v383
      %v393 = vunpack.c.l.b16 %v385
      %v394 = vunpack.c.h.b16 %v385
      %v395 = vunpack.c.l.b16 %v386
      %v396 = vunpack.c.h.b16 %v386
      %v397 = vunpack.c.l.b16 %v387
      %v398 = vunpack.c.h.b16 %v387
      %v399 = vunpack.c.l.b16 %v388
      %v400 = vunpack.c.h.b16 %v388
      %v401 = vpack.c.b16 %v393, %v393
      %v402 = vpack.c.b16 %v394, %v394
      %v403 = vpack.c.b16 %v395, %v395
      %v404 = vpack.c.b16 %v396, %v396
      %v405 = vpack.c.b16 %v397, %v397
      %v406 = vpack.c.b16 %v398, %v398
      %v407 = vpack.c.b16 %v399, %v399
      %v408 = vpack.c.b16 %v400, %v400
      %417 = vst [vmem:[%s275] sm:$0xf] %v401
      %418 = vst [vmem:[%s275 + $0x4] sm:$0xf] %v402
      %419 = vst [vmem:[%s275 + $0x8] sm:$0xf] %v403
      %420 = vst [vmem:[%s275 + $0xc] sm:$0xf] %v404
      %421 = vst [vmem:[%s275 + $0x10] sm:$0xf] %v405
      %422 = vst [vmem:[%s275 + $0x14] sm:$0xf] %v406
      %423 = vst [vmem:[%s275 + $0x18] sm:$0xf] %v407
      %424 = vst [vmem:[%s275 + $0x1c] sm:$0xf] %v408
      %s425 = smul.u32 8, %s17
      %p426 = scmp.lt.s32.totalorder %s425, 15
      %s427 = scalar_select %p426, %s425, 15
      %s428 = smul.addr %s427, 4
      %s429 = scalar_lea.vmem %s6, %s428
      // Predicated region
      $region45: #{basic_block_forward.9} parent=43 // pred_check
        %p430 = pneg %p171
      $region46: #{basic_block_forward.9} parent=43 // pred_check_branch
        %432 = sbr.rel (%p430) target = $region48
      $region47: #{basic_block_forward.9} parent=43 // pred_region
        %s433 = smul.u32 8, %s17
      $region48: #{basic_block_forward.9} parent=43 // pred_fallthru
        _
    $region44: #{basic_block_forward.9} parent=5 // pred_fallthru
      _
    %p434 = scmp.le.s32.totalorder 2, %s12
    // Predicated region
    $region49: #{basic_block_forward.9} parent=5 // pred_check
      %p435 = pneg %p434
    $region50: #{basic_block_forward.9} parent=5 // pred_check_branch
      %437 = sbr.rel (%p435) target = $region52
    $region51: #{basic_block_forward.9} parent=5 // pred_region
      %s438 = ssub.s32 %s12, 2
      // Predicated region
      $region53: #{basic_block_forward.9} parent=51 // pred_check
        %p439 = pneg %p177
      $region54: #{basic_block_forward.9} parent=51 // pred_check_branch
        %441 = sbr.rel (%p439) target = $region56
      $region55: #{basic_block_forward.9} parent=51 // pred_region
        %s442 = smul.u32 8, %s18
        %p443 = scmp.lt.s32.totalorder %s442, 15
        %s444 = scalar_select %p443, %s442, 15
        %s445 = smul.addr %s444, 4
        %s446 = scalar_lea.vmem %s6, %s445
      $region56: #{basic_block_forward.9} parent=51 // pred_fallthru
        _
    $region52: #{basic_block_forward.9} parent=5 // pred_fallthru
      _
  $region6: #{basic_block_forward.9} parent=0 // loop_footer
    %s16 = sadd.s32 1, %s12
  $region7: #{basic_block_forward.9} parent=0 // loop_footer_branch
    %11 = sbr.rel target = $region3
  $region8: #{basic_block_forward.9} parent=0 // loop_exit
    _

// kernel: basic_block_forward.5
$region0: #{basic_block_forward.5}
  #allocation0 [shape = 'u32[]', space=smem, size = 0x4, offset = 0x4, fixed_abs, tag = 'smem constant byte address 0x4 - core index']
  #allocation1 [shape = 'u32[144,128]{1,0:T(1,128)}', space=vmem, size = 0x12000, scoped, tag = 'internal scratch']
  #allocation2 [shape = 'f32[32,128]{1,0:T(8,128)}', space=vmem, size = 0x4000, scoped, tag = 'scratch operand']
  %s0 = inlined_call_operand.vmem [shape: bf16[2,2,20,9,128], index: 0, kind: input, shape index: {}]
  %s1 = inlined_call_operand.vmem [shape: bf16[9,128,128], index: 1, kind: input, shape index: {}]
  %s2 = inlined_call_operand.vmem [shape: bf16[2,64,128], index: 2, kind: output, shape index: {0}]
  %s3 = inlined_call_operand.vmem [shape: f32[2,1,128], index: 3, kind: output, shape index: {1}]
  %s4 = inlined_call_operand.vmem [shape: f32[2,1,128], index: 4, kind: output, shape index: {2}]
  %5 = xla_tuple %s2, %s3, %s4
  %s6 = sld [smem:[#allocation0]]
  $region65: #{basic_block_forward.5} parent=0
    _
  %s8 = ssub.s32 1, %s6
  %s9 = scalar_select 0, %s8, %s6
  loop: start=0, step=1, limit=6
  $region2: #{basic_block_forward.5} parent=0 // loop_pre_header
    _
  $region3: #{basic_block_forward.5} parent=0 // loop_header
    %s11 = sphi 0, %s15
    %p12 = scmp.ge.s32.totalorder %s11, 6
    %s18 = sphi 0, %s37
    %s19 = sphi 0, %s33
    %s20 = sphi 0, %s29
    %s21 = sphi 0, %s18
    %s22 = sphi 0, %s19
    %s23 = sphi 0, %s20
    %s24 = sphi 0, %s21
    %s25 = sphi 0, %s22
    %s26 = sphi 0, %s23
    %s42 = sphi 0, %s44
    %s45 = sphi 0, %s42
    %s46 = sphi 0, %s45
    %s62 = sphi 0, %s46
    %s68 = sphi 0, %s70
    %s71 = sphi 0, %s68
    %s72 = sphi 0, %s71
    %s88 = sphi 0, %s72
    %s98 = sphi 0, %s100
    %s101 = sphi 0, %s98
    %s102 = sphi 0, %s101
    %s118 = sphi 0, %s102
    %s126 = sphi 0, %s128
    %s129 = sphi 0, %s126
    %s130 = sphi 0, %s129
    %s146 = sphi 0, %s130
    %s154 = sphi 0, %s156
    %s157 = sphi 0, %s154
    %s158 = sphi 0, %s157
    %s174 = sphi 0, %s158
  $region4: #{basic_block_forward.5} parent=0 // loop_header_branch
    %14 = sbr.rel (%p12) target = $region8
  $region5: #{basic_block_forward.5} parent=0 // loop_body
    %s16 = ssub.s32 %s11, 1
    %s17 = ssub.s32 %s11, 2
    %s27 = sadd.s32 1, %s20
    %p28 = scmp.ge.s32.totalorder %s27, 2
    %s29 = scalar_select %p28, 0, %s27
    %s30 = sadd.s32 1, %s19
    %s31 = scalar_select %p28, %s30, %s19
    %p32 = scmp.ge.s32.totalorder %s31, 2
    %s33 = scalar_select %p32, 0, %s31
    %s34 = sadd.s32 1, %s18
    %s35 = scalar_select %p32, %s34, %s18
    %p36 = scmp.ge.s32.totalorder %s35, 1
    %s37 = scalar_select %p36, 0, %s35
    %s38 = ssub.s32 %s19, %s33
    %s39 = ssub.s32 %s20, %s29
    %s40 = sor.u32 %s38, %s39
    %p41 = scmp.eq.s32.totalorder %s40, 0
    %s43 = sadd.s32 %s42, 1
    %s44 = scalar_select %p41, %s42, %s43
    %p47 = pneg %p41
    %p48 = scmp.eq.s32.totalorder %s11, 3
    %p49 = por %p47, %p48
    %p50 = scmp.ne.s32.totalorder %s42, %s45
    %p51 = scmp.eq.s32.totalorder %s11, 0
    %p52 = por %p50, %p51
    %p53 = scmp.ne.s32.totalorder %s42, %s45
    %p54 = scmp.eq.s32.totalorder %s16, 3
    %p55 = por %p53, %p54
    %p56 = scmp.ne.s32.totalorder %s45, %s46
    %p57 = scmp.eq.s32.totalorder %s16, 0
    %p58 = por %p56, %p57
    %p59 = scmp.ne.s32.totalorder %s45, %s46
    %p60 = scmp.eq.s32.totalorder %s17, 3
    %p61 = por %p59, %p60
    %p63 = scmp.ne.s32.totalorder %s46, %s62
    %p64 = scmp.eq.s32.totalorder %s17, 0
    %p65 = por %p63, %p64
    %s66 = ssub.s32 %s18, %s37
    %p67 = scmp.eq.s32.totalorder %s66, 0
    %s69 = sadd.s32 %s68, 1
    %s70 = scalar_select %p67, %s68, %s69
    %p73 = pneg %p67
    %p74 = scmp.eq.s32.totalorder %s11, 3
    %p75 = por %p73, %p74
    %p76 = scmp.ne.s32.totalorder %s68, %s71
    %p77 = scmp.eq.s32.totalorder %s11, 0
    %p78 = por %p76, %p77
    %p79 = scmp.ne.s32.totalorder %s68, %s71
    %p80 = scmp.eq.s32.totalorder %s16, 3
    %p81 = por %p79, %p80
    %p82 = scmp.ne.s32.totalorder %s71, %s72
    %p83 = scmp.eq.s32.totalorder %s16, 0
    %p84 = por %p82, %p83
    %p85 = scmp.ne.s32.totalorder %s71, %s72
    %p86 = scmp.eq.s32.totalorder %s17, 3
    %p87 = por %p85, %p86
    %p89 = scmp.ne.s32.totalorder %s72, %s88
    %p90 = scmp.eq.s32.totalorder %s17, 0
    %p91 = por %p89, %p90
    %s92 = ssub.s32 %s19, %s33
    %s93 = ssub.s32 %s20, %s29
    %s94 = sor.u32 %s92, %s93
    %s95 = ssub.s32 %s18, %s37
    %s96 = sor.u32 %s94, %s95
    %p97 = scmp.eq.s32.totalorder %s96, 0
    %s99 = sadd.s32 %s98, 1
    %s100 = scalar_select %p97, %s98, %s99
    %p103 = pneg %p97
    %p104 = scmp.eq.s32.totalorder %s11, 3
    %p105 = por %p103, %p104
    %p106 = scmp.ne.s32.totalorder %s98, %s101
    %p107 = scmp.eq.s32.totalorder %s11, 0
    %p108 = por %p106, %p107
    %p109 = scmp.ne.s32.totalorder %s98, %s101
    %p110 = scmp.eq.s32.totalorder %s16, 3
    %p111 = por %p109, %p110
    %p112 = scmp.ne.s32.totalorder %s101, %s102
    %p113 = scmp.eq.s32.totalorder %s16, 0
    %p114 = por %p112, %p113
    %p115 = scmp.ne.s32.totalorder %s101, %s102
    %p116 = scmp.eq.s32.totalorder %s17, 3
    %p117 = por %p115, %p116
    %p119 = scmp.ne.s32.totalorder %s102, %s118
    %p120 = scmp.eq.s32.totalorder %s17, 0
    %p121 = por %p119, %p120
    %s122 = ssub.s32 %s19, %s33
    %s123 = ssub.s32 %s18, %s37
    %s124 = sor.u32 %s122, %s123
    %p125 = scmp.eq.s32.totalorder %s124, 0
    %s127 = sadd.s32 %s126, 1
    %s128 = scalar_select %p125, %s126, %s127
    %p131 = pneg %p125
    %p132 = scmp.eq.s32.totalorder %s11, 3
    %p133 = por %p131, %p132
    %p134 = scmp.ne.s32.totalorder %s126, %s129
    %p135 = scmp.eq.s32.totalorder %s11, 0
    %p136 = por %p134, %p135
    %p137 = scmp.ne.s32.totalorder %s126, %s129
    %p138 = scmp.eq.s32.totalorder %s16, 3
    %p139 = por %p137, %p138
    %p140 = scmp.ne.s32.totalorder %s129, %s130
    %p141 = scmp.eq.s32.totalorder %s16, 0
    %p142 = por %p140, %p141
    %p143 = scmp.ne.s32.totalorder %s129, %s130
    %p144 = scmp.eq.s32.totalorder %s17, 3
    %p145 = por %p143, %p144
    %p147 = scmp.ne.s32.totalorder %s130, %s146
    %p148 = scmp.eq.s32.totalorder %s17, 0
    %p149 = por %p147, %p148
    %s150 = ssub.s32 %s19, %s33
    %s151 = ssub.s32 %s18, %s37
    %s152 = sor.u32 %s150, %s151
    %p153 = scmp.eq.s32.totalorder %s152, 0
    %s155 = sadd.s32 %s154, 1
    %s156 = scalar_select %p153, %s154, %s155
    %p159 = pneg %p153
    %p160 = scmp.eq.s32.totalorder %s11, 3
    %p161 = por %p159, %p160
    %p162 = scmp.ne.s32.totalorder %s154, %s157
    %p163 = scmp.eq.s32.totalorder %s11, 0
    %p164 = por %p162, %p163
    %p165 = scmp.ne.s32.totalorder %s154, %s157
    %p166 = scmp.eq.s32.totalorder %s16, 3
    %p167 = por %p165, %p166
    %p168 = scmp.ne.s32.totalorder %s157, %s158
    %p169 = scmp.eq.s32.totalorder %s16, 0
    %p170 = por %p168, %p169
    %p171 = scmp.ne.s32.totalorder %s157, %s158
    %p172 = scmp.eq.s32.totalorder %s17, 3
    %p173 = por %p171, %p172
    %p175 = scmp.ne.s32.totalorder %s158, %s174
    %p176 = scmp.eq.s32.totalorder %s17, 0
    %p177 = por %p175, %p176
    %p178 = scmp.le.s32.totalorder 1, %s11
    %p179 = scmp.lt.s32.totalorder %s11, 5
    %p180 = pnand %p178, %p179
    %p181 = pneg %p180
    // Predicated region
    $region9: #{basic_block_forward.5} parent=5 // pred_check
      _
    $region10: #{basic_block_forward.5} parent=5 // pred_check_branch
      %183 = sbr.rel (%p180) target = $region12
    $region11: #{basic_block_forward.5} parent=5 // pred_region
      %s184 = ssub.s32 %s11, 1
      // Predicated region
      $region13: #{basic_block_forward.5} parent=11 // pred_check
        %p185 = pneg %p84
      $region14: #{basic_block_forward.5} parent=11 // pred_check_branch
        %187 = sbr.rel (%p185) target = $region16
      $region15: #{basic_block_forward.5} parent=11 // pred_region
        %p188 = scmp.lt.s32.totalorder %s21, 0
        %s189 = scalar_select %p188, %s21, 0
        %s190 = smul.addr %s189, 4
        %s191 = scalar_lea.vmem %s1, %s190
      $region16: #{basic_block_forward.5} parent=11 // pred_fallthru
        _
    $region12: #{basic_block_forward.5} parent=5 // pred_fallthru
      _
    %p192 = scmp.lt.s32.totalorder %s11, 4
    // Predicated region
    $region17: #{basic_block_forward.5} parent=5 // pred_check
      %p193 = pneg %p192
    $region18: #{basic_block_forward.5} parent=5 // pred_check_branch
      %195 = sbr.rel (%p193) target = $region20
    $region19: #{basic_block_forward.5} parent=5 // pred_region
      // Predicated region
      $region21: #{basic_block_forward.5} parent=19 // pred_check
        %p196 = pneg %p52
      $region22: #{basic_block_forward.5} parent=19 // pred_check_branch
        %198 = sbr.rel (%p196) target = $region24
      $region23: #{basic_block_forward.5} parent=19 // pred_region
        %p199 = scmp.lt.s32.totalorder %s19, 1
        %s200 = scalar_select %p199, %s19, 1
        %p201 = scmp.lt.s32.totalorder %s20, 1
        %s202 = scalar_select %p201, %s20, 1
        %s203 = smul.addr %s202, 40
        %s204 = smul.addr %s200, 80
        %s205 = sadd.s32 %s203, %s204
        %s206 = smul.addr %s205, 4
        %s207 = scalar_lea.vmem %s0, %s206
      $region24: #{basic_block_forward.5} parent=19 // pred_fallthru
        _
    $region20: #{basic_block_forward.5} parent=5 // pred_fallthru
      _
    %p208 = scmp.le.s32.totalorder 1, %s11
    %p209 = scmp.lt.s32.totalorder %s11, 5
    %p210 = pnand %p208, %p209
    %p211 = pneg %p210
    // Predicated region
    $region25: #{basic_block_forward.5} parent=5 // pred_check
      _
    $region26: #{basic_block_forward.5} parent=5 // pred_check_branch
      %213 = sbr.rel (%p210) target = $region28
    $region27: #{basic_block_forward.5} parent=5 // pred_region
      %s214 = ssub.s32 %s11, 1
      %p215 = scmp.lt.s32.totalorder %s22, 1
      %s216 = scalar_select %p215, %s22, 1
      %p217 = scmp.lt.s32.totalorder %s23, 1
      %s218 = scalar_select %p217, %s23, 1
      %s219 = smul.addr %s218, 40
      %s220 = smul.addr %s216, 80
      %s221 = sadd.s32 %s219, %s220
      %s222 = smul.addr %s221, 4
      %s223 = scalar_lea.vmem %s0, %s222
      %p224 = pneg %p58
      %p225 = pneg %p55
      %p226 = scmp.lt.s32.totalorder %s21, 0
      %s227 = scalar_select %p226, %s21, 0
      %s228 = smul.addr %s227, 4
      %s229 = scalar_lea.vmem %s1, %s228
      %p230 = pneg %p84
      %p231 = pneg %p81
      %p232 = pneg %p114
      %p233 = pneg %p111
      %s234 = smul.u32 4, %s23
      %p235 = scmp.lt.s32.totalorder %s22, 1
      %s236 = scalar_select %p235, %s22, 1
      %p237 = scmp.lt.s32.totalorder %s234, 7
      %s238 = scalar_select %p237, %s234, 7
      %p239 = scmp.lt.s32.totalorder %s21, 0
      %s240 = scalar_select %p239, %s21, 0
      %s241 = sadd.s32 %s240, %s238
      %s242 = smul.addr %s236, 8
      %s243 = sadd.s32 %s241, %s242
      %s244 = smul.addr %s243, 4
      %s245 = scalar_lea.vmem %s2, %s244
      %p246 = pneg %p142
      %p247 = pneg %p139
      %p248 = scmp.lt.s32.totalorder %s22, 1
      %s249 = scalar_select %p248, %s22, 1
      %p250 = scmp.lt.s32.totalorder %s21, 0
      %s251 = scalar_select %p250, %s21, 0
      %s252 = sadd.s32 %s251, %s249
      %s253 = scalar_lea.vmem %s3, %s252
      %p254 = pneg %p170
      %p255 = pneg %p167
      %p256 = scmp.lt.s32.totalorder %s22, 1
      %s257 = scalar_select %p256, %s22, 1
      %p258 = scmp.lt.s32.totalorder %s21, 0
      %s259 = scalar_select %p258, %s21, 0
      %s260 = sadd.s32 %s259, %s257
      %s261 = scalar_lea.vmem %s4, %s260
      %p262 = scmp.lt.s32.totalorder %s22, 1
      %s263 = scalar_select %p262, %s22, 1
      %p264 = scmp.lt.s32.totalorder %s23, 1
      %s265 = scalar_select %p264, %s23, 1
      %s266 = smul.addr %s265, 40
      %s267 = smul.addr %s263, 80
      %s268 = sadd.s32 %s266, %s267
      %s269 = smul.addr %s268, 4
      %s270 = scalar_lea.vmem %s0, %s269
      %p271 = scmp.lt.s32.totalorder %s21, 0
      %s272 = scalar_select %p271, %s21, 0
      %s273 = smul.addr %s272, 4
      %s274 = scalar_lea.vmem %s1, %s273
      %s275 = smul.u32 4, %s23
      %p276 = scmp.lt.s32.totalorder %s22, 1
      %s277 = scalar_select %p276, %s22, 1
      %p278 = scmp.lt.s32.totalorder %s275, 7
      %s279 = scalar_select %p278, %s275, 7
      %p280 = scmp.lt.s32.totalorder %s21, 0
      %s281 = scalar_select %p280, %s21, 0
      %s282 = sadd.s32 %s281, %s279
      %s283 = smul.addr %s277, 8
      %s284 = sadd.s32 %s282, %s283
      %s285 = smul.addr %s284, 4
      %s286 = scalar_lea.vmem %s2, %s285
      %s287 = smul.u32 4, %s23
      %p288 = scmp.lt.s32.totalorder %s22, 1
      %s289 = scalar_select %p288, %s22, 1
      %p290 = scmp.lt.s32.totalorder %s21, 0
      %s291 = scalar_select %p290, %s21, 0
      %s292 = sadd.s32 %s291, %s289
      %s293 = scalar_lea.vmem %s3, %s292
      %p294 = scmp.lt.s32.totalorder %s22, 1
      %s295 = scalar_select %p294, %s22, 1
      %p296 = scmp.lt.s32.totalorder %s21, 0
      %s297 = scalar_select %p296, %s21, 0
      %s298 = sadd.s32 %s297, %s295
      %s299 = scalar_lea.vmem %s4, %s298
      %v301 = vld [vmem:[%s270] sm:$0xf]
      %v302 = vld [vmem:[%s270 + $0x8] sm:$0xf]
      %v303 = vld [vmem:[%s270 + $0x10] sm:$0xf]
      %v304 = vld [vmem:[%s270 + $0x18] sm:$0xf]
      %v305 = vld [vmem:[%s274] sm:$0xf]
      %v306 = vld [vmem:[%s274 + $0x4] sm:$0xf]
      %v307 = vld [vmem:[%s274 + $0x8] sm:$0xf]
      %v308 = vld [vmem:[%s274 + $0xc] sm:$0xf]
      %v309 = vld [vmem:[%s274 + $0x10] sm:$0xf]
      %v310 = vld [vmem:[%s274 + $0x14] sm:$0xf]
      %v311 = vld [vmem:[%s274 + $0x18] sm:$0xf]
      %v312 = vld [vmem:[%s274 + $0x1c] sm:$0xf]
      %v313 = vld [vmem:[%s274 + $0x20] sm:$0xf]
      %v314 = vld [vmem:[%s274 + $0x24] sm:$0xf]
      %v315 = vld [vmem:[%s274 + $0x28] sm:$0xf]
      %v316 = vld [vmem:[%s274 + $0x2c] sm:$0xf]
      %v317 = vld [vmem:[%s274 + $0x30] sm:$0xf]
      %v318 = vld [vmem:[%s274 + $0x34] sm:$0xf]
      %v319 = vld [vmem:[%s274 + $0x38] sm:$0xf]
      %v320 = vld [vmem:[%s274 + $0x3c] sm:$0xf]
      %v325 = vunpack.c.l.b16 %v301
      %v326 = vunpack.c.l.b16 %v302
      %v327 = vunpack.c.l.b16 %v303
      %v328 = vunpack.c.l.b16 %v304
      %v329 = vpack.c.b16 %v326, %v325
      %v330 = vpack.c.b16 %v328, %v327
      %v349 = vunpack.c.l.b16 %v305
      %v350 = vunpack.c.l.b16 %v306
      %v351 = vunpack.c.l.b16 %v307
      %v352 = vunpack.c.l.b16 %v308
      %v353 = vunpack.c.l.b16 %v309
      %v354 = vunpack.c.l.b16 %v310
      %v355 = vunpack.c.l.b16 %v311
      %v356 = vunpack.c.l.b16 %v312
      %v357 = vunpack.c.l.b16 %v313
      %v358 = vunpack.c.l.b16 %v314
      %v359 = vunpack.c.l.b16 %v315
      %v360 = vunpack.c.l.b16 %v316
      %v361 = vunpack.c.l.b16 %v317
      %v362 = vunpack.c.l.b16 %v318
      %v363 = vunpack.c.l.b16 %v319
      %v364 = vunpack.c.l.b16 %v320
      %v365 = vpack.c.b16 %v350, %v349
      %v366 = vpack.c.b16 %v352, %v351
      %v367 = vpack.c.b16 %v354, %v353
      %v368 = vpack.c.b16 %v356, %v355
      %v369 = vpack.c.b16 %v358, %v357
      %v370 = vpack.c.b16 %v360, %v359
      %v371 = vpack.c.b16 %v362, %v361
      %v372 = vpack.c.b16 %v364, %v363
      %381 = vmatprep.subr.bf16.mxu0 0
      %382 = vmatpush1.bf16.msra.mxu0 %v372
      %383 = vmatprep.subr.bf16.mxu0 0
      %384 = vmatpush1.bf16.msra.mxu0 %v371
      %385 = vmatprep.subr.bf16.mxu0 0
      %386 = vmatpush1.bf16.msra.mxu0 %v370
      %387 = vmatprep.subr.bf16.mxu0 0
      %388 = vmatpush1.bf16.msra.mxu0 %v369
      %389 = vmatprep.subr.bf16.mxu0 0
      %390 = vmatpush1.bf16.msra.mxu0 %v368
      %391 = vmatprep.subr.bf16.mxu0 0
      %392 = vmatpush1.bf16.msra.mxu0 %v367
      %393 = vmatprep.subr.bf16.mxu0 0
      %394 = vmatpush1.bf16.msra.mxu0 %v366
      %395 = vmatprep.subr.bf16.mxu0 0
      %396 = vmatpush1.bf16.msra.mxu0 %v365
      %397 = vmatprep.subr.bf16.mxu0 0
      %398 = vmatpush2.bf16.msra.mxu0 0
      %399 = vmatprep.subr.bf16.mxu0 0
      %400 = vmatpush2.bf16.msra.mxu0 0
      %401 = vmatprep.subr.bf16.mxu0 0
      %402 = vmatpush2.bf16.msra.mxu0 0
      %403 = vmatprep.subr.bf16.mxu0 0
      %404 = vmatpush2.bf16.msra.mxu0 0
      %405 = vmatprep.subr.bf16.mxu0 0
      %406 = vmatpush2.bf16.msra.mxu0 0
      %407 = vmatprep.subr.bf16.mxu0 0
      %408 = vmatpush2.bf16.msra.mxu0 0
      %409 = vmatprep.subr.bf16.mxu0 0
      %410 = vmatpush2.bf16.msra.mxu0 0
      %411 = vmatprep.subr.bf16.mxu0 0
      %412 = vmatpush2.bf16.msra.mxu0 0
      %413 = vmatprep.mubr.bf16.mxu0 0
      %414 = vmatmul.mubr.bf16.gmra.mxu0 %v329
      %v415 = vpop.f32.mrf.mxu0
      %v416 = vadd.f32 0.0, %v415
      %v417 = vpop.f32.mrf.mxu0
      %v418 = vpop.f32.mrf.mxu0
      %v419 = vadd.f32 0.0, %v418
      %v420 = vpop.f32.mrf.mxu0
      %421 = vmatprep.mubr.bf16.mxu0 0
      %422 = vmatmul.mubr.bf16.gmra.mxu0 %v330
      %v423 = vpop.f32.mrf.mxu0
      %v424 = vadd.f32 0.0, %v423
      %v425 = vpop.f32.mrf.mxu0
      %v426 = vpop.f32.mrf.mxu0
      %v427 = vadd.f32 0.0, %v426
      %v428 = vpop.f32.mrf.mxu0
      %429 = vdwg.mxu0
      %430 = vst [vmem:[#allocation2] sm:$0xff] %v416
      %431 = vst [vmem:[#allocation2 + $0x8] sm:$0xff] %v419
      %432 = vst [vmem:[#allocation2 + $0x10] sm:$0xff] %v424
      %433 = vst [vmem:[#allocation2 + $0x18] sm:$0xff] %v427
      %s434 = scalar_lea.vmem %s270, 40
      %v435 = vld [vmem:[%s434] sm:$0xf]
      %v436 = vld [vmem:[%s434 + $0x8] sm:$0xf]
      %v437 = vld [vmem:[%s434 + $0x10] sm:$0xf]
      %v438 = vld [vmem:[%s434 + $0x18] sm:$0xf]
      %s439 = scalar_lea.vmem %s274, 64
      %v440 = vld [vmem:[%s439] sm:$0xf]
      %v441 = vld [vmem:[%s439 + $0x4] sm:$0xf]
      %v442 = vld [vmem:[%s439 + $0x8] sm:$0xf]
      %v443 = vld [vmem:[%s439 + $0xc] sm:$0xf]
      %v444 = vld [vmem:[%s439 + $0x10] sm:$0xf]
      %v445 = vld [vmem:[%s439 + $0x14] sm:$0xf]
      %v446 = vld [vmem:[%s439 + $0x18] sm:$0xf]
      %v447 = vld [vmem:[%s439 + $0x1c] sm:$0xf]
      %v448 = vld [vmem:[%s439 + $0x20] sm:$0xf]
      %v449 = vld [vmem:[%s439 + $0x24] sm:$0xf]
      %v450 = vld [vmem:[%s439 + $0x28] sm:$0xf]
      %v451 = vld [vmem:[%s439 + $0x2c] sm:$0xf]
      %v452 = vld [vmem:[%s439 + $0x30] sm:$0xf]
      %v453 = vld [vmem:[%s439 + $0x34] sm:$0xf]
      %v454 = vld [vmem:[%s439 + $0x38] sm:$0xf]
      %v455 = vld [vmem:[%s439 + $0x3c] sm:$0xf]
      %v460 = vunpack.c.l.b16 %v435
      %v461 = vunpack.c.l.b16 %v436
      %v462 = vunpack.c.l.b16 %v437
      %v463 = vunpack.c.l.b16 %v438
      %v464 = vpack.c.b16 %v461, %v460
      %v465 = vpack.c.b16 %v463, %v462
      %v484 = vunpack.c.l.b16 %v440
      %v485 = vunpack.c.l.b16 %v441
      %v486 = vunpack.c.l.b16 %v442
      %v487 = vunpack.c.l.b16 %v443
      %v488 = vunpack.c.l.b16 %v444
      %v489 = vunpack.c.l.b16 %v445
      %v490 = vunpack.c.l.b16 %v446
      %v491 = vunpack.c.l.b16 %v447
      %v492 = vunpack.c.l.b16 %v448
      %v493 = vunpack.c.l.b16 %v449
      %v494 = vunpack.c.l.b16 %v450
      %v495 = vunpack.c.l.b16 %v451
      %v496 = vunpack.c.l.b16 %v452
      %v497 = vunpack.c.l.b16 %v453
      %v498 = vunpack.c.l.b16 %v454
      %v499 = vunpack.c.l.b16 %v455
      %v500 = vpack.c.b16 %v485, %v484
      %v501 = vpack.c.b16 %v487, %v486
      %v502 = vpack.c.b16 %v489, %v488
      %v503 = vpack.c.b16 %v491, %v490
      %v504 = vpack.c.b16 %v493, %v492
      %v505 = vpack.c.b16 %v495, %v494
      %v506 = vpack.c.b16 %v497, %v496
      %v507 = vpack.c.b16 %v499, %v498
      %516 = vmatprep.subr.bf16.mxu0 0
      %517 = vmatpush1.bf16.msra.mxu0 %v507
      %518 = vmatprep.subr.bf16.mxu0 0
      %519 = vmatpush1.bf16.msra.mxu0 %v506
      %520 = vmatprep.subr.bf16.mxu0 0
      %521 = vmatpush1.bf16.msra.mxu0 %v505
      %522 = vmatprep.subr.bf16.mxu0 0
      %523 = vmatpush1.bf16.msra.mxu0 %v504
      %524 = vmatprep.subr.bf16.mxu0 0
      %525 = vmatpush1.bf16.msra.mxu0 %v503
      %526 = vmatprep.subr.bf16.mxu0 0
      %527 = vmatpush1.bf16.msra.mxu0 %v502
      %528 = vmatprep.subr.bf16.mxu0 0
      %529 = vmatpush1.bf16.msra.mxu0 %v501
      %530 = vmatprep.subr.bf16.mxu0 0
      %531 = vmatpush1.bf16.msra.mxu0 %v500
      %532 = vmatprep.subr.bf16.mxu0 0
      %533 = vmatpush2.bf16.msra.mxu0 0
      %534 = vmatprep.subr.bf16.mxu0 0
      %535 = vmatpush2.bf16.msra.mxu0 0
      %536 = vmatprep.subr.bf16.mxu0 0
      %537 = vmatpush2.bf16.msra.mxu0 0
      %538 = vmatprep.subr.bf16.mxu0 0
      %539 = vmatpush2.bf16.msra.mxu0 0
      %540 = vmatprep.subr.bf16.mxu0 0
      %541 = vmatpush2.bf16.msra.mxu0 0
      %542 = vmatprep.subr.bf16.mxu0 0
      %543 = vmatpush2.bf16.msra.mxu0 0
      %544 = vmatprep.subr.bf16.mxu0 0
      %545 = vmatpush2.bf16.msra.mxu0 0
      %546 = vmatprep.subr.bf16.mxu0 0
      %547 = vmatpush2.bf16.msra.mxu0 0
      %548 = vmatprep.mubr.bf16.mxu0 0
      %549 = vmatmul.mubr.bf16.gmra.mxu0 %v464
      %v550 = vpop.f32.mrf.mxu0
      %v551 = vadd.f32 0.0, %v550
      %v552 = vpop.f32.mrf.mxu0
      %v553 = vpop.f32.mrf.mxu0
      %v554 = vadd.f32 0.0, %v553
      %v555 = vpop.f32.mrf.mxu0
      %556 = vmatprep.mubr.bf16.mxu0 0
      %557 = vmatmul.mubr.bf16.gmra.mxu0 %v465
      %v558 = vpop.f32.mrf.mxu0
      %v559 = vadd.f32 0.0, %v558
      %v560 = vpop.f32.mrf.mxu0
      %v561 = vpop.f32.mrf.mxu0
      %v562 = vadd.f32 0.0, %v561
      %v563 = vpop.f32.mrf.mxu0
      %564 = vdwg.mxu0
      %v565 = vld [vmem:[#allocation2] sm:$0xff]
      %v566 = vld [vmem:[#allocation2 + $0x8] sm:$0xff]
      %v567 = vld [vmem:[#allocation2 + $0x10] sm:$0xff]
      %v568 = vld [vmem:[#allocation2 + $0x18] sm:$0xff]
      %v569 = vadd.f32 %v565, %v551
      %v570 = vadd.f32 %v566, %v554
      %v571 = vadd.f32 %v567, %v559
      %v572 = vadd.f32 %v568, %v562
      %573 = vst [vmem:[#allocation2] sm:$0xff] %v569
      %574 = vst [vmem:[#allocation2 + $0x8] sm:$0xff] %v570
      %575 = vst [vmem:[#allocation2 + $0x10] sm:$0xff] %v571
      %576 = vst [vmem:[#allocation2 + $0x18] sm:$0xff] %v572
      %v577 = vld [vmem:[%s270] sm:$0xf]
      %v578 = vld [vmem:[%s270 + $0x4] sm:$0x1]
      %v579 = vld [vmem:[%s270 + $0x8] sm:$0xf]
      %v580 = vld [vmem:[%s270 + $0xc] sm:$0x1]
      %v581 = vld [vmem:[%s270 + $0x10] sm:$0xf]
      %v582 = vld [vmem:[%s270 + $0x14] sm:$0x1]
      %v583 = vld [vmem:[%s270 + $0x18] sm:$0xf]
      %v584 = vld [vmem:[%s270 + $0x1c] sm:$0x1]
      %vm585 = vsmask.f32 3328
      %vm586 = vsmask.f32 7440
      %vm587 = vmor %vm585, %vm586
      %v589 = vshrl.u32 %v577, 16
      %v591 = vrot.slane %v589, 4
      %v592 = vshll.u32 %v577, 16
      %v594 = vrot.slane %v592, 5
      %v595 = vor.u32 %v591, %v594
      %v596 = vrot.slane %v595, 4
      %v598 = vshll.u32 %v578, 16
      %v600 = vrot.slane %v598, 5
      %v601 = vsel %vm587, %v596, %v600
      %v603 = vshrl.u32 %v579, 16
      %v605 = vrot.slane %v603, 4
      %v606 = vshll.u32 %v579, 16
      %v608 = vrot.slane %v606, 5
      %v609 = vor.u32 %v605, %v608
      %v610 = vrot.slane %v609, 4
      %v612 = vshll.u32 %v580, 16
      %v614 = vrot.slane %v612, 5
      %v615 = vsel %vm587, %v610, %v614
      %v617 = vshrl.u32 %v581, 16
      %v619 = vrot.slane %v617, 4
      %v620 = vshll.u32 %v581, 16
      %v622 = vrot.slane %v620, 5
      %v623 = vor.u32 %v619, %v622
      %v624 = vrot.slane %v623, 4
      %v626 = vshll.u32 %v582, 16
      %v628 = vrot.slane %v626, 5
      %v629 = vsel %vm587, %v624, %v628
      %v631 = vshrl.u32 %v583, 16
      %v633 = vrot.slane %v631, 4
      %v634 = vshll.u32 %v583, 16
      %v636 = vrot.slane %v634, 5
      %v637 = vor.u32 %v633, %v636
      %v638 = vrot.slane %v637, 4
      %v640 = vshll.u32 %v584, 16
      %v642 = vrot.slane %v640, 5
      %v643 = vsel %vm587, %v638, %v642
      %s644 = scalar_lea.vmem %s274, 128
      %v645 = vld [vmem:[%s644] sm:$0xf]
      %v646 = vld [vmem:[%s644 + $0x4] sm:$0xf]
      %v647 = vld [vmem:[%s644 + $0x8] sm:$0xf]
      %v648 = vld [vmem:[%s644 + $0xc] sm:$0xf]
      %v649 = vld [vmem:[%s644 + $0x10] sm:$0xf]
      %v650 = vld [vmem:[%s644 + $0x14] sm:$0xf]
      %v651 = vld [vmem:[%s644 + $0x18] sm:$0xf]
      %v652 = vld [vmem:[%s644 + $0x1c] sm:$0xf]
      %v653 = vld [vmem:[%s644 + $0x20] sm:$0xf]
      %v654 = vld [vmem:[%s644 + $0x24] sm:$0xf]
      %v655 = vld [vmem:[%s644 + $0x28] sm:$0xf]
      %v656 = vld [vmem:[%s644 + $0x2c] sm:$0xf]
      %v657 = vld [vmem:[%s644 + $0x30] sm:$0xf]
      %v658 = vld [vmem:[%s644 + $0x34] sm:$0xf]
      %v659 = vld [vmem:[%s644 + $0x38] sm:$0xf]
      %v660 = vld [vmem:[%s644 + $0x3c] sm:$0xf]
      %v661 = vunpack.c.l.b16 %v601
      %v662 = vunpack.c.l.b16 %v615
      %v663 = vunpack.c.l.b16 %v629
      %v664 = vunpack.c.l.b16 %v643
      %v665 = vpack.c.b16 %v662, %v661
      %v666 = vpack.c.b16 %v664, %v663
      %v685 = vunpack.c.l.b16 %v645
      %v686 = vunpack.c.l.b16 %v646
      %v687 = vunpack.c.l.b16 %v647
      %v688 = vunpack.c.l.b16 %v648
      %v689 = vunpack.c.l.b16 %v649
      %v690 = vunpack.c.l.b16 %v650
      %v691 = vunpack.c.l.b16 %v651
      %v692 = vunpack.c.l.b16 %v652
      %v693 = vunpack.c.l.b16 %v653
      %v694 = vunpack.c.l.b16 %v654
      %v695 = vunpack.c.l.b16 %v655
      %v696 = vunpack.c.l.b16 %v656
      %v697 = vunpack.c.l.b16 %v657
      %v698 = vunpack.c.l.b16 %v658
      %v699 = vunpack.c.l.b16 %v659
      %v700 = vunpack.c.l.b16 %v660
      %v701 = vpack.c.b16 %v686, %v685
      %v702 = vpack.c.b16 %v688, %v687
      %v703 = vpack.c.b16 %v690, %v689
      %v704 = vpack.c.b16 %v692, %v691
      %v705 = vpack.c.b16 %v694, %v693
      %v706 = vpack.c.b16 %v696, %v695
      %v707 = vpack.c.b16 %v698, %v697
      %v708 = vpack.c.b16 %v700, %v699
      %717 = vmatprep.subr.bf16.mxu0 0
      %718 = vmatpush1.bf16.msra.mxu0 %v708
      %719 = vmatprep.subr.bf16.mxu0 0
      %720 = vmatpush1.bf16.msra.mxu0 %v707
      %721 = vmatprep.subr.bf16.mxu0 0
      %722 = vmatpush1.bf16.msra.mxu0 %v706
      %723 = vmatprep.subr.bf16.mxu0 0
      %724 = vmatpush1.bf16.msra.mxu0 %v705
      %725 = vmatprep.subr.bf16.mxu0 0
      %726 = vmatpush1.bf16.msra.mxu0 %v704
      %727 = vmatprep.subr.bf16.mxu0 0
      %728 = vmatpush1.bf16.msra.mxu0 %v703
      %729 = vmatprep.subr.bf16.mxu0 0
      %730 = vmatpush1.bf16.msra.mxu0 %v702
      %731 = vmatprep.subr.bf16.mxu0 0
      %732 = vmatpush1.bf16.msra.mxu0 %v701
      %733 = vmatprep.subr.bf16.mxu0 0
      %734 = vmatpush2.bf16.msra.mxu0 0
      %735 = vmatprep.subr.bf16.mxu0 0
      %736 = vmatpush2.bf16.msra.mxu0 0
      %737 = vmatprep.subr.bf16.mxu0 0
      %738 = vmatpush2.bf16.msra.mxu0 0
      %739 = vmatprep.subr.bf16.mxu0 0
      %740 = vmatpush2.bf16.msra.mxu0 0
      %741 = vmatprep.subr.bf16.mxu0 0
      %742 = vmatpush2.bf16.msra.mxu0 0
      %743 = vmatprep.subr.bf16.mxu0 0
      %744 = vmatpush2.bf16.msra.mxu0 0
      %745 = vmatprep.subr.bf16.mxu0 0
      %746 = vmatpush2.bf16.msra.mxu0 0
      %747 = vmatprep.subr.bf16.mxu0 0
      %748 = vmatpush2.bf16.msra.mxu0 0
      %749 = vmatprep.mubr.bf16.mxu0 0
      %750 = vmatmul.mubr.bf16.gmra.mxu0 %v665
      %v751 = vpop.f32.mrf.mxu0
      %v752 = vadd.f32 0.0, %v751
      %v753 = vpop.f32.mrf.mxu0
      %v754 = vpop.f32.mrf.mxu0
      %v755 = vadd.f32 0.0, %v754
      %v756 = vpop.f32.mrf.mxu0
      %757 = vmatprep.mubr.bf16.mxu0 0
      %758 = vmatmul.mubr.bf16.gmra.mxu0 %v666
      %v759 = vpop.f32.mrf.mxu0
      %v760 = vadd.f32 0.0, %v759
      %v761 = vpop.f32.mrf.mxu0
      %v762 = vpop.f32.mrf.mxu0
      %v763 = vadd.f32 0.0, %v762
      %v764 = vpop.f32.mrf.mxu0
      %765 = vdwg.mxu0
      %v766 = vld [vmem:[#allocation2] sm:$0xff]
      %v767 = vld [vmem:[#allocation2 + $0x8] sm:$0xff]
      %v768 = vld [vmem:[#allocation2 + $0x10] sm:$0xff]
      %v769 = vld [vmem:[#allocation2 + $0x18] sm:$0xff]
      %v770 = vadd.f32 %v766, %v752
      %v771 = vadd.f32 %v767, %v755
      %v772 = vadd.f32 %v768, %v760
      %v773 = vadd.f32 %v769, %v763
      %774 = vst [vmem:[#allocation2] sm:$0xff] %v770
      %775 = vst [vmem:[#allocation2 + $0x8] sm:$0xff] %v771
      %776 = vst [vmem:[#allocation2 + $0x10] sm:$0xff] %v772
      %777 = vst [vmem:[#allocation2 + $0x18] sm:$0xff] %v773
      %s778 = scalar_lea.vmem %s270, 80
      %v779 = vld [vmem:[%s778] sm:$0xf]
      %v780 = vld [vmem:[%s778 + $0x8] sm:$0xf]
      %v781 = vld [vmem:[%s778 + $0x10] sm:$0xf]
      %v782 = vld [vmem:[%s778 + $0x18] sm:$0xf]
      %s783 = scalar_lea.vmem %s274, 192
      %v784 = vld [vmem:[%s783] sm:$0xf]
      %v785 = vld [vmem:[%s783 + $0x4] sm:$0xf]
      %v786 = vld [vmem:[%s783 + $0x8] sm:$0xf]
      %v787 = vld [vmem:[%s783 + $0xc] sm:$0xf]
      %v788 = vld [vmem:[%s783 + $0x10] sm:$0xf]
      %v789 = vld [vmem:[%s783 + $0x14] sm:$0xf]
      %v790 = vld [vmem:[%s783 + $0x18] sm:$0xf]
      %v791 = vld [vmem:[%s783 + $0x1c] sm:$0xf]
      %v792 = vld [vmem:[%s783 + $0x20] sm:$0xf]
      %v793 = vld [vmem:[%s783 + $0x24] sm:$0xf]
      %v794 = vld [vmem:[%s783 + $0x28] sm:$0xf]
      %v795 = vld [vmem:[%s783 + $0x2c] sm:$0xf]
      %v796 = vld [vmem:[%s783 + $0x30] sm:$0xf]
      %v797 = vld [vmem:[%s783 + $0x34] sm:$0xf]
      %v798 = vld [vmem:[%s783 + $0x38] sm:$0xf]
      %v799 = vld [vmem:[%s783 + $0x3c] sm:$0xf]
      %v804 = vunpack.c.l.b16 %v779
      %v805 = vunpack.c.l.b16 %v780
      %v806 = vunpack.c.l.b16 %v781
      %v807 = vunpack.c.l.b16 %v782
      %v808 = vpack.c.b16 %v805, %v804
      %v809 = vpack.c.b16 %v807, %v806
      %v828 = vunpack.c.l.b16 %v784
      %v829 = vunpack.c.l.b16 %v785
      %v830 = vunpack.c.l.b16 %v786
      %v831 = vunpack.c.l.b16 %v787
      %v832 = vunpack.c.l.b16 %v788
      %v833 = vunpack.c.l.b16 %v789
      %v834 = vunpack.c.l.b16 %v790
      %v835 = vunpack.c.l.b16 %v791
      %v836 = vunpack.c.l.b16 %v792
      %v837 = vunpack.c.l.b16 %v793
      %v838 = vunpack.c.l.b16 %v794
      %v839 = vunpack.c.l.b16 %v795
      %v840 = vunpack.c.l.b16 %v796
      %v841 = vunpack.c.l.b16 %v797
      %v842 = vunpack.c.l.b16 %v798
      %v843 = vunpack.c.l.b16 %v799
      %v844 = vpack.c.b16 %v829, %v828
      %v845 = vpack.c.b16 %v831, %v830
      %v846 = vpack.c.b16 %v833, %v832
      %v847 = vpack.c.b16 %v835, %v834
      %v848 = vpack.c.b16 %v837, %v836
      %v849 = vpack.c.b16 %v839, %v838
      %v850 = vpack.c.b16 %v841, %v840
      %v851 = vpack.c.b16 %v843, %v842
      %860 = vmatprep.subr.bf16.mxu0 0
      %861 = vmatpush1.bf16.msra.mxu0 %v851
      %862 = vmatprep.subr.bf16.mxu0 0
      %863 = vmatpush1.bf16.msra.mxu0 %v850
      %864 = vmatprep.subr.bf16.mxu0 0
      %865 = vmatpush1.bf16.msra.mxu0 %v849
      %866 = vmatprep.subr.bf16.mxu0 0
      %867 = vmatpush1.bf16.msra.mxu0 %v848
      %868 = vmatprep.subr.bf16.mxu0 0
      %869 = vmatpush1.bf16.msra.mxu0 %v847
      %870 = vmatprep.subr.bf16.mxu0 0
      %871 = vmatpush1.bf16.msra.mxu0 %v846
      %872 = vmatprep.subr.bf16.mxu0 0
      %873 = vmatpush1.bf16.msra.mxu0 %v845
      %874 = vmatprep.subr.bf16.mxu0 0
      %875 = vmatpush1.bf16.msra.mxu0 %v844
      %876 = vmatprep.subr.bf16.mxu0 0
      %877 = vmatpush2.bf16.msra.mxu0 0
      %878 = vmatprep.subr.bf16.mxu0 0
      %879 = vmatpush2.bf16.msra.mxu0 0
      %880 = vmatprep.subr.bf16.mxu0 0
      %881 = vmatpush2.bf16.msra.mxu0 0
      %882 = vmatprep.subr.bf16.mxu0 0
      %883 = vmatpush2.bf16.msra.mxu0 0
      %884 = vmatprep.subr.bf16.mxu0 0
      %885 = vmatpush2.bf16.msra.mxu0 0
      %886 = vmatprep.subr.bf16.mxu0 0
      %887 = vmatpush2.bf16.msra.mxu0 0
      %888 = vmatprep.subr.bf16.mxu0 0
      %889 = vmatpush2.bf16.msra.mxu0 0
      %890 = vmatprep.subr.bf16.mxu0 0
      %891 = vmatpush2.bf16.msra.mxu0 0
      %892 = vmatprep.mubr.bf16.mxu0 0
      %893 = vmatmul.mubr.bf16.gmra.mxu0 %v808
      %v894 = vpop.f32.mrf.mxu0
      %v895 = vadd.f32 0.0, %v894
      %v896 = vpop.f32.mrf.mxu0
      %v897 = vpop.f32.mrf.mxu0
      %v898 = vadd.f32 0.0, %v897
      %v899 = vpop.f32.mrf.mxu0
      %900 = vmatprep.mubr.bf16.mxu0 0
      %901 = vmatmul.mubr.bf16.gmra.mxu0 %v809
      %v902 = vpop.f32.mrf.mxu0
      %v903 = vadd.f32 0.0, %v902
      %v904 = vpop.f32.mrf.mxu0
      %v905 = vpop.f32.mrf.mxu0
      %v906 = vadd.f32 0.0, %v905
      %v907 = vpop.f32.mrf.mxu0
      %908 = vdwg.mxu0
      %v909 = vld [vmem:[#allocation2] sm:$0xff]
      %v910 = vld [vmem:[#allocation2 + $0x8] sm:$0xff]
      %v911 = vld [vmem:[#allocation2 + $0x10] sm:$0xff]
      %v912 = vld [vmem:[#allocation2 + $0x18] sm:$0xff]
      %v913 = vadd.f32 %v909, %v895
      %v914 = vadd.f32 %v910, %v898
      %v915 = vadd.f32 %v911, %v903
      %v916 = vadd.f32 %v912, %v906
      %917 = vst [vmem:[#allocation2] sm:$0xff] %v913
      %918 = vst [vmem:[#allocation2 + $0x8] sm:$0xff] %v914
      %919 = vst [vmem:[#allocation2 + $0x10] sm:$0xff] %v915
      %920 = vst [vmem:[#allocation2 + $0x18] sm:$0xff] %v916
      %s921 = scalar_lea.vmem %s270, 120
      %v922 = vld [vmem:[%s921] sm:$0xf]
      %v923 = vld [vmem:[%s921 + $0x8] sm:$0xf]
      %v924 = vld [vmem:[%s921 + $0x10] sm:$0xf]
      %v925 = vld [vmem:[%s921 + $0x18] sm:$0xf]
      %s926 = scalar_lea.vmem %s274, 256
      %v927 = vld [vmem:[%s926] sm:$0xf]
      %v928 = vld [vmem:[%s926 + $0x4] sm:$0xf]
      %v929 = vld [vmem:[%s926 + $0x8] sm:$0xf]
      %v930 = vld [vmem:[%s926 + $0xc] sm:$0xf]
      %v931 = vld [vmem:[%s926 + $0x10] sm:$0xf]
      %v932 = vld [vmem:[%s926 + $0x14] sm:$0xf]
      %v933 = vld [vmem:[%s926 + $0x18] sm:$0xf]
      %v934 = vld [vmem:[%s926 + $0x1c] sm:$0xf]
      %v935 = vld [vmem:[%s926 + $0x20] sm:$0xf]
      %v936 = vld [vmem:[%s926 + $0x24] sm:$0xf]
      %v937 = vld [vmem:[%s926 + $0x28] sm:$0xf]
      %v938 = vld [vmem:[%s926 + $0x2c] sm:$0xf]
      %v939 = vld [vmem:[%s926 + $0x30] sm:$0xf]
      %v940 = vld [vmem:[%s926 + $0x34] sm:$0xf]
      %v941 = vld [vmem:[%s926 + $0x38] sm:$0xf]
      %v942 = vld [vmem:[%s926 + $0x3c] sm:$0xf]
      %v947 = vunpack.c.l.b16 %v922
      %v948 = vunpack.c.l.b16 %v923
      %v949 = vunpack.c.l.b16 %v924
      %v950 = vunpack.c.l.b16 %v925
      %v951 = vpack.c.b16 %v948, %v947
      %v952 = vpack.c.b16 %v950, %v949
      %v971 = vunpack.c.l.b16 %v927
      %v972 = vunpack.c.l.b16 %v928
      %v973 = vunpack.c.l.b16 %v929
      %v974 = vunpack.c.l.b16 %v930
      %v975 = vunpack.c.l.b16 %v931
      %v976 = vunpack.c.l.b16 %v932
      %v977 = vunpack.c.l.b16 %v933
      %v978 = vunpack.c.l.b16 %v934
      %v979 = vunpack.c.l.b16 %v935
      %v980 = vunpack.c.l.b16 %v936
      %v981 = vunpack.c.l.b16 %v937
      %v982 = vunpack.c.l.b16 %v938
      %v983 = vunpack.c.l.b16 %v939
      %v984 = vunpack.c.l.b16 %v940
      %v985 = vunpack.c.l.b16 %v941
      %v986 = vunpack.c.l.b16 %v942
      %v987 = vpack.c.b16 %v972, %v971
      %v988 = vpack.c.b16 %v974, %v973
      %v989 = vpack.c.b16 %v976, %v975
      %v990 = vpack.c.b16 %v978, %v977
      %v991 = vpack.c.b16 %v980, %v979
      %v992 = vpack.c.b16 %v982, %v981
      %v993 = vpack.c.b16 %v984, %v983
      %v994 = vpack.c.b16 %v986, %v985
      %1003 = vmatprep.subr.bf16.mxu0 0
      %1004 = vmatpush1.bf16.msra.mxu0 %v994
      %1005 = vmatprep.subr.bf16.mxu0 0
      %1006 = vmatpush1.bf16.msra.mxu0 %v993
      %1007 = vmatprep.subr.bf16.mxu0 0
      %1008 = vmatpush1.bf16.msra.mxu0 %v992
      %1009 = vmatprep.subr.bf16.mxu0 0
      %1010 = vmatpush1.bf16.msra.mxu0 %v991
      %1011 = vmatprep.subr.bf16.mxu0 0
      %1012 = vmatpush1.bf16.msra.mxu0 %v990
      %1013 = vmatprep.subr.bf16.mxu0 0
      %1014 = vmatpush1.bf16.msra.mxu0 %v989
      %1015 = vmatprep.subr.bf16.mxu0 0
      %1016 = vmatpush1.bf16.msra.mxu0 %v988
      %1017 = vmatprep.subr.bf16.mxu0 0
      %1018 = vmatpush1.bf16.msra.mxu0 %v987
      %1019 = vmatprep.subr.bf16.mxu0 0
      %1020 = vmatpush2.bf16.msra.mxu0 0
      %1021 = vmatprep.subr.bf16.mxu0 0
      %1022 = vmatpush2.bf16.msra.mxu0 0
      %1023 = vmatprep.subr.bf16.mxu0 0
      %1024 = vmatpush2.bf16.msra.mxu0 0
      %1025 = vmatprep.subr.bf16.mxu0 0
      %1026 = vmatpush2.bf16.msra.mxu0 0
      %1027 = vmatprep.subr.bf16.mxu0 0
      %1028 = vmatpush2.bf16.msra.mxu0 0
      %1029 = vmatprep.subr.bf16.mxu0 0
      %1030 = vmatpush2.bf16.msra.mxu0 0
      %1031 = vmatprep.subr.bf16.mxu0 0
      %1032 = vmatpush2.bf16.msra.mxu0 0
      %1033 = vmatprep.subr.bf16.mxu0 0
      %1034 = vmatpush2.bf16.msra.mxu0 0
      %1035 = vmatprep.mubr.bf16.mxu0 0
      %1036 = vmatmul.mubr.bf16.gmra.mxu0 %v951
      %v1037 = vpop.f32.mrf.mxu0
      %v1038 = vadd.f32 0.0, %v1037
      %v1039 = vpop.f32.mrf.mxu0
      %v1040 = vpop.f32.mrf.mxu0
      %v1041 = vadd.f32 0.0, %v1040
      %v1042 = vpop.f32.mrf.mxu0
      %1043 = vmatprep.mubr.bf16.mxu0 0
      %1044 = vmatmul.mubr.bf16.gmra.mxu0 %v952
      %v1045 = vpop.f32.mrf.mxu0
      %v1046 = vadd.f32 0.0, %v1045
      %v1047 = vpop.f32.mrf.mxu0
      %v1048 = vpop.f32.mrf.mxu0
      %v1049 = vadd.f32 0.0, %v1048
      %v1050 = vpop.f32.mrf.mxu0
      %1051 = vdwg.mxu0
      %v1052 = vld [vmem:[#allocation2] sm:$0xff]
      %v1053 = vld [vmem:[#allocation2 + $0x8] sm:$0xff]
      %v1054 = vld [vmem:[#allocation2 + $0x10] sm:$0xff]
      %v1055 = vld [vmem:[#allocation2 + $0x18] sm:$0xff]
      %v1056 = vadd.f32 %v1052, %v1038
      %v1057 = vadd.f32 %v1053, %v1041
      %v1058 = vadd.f32 %v1054, %v1046
      %v1059 = vadd.f32 %v1055, %v1049
      %1060 = vst [vmem:[#allocation2] sm:$0xff] %v1056
      %1061 = vst [vmem:[#allocation2 + $0x8] sm:$0xff] %v1057
      %1062 = vst [vmem:[#allocation2 + $0x10] sm:$0xff] %v1058
      %1063 = vst [vmem:[#allocation2 + $0x18] sm:$0xff] %v1059
      %v1064 = vld [vmem:[%s778] sm:$0xf]
      %v1065 = vld [vmem:[%s778 + $0x4] sm:$0x1]
      %v1066 = vld [vmem:[%s778 + $0x8] sm:$0xf]
      %v1067 = vld [vmem:[%s778 + $0xc] sm:$0x1]
      %v1068 = vld [vmem:[%s778 + $0x10] sm:$0xf]
      %v1069 = vld [vmem:[%s778 + $0x14] sm:$0x1]
      %v1070 = vld [vmem:[%s778 + $0x18] sm:$0xf]
      %v1071 = vld [vmem:[%s778 + $0x1c] sm:$0x1]
      %v1073 = vshrl.u32 %v1064, 16
      %v1075 = vrot.slane %v1073, 4
      %v1076 = vshll.u32 %v1064, 16
      %v1078 = vrot.slane %v1076, 5
      %v1079 = vor.u32 %v1075, %v1078
      %v1080 = vrot.slane %v1079, 4
      %v1082 = vshll.u32 %v1065, 16
      %v1084 = vrot.slane %v1082, 5
      %v1085 = vsel %vm587, %v1080, %v1084
      %v1087 = vshrl.u32 %v1066, 16
      %v1089 = vrot.slane %v1087, 4
      %v1090 = vshll.u32 %v1066, 16
      %v1092 = vrot.slane %v1090, 5
      %v1093 = vor.u32 %v1089, %v1092
      %v1094 = vrot.slane %v1093, 4
      %v1096 = vshll.u32 %v1067, 16
      %v1098 = vrot.slane %v1096, 5
      %v1099 = vsel %vm587, %v1094, %v1098
      %v1101 = vshrl.u32 %v1068, 16
      %v1103 = vrot.slane %v1101, 4
      %v1104 = vshll.u32 %v1068, 16
      %v1106 = vrot.slane %v1104, 5
      %v1107 = vor.u32 %v1103, %v1106
      %v1108 = vrot.slane %v1107, 4
      %v1110 = vshll.u32 %v1069, 16
      %v1112 = vrot.slane %v1110, 5
      %v1113 = vsel %vm587, %v1108, %v1112
      %v1115 = vshrl.u32 %v1070, 16
      %v1117 = vrot.slane %v1115, 4
      %v1118 = vshll.u32 %v1070, 16
      %v1120 = vrot.slane %v1118, 5
      %v1121 = vor.u32 %v1117, %v1120
      %v1122 = vrot.slane %v1121, 4
      %v1124 = vshll.u32 %v1071, 16
      %v1126 = vrot.slane %v1124, 5
      %v1127 = vsel %vm587, %v1122, %v1126
      %s1128 = scalar_lea.vmem %s274, 320
      %v1129 = vld [vmem:[%s1128] sm:$0xf]
      %v1130 = vld [vmem:[%s1128 + $0x4] sm:$0xf]
      %v1131 = vld [vmem:[%s1128 + $0x8] sm:$0xf]
      %v1132 = vld [vmem:[%s1128 + $0xc] sm:$0xf]
      %v1133 = vld [vmem:[%s1128 + $0x10] sm:$0xf]
      %v1134 = vld [vmem:[%s1128 + $0x14] sm:$0xf]
      %v1135 = vld [vmem:[%s1128 + $0x18] sm:$0xf]
      %v1136 = vld [vmem:[%s1128 + $0x1c] sm:$0xf]
      %v1137 = vld [vmem:[%s1128 + $0x20] sm:$0xf]
      %v1138 = vld [vmem:[%s1128 + $0x24] sm:$0xf]
      %v1139 = vld [vmem:[%s1128 + $0x28] sm:$0xf]
      %v1140 = vld [vmem:[%s1128 + $0x2c] sm:$0xf]
      %v1141 = vld [vmem:[%s1128 + $0x30] sm:$0xf]
      %v1142 = vld [vmem:[%s1128 + $0x34] sm:$0xf]
      %v1143 = vld [vmem:[%s1128 + $0x38] sm:$0xf]
      %v1144 = vld [vmem:[%s1128 + $0x3c] sm:$0xf]
      %v1145 = vunpack.c.l.b16 %v1085
      %v1146 = vunpack.c.l.b16 %v1099
      %v1147 = vunpack.c.l.b16 %v1113
      %v1148 = vunpack.c.l.b16 %v1127
      %v1149 = vpack.c.b16 %v1146, %v1145
      %v1150 = vpack.c.b16 %v1148, %v1147
      %v1169 = vunpack.c.l.b16 %v1129
      %v1170 = vunpack.c.l.b16 %v1130
      %v1171 = vunpack.c.l.b16 %v1131
      %v1172 = vunpack.c.l.b16 %v1132
      %v1173 = vunpack.c.l.b16 %v1133
      %v1174 = vunpack.c.l.b16 %v1134
      %v1175 = vunpack.c.l.b16 %v1135
      %v1176 = vunpack.c.l.b16 %v1136
      %v1177 = vunpack.c.l.b16 %v1137
      %v1178 = vunpack.c.l.b16 %v1138
      %v1179 = vunpack.c.l.b16 %v1139
      %v1180 = vunpack.c.l.b16 %v1140
      %v1181 = vunpack.c.l.b16 %v1141
      %v1182 = vunpack.c.l.b16 %v1142
      %v1183 = vunpack.c.l.b16 %v1143
      %v1184 = vunpack.c.l.b16 %v1144
      %v1185 = vpack.c.b16 %v1170, %v1169
      %v1186 = vpack.c.b16 %v1172, %v1171
      %v1187 = vpack.c.b16 %v1174, %v1173
      %v1188 = vpack.c.b16 %v1176, %v1175
      %v1189 = vpack.c.b16 %v1178, %v1177
      %v1190 = vpack.c.b16 %v1180, %v1179
      %v1191 = vpack.c.b16 %v1182, %v1181
      %v1192 = vpack.c.b16 %v1184, %v1183
      %1201 = vmatprep.subr.bf16.mxu0 0
      %1202 = vmatpush1.bf16.msra.mxu0 %v1192
      %1203 = vmatprep.subr.bf16.mxu0 0
      %1204 = vmatpush1.bf16.msra.mxu0 %v1191
      %1205 = vmatprep.subr.bf16.mxu0 0
      %1206 = vmatpush1.bf16.msra.mxu0 %v1190
      %1207 = vmatprep.subr.bf16.mxu0 0
      %1208 = vmatpush1.bf16.msra.mxu0 %v1189
      %1209 = vmatprep.subr.bf16.mxu0 0
      %1210 = vmatpush1.bf16.msra.mxu0 %v1188
      %1211 = vmatprep.subr.bf16.mxu0 0
      %1212 = vmatpush1.bf16.msra.mxu0 %v1187
      %1213 = vmatprep.subr.bf16.mxu0 0
      %1214 = vmatpush1.bf16.msra.mxu0 %v1186
      %1215 = vmatprep.subr.bf16.mxu0 0
      %1216 = vmatpush1.bf16.msra.mxu0 %v1185
      %1217 = vmatprep.subr.bf16.mxu0 0
      %1218 = vmatpush2.bf16.msra.mxu0 0
      %1219 = vmatprep.subr.bf16.mxu0 0
      %1220 = vmatpush2.bf16.msra.mxu0 0
      %1221 = vmatprep.subr.bf16.mxu0 0
      %1222 = vmatpush2.bf16.msra.mxu0 0
      %1223 = vmatprep.subr.bf16.mxu0 0
      %1224 = vmatpush2.bf16.msra.mxu0 0
      %1225 = vmatprep.subr.bf16.mxu0 0
      %1226 = vmatpush2.bf16.msra.mxu0 0
      %1227 = vmatprep.subr.bf16.mxu0 0
      %1228 = vmatpush2.bf16.msra.mxu0 0
      %1229 = vmatprep.subr.bf16.mxu0 0
      %1230 = vmatpush2.bf16.msra.mxu0 0
      %1231 = vmatprep.subr.bf16.mxu0 0
      %1232 = vmatpush2.bf16.msra.mxu0 0
      %1233 = vmatprep.mubr.bf16.mxu0 0
      %1234 = vmatmul.mubr.bf16.gmra.mxu0 %v1149
      %v1235 = vpop.f32.mrf.mxu0
      %v1236 = vadd.f32 0.0, %v1235
      %v1237 = vpop.f32.mrf.mxu0
      %v1238 = vpop.f32.mrf.mxu0
      %v1239 = vadd.f32 0.0, %v1238
      %v1240 = vpop.f32.mrf.mxu0
      %1241 = vmatprep.mubr.bf16.mxu0 0
      %1242 = vmatmul.mubr.bf16.gmra.mxu0 %v1150
      %v1243 = vpop.f32.mrf.mxu0
      %v1244 = vadd.f32 0.0, %v1243
      %v1245 = vpop.f32.mrf.mxu0
      %v1246 = vpop.f32.mrf.mxu0
      %v1247 = vadd.f32 0.0, %v1246
      %v1248 = vpop.f32.mrf.mxu0
      %1249 = vdwg.mxu0
      %v1250 = vld [vmem:[#allocation2] sm:$0xff]
      %v1251 = vld [vmem:[#allocation2 + $0x8] sm:$0xff]
      %v1252 = vld [vmem:[#allocation2 + $0x10] sm:$0xff]
      %v1253 = vld [vmem:[#allocation2 + $0x18] sm:$0xff]
      %v1254 = vadd.f32 %v1250, %v1236
      %v1255 = vadd.f32 %v1251, %v1239
      %v1256 = vadd.f32 %v1252, %v1244
      %v1257 = vadd.f32 %v1253, %v1247
      %1258 = vst [vmem:[#allocation2] sm:$0xff] %v1254
      %1259 = vst [vmem:[#allocation2 + $0x8] sm:$0xff] %v1255
      %1260 = vst [vmem:[#allocation2 + $0x10] sm:$0xff] %v1256
      %1261 = vst [vmem:[#allocation2 + $0x18] sm:$0xff] %v1257
      %s1262 = scalar_lea.vmem %s270, 8
      %v1263 = vld [vmem:[%s1262] sm:$0xf]
      %v1264 = vld [vmem:[%s1262 + $0x8] sm:$0xf]
      %v1265 = vld [vmem:[%s1262 + $0x10] sm:$0xf]
      %v1266 = vld [vmem:[%s1262 + $0x18] sm:$0xf]
      %s1267 = scalar_lea.vmem %s274, 384
      %v1268 = vld [vmem:[%s1267] sm:$0xf]
      %v1269 = vld [vmem:[%s1267 + $0x4] sm:$0xf]
      %v1270 = vld [vmem:[%s1267 + $0x8] sm:$0xf]
      %v1271 = vld [vmem:[%s1267 + $0xc] sm:$0xf]
      %v1272 = vld [vmem:[%s1267 + $0x10] sm:$0xf]
      %v1273 = vld [vmem:[%s1267 + $0x14] sm:$0xf]
      %v1274 = vld [vmem:[%s1267 + $0x18] sm:$0xf]
      %v1275 = vld [vmem:[%s1267 + $0x1c] sm:$0xf]
      %v1276 = vld [vmem:[%s1267 + $0x20] sm:$0xf]
      %v1277 = vld [vmem:[%s1267 + $0x24] sm:$0xf]
      %v1278 = vld [vmem:[%s1267 + $0x28] sm:$0xf]
      %v1279 = vld [vmem:[%s1267 + $0x2c] sm:$0xf]
      %v1280 = vld [vmem:[%s1267 + $0x30] sm:$0xf]
      %v1281 = vld [vmem:[%s1267 + $0x34] sm:$0xf]
      %v1282 = vld [vmem:[%s1267 + $0x38] sm:$0xf]
      %v1283 = vld [vmem:[%s1267 + $0x3c] sm:$0xf]
      %v1288 = vunpack.c.l.b16 %v1263
      %v1289 = vunpack.c.l.b16 %v1264
      %v1290 = vunpack.c.l.b16 %v1265
      %v1291 = vunpack.c.l.b16 %v1266
      %v1292 = vpack.c.b16 %v1289, %v1288
      %v1293 = vpack.c.b16 %v1291, %v1290
      %v1312 = vunpack.c.l.b16 %v1268
      %v1313 = vunpack.c.l.b16 %v1269
      %v1314 = vunpack.c.l.b16 %v1270
      %v1315 = vunpack.c.l.b16 %v1271
      %v1316 = vunpack.c.l.b16 %v1272
      %v1317 = vunpack.c.l.b16 %v1273
      %v1318 = vunpack.c.l.b16 %v1274
      %v1319 = vunpack.c.l.b16 %v1275
      %v1320 = vunpack.c.l.b16 %v1276
      %v1321 = vunpack.c.l.b16 %v1277
      %v1322 = vunpack.c.l.b16 %v1278
      %v1323 = vunpack.c.l.b16 %v1279
      %v1324 = vunpack.c.l.b16 %v1280
      %v1325 = vunpack.c.l.b16 %v1281
      %v1326 = vunpack.c.l.b16 %v1282
      %v1327 = vunpack.c.l.b16 %v1283
      %v1328 = vpack.c.b16 %v1313, %v1312
      %v1329 = vpack.c.b16 %v1315, %v1314
      %v1330 = vpack.c.b16 %v1317, %v1316
      %v1331 = vpack.c.b16 %v1319, %v1318
      %v1332 = vpack.c.b16 %v1321, %v1320
      %v1333 = vpack.c.b16 %v1323, %v1322
      %v1334 = vpack.c.b16 %v1325, %v1324
      %v1335 = vpack.c.b16 %v1327, %v1326
      %1344 = vmatprep.subr.bf16.mxu0 0
      %1345 = vmatpush1.bf16.msra.mxu0 %v1335
      %1346 = vmatprep.subr.bf16.mxu0 0
      %1347 = vmatpush1.bf16.msra.mxu0 %v1334
      %1348 = vmatprep.subr.bf16.mxu0 0
      %1349 = vmatpush1.bf16.msra.mxu0 %v1333
      %1350 = vmatprep.subr.bf16.mxu0 0
      %1351 = vmatpush1.bf16.msra.mxu0 %v1332
      %1352 = vmatprep.subr.bf16.mxu0 0
      %1353 = vmatpush1.bf16.msra.mxu0 %v1331
      %1354 = vmatprep.subr.bf16.mxu0 0
      %1355 = vmatpush1.bf16.msra.mxu0 %v1330
      %1356 = vmatprep.subr.bf16.mxu0 0
      %1357 = vmatpush1.bf16.msra.mxu0 %v1329
      %1358 = vmatprep.subr.bf16.mxu0 0
      %1359 = vmatpush1.bf16.msra.mxu0 %v1328
      %1360 = vmatprep.subr.bf16.mxu0 0
      %1361 = vmatpush2.bf16.msra.mxu0 0
      %1362 = vmatprep.subr.bf16.mxu0 0
      %1363 = vmatpush2.bf16.msra.mxu0 0
      %1364 = vmatprep.subr.bf16.mxu0 0
      %1365 = vmatpush2.bf16.msra.mxu0 0
      %1366 = vmatprep.subr.bf16.mxu0 0
      %1367 = vmatpush2.bf16.msra.mxu0 0
      %1368 = vmatprep.subr.bf16.mxu0 0
      %1369 = vmatpush2.bf16.msra.mxu0 0
      %1370 = vmatprep.subr.bf16.mxu0 0
      %1371 = vmatpush2.bf16.msra.mxu0 0
      %1372 = vmatprep.subr.bf16.mxu0 0
      %1373 = vmatpush2.bf16.msra.mxu0 0
      %1374 = vmatprep.subr.bf16.mxu0 0
      %1375 = vmatpush2.bf16.msra.mxu0 0
      %1376 = vmatprep.mubr.bf16.mxu0 0
      %1377 = vmatmul.mubr.bf16.gmra.mxu0 %v1292
      %v1378 = vpop.f32.mrf.mxu0
      %v1379 = vadd.f32 0.0, %v1378
      %v1380 = vpop.f32.mrf.mxu0
      %v1381 = vpop.f32.mrf.mxu0
      %v1382 = vadd.f32 0.0, %v1381
      %v1383 = vpop.f32.mrf.mxu0
      %1384 = vmatprep.mubr.bf16.mxu0 0
      %1385 = vmatmul.mubr.bf16.gmra.mxu0 %v1293
      %v1386 = vpop.f32.mrf.mxu0
      %v1387 = vadd.f32 0.0, %v1386
      %v1388 = vpop.f32.mrf.mxu0
      %v1389 = vpop.f32.mrf.mxu0
      %v1390 = vadd.f32 0.0, %v1389
      %v1391 = vpop.f32.mrf.mxu0
      %1392 = vdwg.mxu0
      %v1393 = vld [vmem:[#allocation2] sm:$0xff]
      %v1394 = vld [vmem:[#allocation2 + $0x8] sm:$0xff]
      %v1395 = vld [vmem:[#allocation2 + $0x10] sm:$0xff]
      %v1396 = vld [vmem:[#allocation2 + $0x18] sm:$0xff]
      %v1397 = vadd.f32 %v1393, %v1379
      %v1398 = vadd.f32 %v1394, %v1382
      %v1399 = vadd.f32 %v1395, %v1387
      %v1400 = vadd.f32 %v1396, %v1390
      %1401 = vst [vmem:[#allocation2] sm:$0xff] %v1397
      %1402 = vst [vmem:[#allocation2 + $0x8] sm:$0xff] %v1398
      %1403 = vst [vmem:[#allocation2 + $0x10] sm:$0xff] %v1399
      %1404 = vst [vmem:[#allocation2 + $0x18] sm:$0xff] %v1400
      %s1405 = scalar_lea.vmem %s270, 48
      %v1406 = vld [vmem:[%s1405] sm:$0xf]
      %v1407 = vld [vmem:[%s1405 + $0x8] sm:$0xf]
      %v1408 = vld [vmem:[%s1405 + $0x10] sm:$0xf]
      %v1409 = vld [vmem:[%s1405 + $0x18] sm:$0xf]
      %s1410 = scalar_lea.vmem %s274, 448
      %v1411 = vld [vmem:[%s1410] sm:$0xf]
      %v1412 = vld [vmem:[%s1410 + $0x4] sm:$0xf]
      %v1413 = vld [vmem:[%s1410 + $0x8] sm:$0xf]
      %v1414 = vld [vmem:[%s1410 + $0xc] sm:$0xf]
      %v1415 = vld [vmem:[%s1410 + $0x10] sm:$0xf]
      %v1416 = vld [vmem:[%s1410 + $0x14] sm:$0xf]
      %v1417 = vld [vmem:[%s1410 + $0x18] sm:$0xf]
      %v1418 = vld [vmem:[%s1410 + $0x1c] sm:$0xf]
      %v1419 = vld [vmem:[%s1410 + $0x20] sm:$0xf]
      %v1420 = vld [vmem:[%s1410 + $0x24] sm:$0xf]
      %v1421 = vld [vmem:[%s1410 + $0x28] sm:$0xf]
      %v1422 = vld [vmem:[%s1410 + $0x2c] sm:$0xf]
      %v1423 = vld [vmem:[%s1410 + $0x30] sm:$0xf]
      %v1424 = vld [vmem:[%s1410 + $0x34] sm:$0xf]
      %v1425 = vld [vmem:[%s1410 + $0x38] sm:$0xf]
      %v1426 = vld [vmem:[%s1410 + $0x3c] sm:$0xf]
      %v1431 = vunpack.c.l.b16 %v1406
      %v1432 = vunpack.c.l.b16 %v1407
      %v1433 = vunpack.c.l.b16 %v1408
      %v1434 = vunpack.c.l.b16 %v1409
      %v1435 = vpack.c.b16 %v1432, %v1431
      %v1436 = vpack.c.b16 %v1434, %v1433
      %v1455 = vunpack.c.l.b16 %v1411
      %v1456 = vunpack.c.l.b16 %v1412
      %v1457 = vunpack.c.l.b16 %v1413
      %v1458 = vunpack.c.l.b16 %v1414
      %v1459 = vunpack.c.l.b16 %v1415
      %v1460 = vunpack.c.l.b16 %v1416
      %v1461 = vunpack.c.l.b16 %v1417
      %v1462 = vunpack.c.l.b16 %v1418
      %v1463 = vunpack.c.l.b16 %v1419
      %v1464 = vunpack.c.l.b16 %v1420
      %v1465 = vunpack.c.l.b16 %v1421
      %v1466 = vunpack.c.l.b16 %v1422
      %v1467 = vunpack.c.l.b16 %v1423
      %v1468 = vunpack.c.l.b16 %v1424
      %v1469 = vunpack.c.l.b16 %v1425
      %v1470 = vunpack.c.l.b16 %v1426
      %v1471 = vpack.c.b16 %v1456, %v1455
      %v1472 = vpack.c.b16 %v1458, %v1457
      %v1473 = vpack.c.b16 %v1460, %v1459
      %v1474 = vpack.c.b16 %v1462, %v1461
      %v1475 = vpack.c.b16 %v1464, %v1463
      %v1476 = vpack.c.b16 %v1466, %v1465
      %v1477 = vpack.c.b16 %v1468, %v1467
      %v1478 = vpack.c.b16 %v1470, %v1469
      %1487 = vmatprep.subr.bf16.mxu0 0
      %1488 = vmatpush1.bf16.msra.mxu0 %v1478
      %1489 = vmatprep.subr.bf16.mxu0 0
      %1490 = vmatpush1.bf16.msra.mxu0 %v1477
      %1491 = vmatprep.subr.bf16.mxu0 0
      %1492 = vmatpush1.bf16.msra.mxu0 %v1476
      %1493 = vmatprep.subr.bf16.mxu0 0
      %1494 = vmatpush1.bf16.msra.mxu0 %v1475
      %1495 = vmatprep.subr.bf16.mxu0 0
      %1496 = vmatpush1.bf16.msra.mxu0 %v1474
      %1497 = vmatprep.subr.bf16.mxu0 0
      %1498 = vmatpush1.bf16.msra.mxu0 %v1473
      %1499 = vmatprep.subr.bf16.mxu0 0
      %1500 = vmatpush1.bf16.msra.mxu0 %v1472
      %1501 = vmatprep.subr.bf16.mxu0 0
      %1502 = vmatpush1.bf16.msra.mxu0 %v1471
      %1503 = vmatprep.subr.bf16.mxu0 0
      %1504 = vmatpush2.bf16.msra.mxu0 0
      %1505 = vmatprep.subr.bf16.mxu0 0
      %1506 = vmatpush2.bf16.msra.mxu0 0
      %1507 = vmatprep.subr.bf16.mxu0 0
      %1508 = vmatpush2.bf16.msra.mxu0 0
      %1509 = vmatprep.subr.bf16.mxu0 0
      %1510 = vmatpush2.bf16.msra.mxu0 0
      %1511 = vmatprep.subr.bf16.mxu0 0
      %1512 = vmatpush2.bf16.msra.mxu0 0
      %1513 = vmatprep.subr.bf16.mxu0 0
      %1514 = vmatpush2.bf16.msra.mxu0 0
      %1515 = vmatprep.subr.bf16.mxu0 0
      %1516 = vmatpush2.bf16.msra.mxu0 0
      %1517 = vmatprep.subr.bf16.mxu0 0
      %1518 = vmatpush2.bf16.msra.mxu0 0
      %1519 = vmatprep.mubr.bf16.mxu0 0
      %1520 = vmatmul.mubr.bf16.gmra.mxu0 %v1435
      %v1521 = vpop.f32.mrf.mxu0
      %v1522 = vadd.f32 0.0, %v1521
      %v1523 = vpop.f32.mrf.mxu0
      %v1524 = vpop.f32.mrf.mxu0
      %v1525 = vadd.f32 0.0, %v1524
      %v1526 = vpop.f32.mrf.mxu0
      %1527 = vmatprep.mubr.bf16.mxu0 0
      %1528 = vmatmul.mubr.bf16.gmra.mxu0 %v1436
      %v1529 = vpop.f32.mrf.mxu0
      %v1530 = vadd.f32 0.0, %v1529
      %v1531 = vpop.f32.mrf.mxu0
      %v1532 = vpop.f32.mrf.mxu0
      %v1533 = vadd.f32 0.0, %v1532
      %v1534 = vpop.f32.mrf.mxu0
      %1535 = vdwg.mxu0
      %v1536 = vld [vmem:[#allocation2] sm:$0xff]
      %v1537 = vld [vmem:[#allocation2 + $0x8] sm:$0xff]
      %v1538 = vld [vmem:[#allocation2 + $0x10] sm:$0xff]
      %v1539 = vld [vmem:[#allocation2 + $0x18] sm:$0xff]
      %v1540 = vadd.f32 %v1536, %v1522
      %v1541 = vadd.f32 %v1537, %v1525
      %v1542 = vadd.f32 %v1538, %v1530
      %v1543 = vadd.f32 %v1539, %v1533
      %1544 = vst [vmem:[#allocation2] sm:$0xff] %v1540
      %1545 = vst [vmem:[#allocation2 + $0x8] sm:$0xff] %v1541
      %1546 = vst [vmem:[#allocation2 + $0x10] sm:$0xff] %v1542
      %1547 = vst [vmem:[#allocation2 + $0x18] sm:$0xff] %v1543
      %v1548 = vld [vmem:[%s1262] sm:$0xf]
      %v1549 = vld [vmem:[%s1262 + $0x4] sm:$0x1]
      %v1550 = vld [vmem:[%s1262 + $0x8] sm:$0xf]
      %v1551 = vld [vmem:[%s1262 + $0xc] sm:$0x1]
      %v1552 = vld [vmem:[%s1262 + $0x10] sm:$0xf]
      %v1553 = vld [vmem:[%s1262 + $0x14] sm:$0x1]
      %v1554 = vld [vmem:[%s1262 + $0x18] sm:$0xf]
      %v1555 = vld [vmem:[%s1262 + $0x1c] sm:$0x1]
      %v1557 = vshrl.u32 %v1548, 16
      %v1559 = vrot.slane %v1557, 4
      %v1560 = vshll.u32 %v1548, 16
      %v1562 = vrot.slane %v1560, 5
      %v1563 = vor.u32 %v1559, %v1562
      %v1564 = vrot.slane %v1563, 4
      %v1566 = vshll.u32 %v1549, 16
      %v1568 = vrot.slane %v1566, 5
      %v1569 = vsel %vm587, %v1564, %v1568
      %v1571 = vshrl.u32 %v1550, 16
      %v1573 = vrot.slane %v1571, 4
      %v1574 = vshll.u32 %v1550, 16
      %v1576 = vrot.slane %v1574, 5
      %v1577 = vor.u32 %v1573, %v1576
      %v1578 = vrot.slane %v1577, 4
      %v1580 = vshll.u32 %v1551, 16
      %v1582 = vrot.slane %v1580, 5
      %v1583 = vsel %vm587, %v1578, %v1582
      %v1585 = vshrl.u32 %v1552, 16
      %v1587 = vrot.slane %v1585, 4
      %v1588 = vshll.u32 %v1552, 16
      %v1590 = vrot.slane %v1588, 5
      %v1591 = vor.u32 %v1587, %v1590
      %v1592 = vrot.slane %v1591, 4
      %v1594 = vshll.u32 %v1553, 16
      %v1596 = vrot.slane %v1594, 5
      %v1597 = vsel %vm587, %v1592, %v1596
      %v1599 = vshrl.u32 %v1554, 16
      %v1601 = vrot.slane %v1599, 4
      %v1602 = vshll.u32 %v1554, 16
      %v1604 = vrot.slane %v1602, 5
      %v1605 = vor.u32 %v1601, %v1604
      %v1606 = vrot.slane %v1605, 4
      %v1608 = vshll.u32 %v1555, 16
      %v1610 = vrot.slane %v1608, 5
      %v1611 = vsel %vm587, %v1606, %v1610
      %s1612 = scalar_lea.vmem %s274, 512
      %v1613 = vld [vmem:[%s1612] sm:$0xf]
      %v1614 = vld [vmem:[%s1612 + $0x4] sm:$0xf]
      %v1615 = vld [vmem:[%s1612 + $0x8] sm:$0xf]
      %v1616 = vld [vmem:[%s1612 + $0xc] sm:$0xf]
      %v1617 = vld [vmem:[%s1612 + $0x10] sm:$0xf]
      %v1618 = vld [vmem:[%s1612 + $0x14] sm:$0xf]
      %v1619 = vld [vmem:[%s1612 + $0x18] sm:$0xf]
      %v1620 = vld [vmem:[%s1612 + $0x1c] sm:$0xf]
      %v1621 = vld [vmem:[%s1612 + $0x20] sm:$0xf]
      %v1622 = vld [vmem:[%s1612 + $0x24] sm:$0xf]
      %v1623 = vld [vmem:[%s1612 + $0x28] sm:$0xf]
      %v1624 = vld [vmem:[%s1612 + $0x2c] sm:$0xf]
      %v1625 = vld [vmem:[%s1612 + $0x30] sm:$0xf]
      %v1626 = vld [vmem:[%s1612 + $0x34] sm:$0xf]
      %v1627 = vld [vmem:[%s1612 + $0x38] sm:$0xf]
      %v1628 = vld [vmem:[%s1612 + $0x3c] sm:$0xf]
      %v1629 = vunpack.c.l.b16 %v1569
      %v1630 = vunpack.c.l.b16 %v1583
      %v1631 = vunpack.c.l.b16 %v1597
      %v1632 = vunpack.c.l.b16 %v1611
      %v1633 = vpack.c.b16 %v1630, %v1629
      %v1634 = vpack.c.b16 %v1632, %v1631
      %v1653 = vunpack.c.l.b16 %v1613
      %v1654 = vunpack.c.l.b16 %v1614
      %v1655 = vunpack.c.l.b16 %v1615
      %v1656 = vunpack.c.l.b16 %v1616
      %v1657 = vunpack.c.l.b16 %v1617
      %v1658 = vunpack.c.l.b16 %v1618
      %v1659 = vunpack.c.l.b16 %v1619
      %v1660 = vunpack.c.l.b16 %v1620
      %v1661 = vunpack.c.l.b16 %v1621
      %v1662 = vunpack.c.l.b16 %v1622
      %v1663 = vunpack.c.l.b16 %v1623
      %v1664 = vunpack.c.l.b16 %v1624
      %v1665 = vunpack.c.l.b16 %v1625
      %v1666 = vunpack.c.l.b16 %v1626
      %v1667 = vunpack.c.l.b16 %v1627
      %v1668 = vunpack.c.l.b16 %v1628
      %v1669 = vpack.c.b16 %v1654, %v1653
      %v1670 = vpack.c.b16 %v1656, %v1655
      %v1671 = vpack.c.b16 %v1658, %v1657
      %v1672 = vpack.c.b16 %v1660, %v1659
      %v1673 = vpack.c.b16 %v1662, %v1661
      %v1674 = vpack.c.b16 %v1664, %v1663
      %v1675 = vpack.c.b16 %v1666, %v1665
      %v1676 = vpack.c.b16 %v1668, %v1667
      %1685 = vmatprep.subr.bf16.mxu0 0
      %1686 = vmatpush1.bf16.msra.mxu0 %v1676
      %1687 = vmatprep.subr.bf16.mxu0 0
      %1688 = vmatpush1.bf16.msra.mxu0 %v1675
      %1689 = vmatprep.subr.bf16.mxu0 0
      %1690 = vmatpush1.bf16.msra.mxu0 %v1674
      %1691 = vmatprep.subr.bf16.mxu0 0
      %1692 = vmatpush1.bf16.msra.mxu0 %v1673
      %1693 = vmatprep.subr.bf16.mxu0 0
      %1694 = vmatpush1.bf16.msra.mxu0 %v1672
      %1695 = vmatprep.subr.bf16.mxu0 0
      %1696 = vmatpush1.bf16.msra.mxu0 %v1671
      %1697 = vmatprep.subr.bf16.mxu0 0
      %1698 = vmatpush1.bf16.msra.mxu0 %v1670
      %1699 = vmatprep.subr.bf16.mxu0 0
      %1700 = vmatpush1.bf16.msra.mxu0 %v1669
      %1701 = vmatprep.subr.bf16.mxu0 0
      %1702 = vmatpush2.bf16.msra.mxu0 0
      %1703 = vmatprep.subr.bf16.mxu0 0
      %1704 = vmatpush2.bf16.msra.mxu0 0
      %1705 = vmatprep.subr.bf16.mxu0 0
      %1706 = vmatpush2.bf16.msra.mxu0 0
      %1707 = vmatprep.subr.bf16.mxu0 0
      %1708 = vmatpush2.bf16.msra.mxu0 0
      %1709 = vmatprep.subr.bf16.mxu0 0
      %1710 = vmatpush2.bf16.msra.mxu0 0
      %1711 = vmatprep.subr.bf16.mxu0 0
      %1712 = vmatpush2.bf16.msra.mxu0 0
      %1713 = vmatprep.subr.bf16.mxu0 0
      %1714 = vmatpush2.bf16.msra.mxu0 0
      %1715 = vmatprep.subr.bf16.mxu0 0
      %1716 = vmatpush2.bf16.msra.mxu0 0
      %1717 = vmatprep.mubr.bf16.mxu0 0
      %1718 = vmatmul.mubr.bf16.gmra.mxu0 %v1633
      %v1719 = vpop.f32.mrf.mxu0
      %v1720 = vadd.f32 0.0, %v1719
      %v1721 = vpop.f32.mrf.mxu0
      %v1722 = vpop.f32.mrf.mxu0
      %v1723 = vadd.f32 0.0, %v1722
      %v1724 = vpop.f32.mrf.mxu0
      %1725 = vmatprep.mubr.bf16.mxu0 0
      %1726 = vmatmul.mubr.bf16.gmra.mxu0 %v1634
      %v1727 = vpop.f32.mrf.mxu0
      %v1728 = vadd.f32 0.0, %v1727
      %v1729 = vpop.f32.mrf.mxu0
      %v1730 = vpop.f32.mrf.mxu0
      %v1731 = vadd.f32 0.0, %v1730
      %v1732 = vpop.f32.mrf.mxu0
      %1733 = vdwg.mxu0
      %v1734 = vld [vmem:[#allocation2] sm:$0xff]
      %v1735 = vld [vmem:[#allocation2 + $0x8] sm:$0xff]
      %v1736 = vld [vmem:[#allocation2 + $0x10] sm:$0xff]
      %v1737 = vld [vmem:[#allocation2 + $0x18] sm:$0xff]
      %v1738 = vadd.f32 %v1734, %v1720
      %v1739 = vadd.f32 %v1735, %v1723
      %v1740 = vadd.f32 %v1736, %v1728
      %v1741 = vadd.f32 %v1737, %v1731
      %1742 = vst [vmem:[#allocation2] sm:$0xff] %v1738
      %1743 = vst [vmem:[#allocation2 + $0x8] sm:$0xff] %v1739
      %1744 = vst [vmem:[#allocation2 + $0x10] sm:$0xff] %v1740
      %1745 = vst [vmem:[#allocation2 + $0x18] sm:$0xff] %v1741
      %v1746 = vld [vmem:[#allocation2] sm:$0xff]
      %v1747 = vld [vmem:[#allocation2 + $0x8] sm:$0xff]
      %v1748 = vld [vmem:[#allocation2 + $0x10] sm:$0xff]
      %v1749 = vld [vmem:[#allocation2 + $0x18] sm:$0xff]
      %v1750 = vpack.c.bf16 %v1747, %v1746
      %v1751 = vpack.c.bf16 %v1749, %v1748
      %v1754 = vunpack.c.l.b16 %v1750
      %v1755 = vunpack.c.h.b16 %v1750
      %v1756 = vunpack.c.l.b16 %v1751
      %v1757 = vunpack.c.h.b16 %v1751
      %v1758 = vpack.c.b16 %v1754, %v1754
      %v1759 = vpack.c.b16 %v1755, %v1755
      %v1760 = vpack.c.b16 %v1756, %v1756
      %v1761 = vpack.c.b16 %v1757, %v1757
      %1766 = vst [vmem:[%s286] sm:$0xf] %v1758
      %1767 = vst [vmem:[%s286 + $0x4] sm:$0xf] %v1759
      %1768 = vst [vmem:[%s286 + $0x8] sm:$0xf] %v1760
      %1769 = vst [vmem:[%s286 + $0xc] sm:$0xf] %v1761
      %v1770 = vadd.f32 %v1746, %v1747
      %v1771 = vadd.f32 %v1770, %v1748
      %v1772 = vadd.f32 %v1771, %v1749
      %v1773 = vrot.slane %v1772, 4
      %v1774 = vadd.f32 %v1772, %v1773
      %v1775 = vrot.slane %v1774, 2
      %v1776 = vadd.f32 %v1774, %v1775
      %v1777 = vrot.slane %v1776, 1
      %v1778 = vadd.f32 %v1776, %v1777
      %v1779 = vmul.f32 %v1746, %v1746
      %v1780 = vmul.f32 %v1747, %v1747
      %v1781 = vmul.f32 %v1748, %v1748
      %v1782 = vmul.f32 %v1749, %v1749
      %v1783 = vadd.f32 %v1779, %v1780
      %v1784 = vadd.f32 %v1783, %v1781
      %v1785 = vadd.f32 %v1784, %v1782
      %v1786 = vrot.slane %v1785, 4
      %v1787 = vadd.f32 %v1785, %v1786
      %v1788 = vrot.slane %v1787, 2
      %v1789 = vadd.f32 %v1787, %v1788
      %v1790 = vrot.slane %v1789, 1
      %v1791 = vadd.f32 %v1789, %v1790
      %p1792 = scmp.eq.s32.totalorder %s23, 0
      // Predicated region
      $region29: #{basic_block_forward.5} parent=27 // pred_check
        %p1793 = pneg %p1792
      $region30: #{basic_block_forward.5} parent=27 // pred_check_branch
        %1795 = sbr.rel (%p1793) target = $region32
      $region31: #{basic_block_forward.5} parent=27 // pred_region
        %1796 = vst [vmem:[%s293] sm:$0x1] %v1778
        %1797 = vst [vmem:[%s299] sm:$0x1] %v1791
      $region32: #{basic_block_forward.5} parent=27 // pred_fallthru
        _
      %p1798 = scmp.gt.s32.totalorder %s23, 0
      // Predicated region
      $region33: #{basic_block_forward.5} parent=27 // pred_check
        %p1799 = pneg %p1798
      $region34: #{basic_block_forward.5} parent=27 // pred_check_branch
        %1801 = sbr.rel (%p1799) target = $region36
      $region35: #{basic_block_forward.5} parent=27 // pred_region
        %v1802 = vld [vmem:[%s293] sm:$0x1]
        %v1803 = vadd.f32 %v1802, %v1778
        %1804 = vst [vmem:[%s293] sm:$0x1] %v1803
        %v1805 = vld [vmem:[%s299] sm:$0x1]
        %v1806 = vadd.f32 %v1805, %v1791
        %1807 = vst [vmem:[%s299] sm:$0x1] %v1806
      $region36: #{basic_block_forward.5} parent=27 // pred_fallthru
        _
      %s1808 = smul.u32 4, %s23
      %p1809 = scmp.lt.s32.totalorder %s22, 1
      %s1810 = scalar_select %p1809, %s22, 1
      %p1811 = scmp.lt.s32.totalorder %s1808, 7
      %s1812 = scalar_select %p1811, %s1808, 7
      %p1813 = scmp.lt.s32.totalorder %s21, 0
      %s1814 = scalar_select %p1813, %s21, 0
      %s1815 = sadd.s32 %s1814, %s1812
      %s1816 = smul.addr %s1810, 8
      %s1817 = sadd.s32 %s1815, %s1816
      %s1818 = smul.addr %s1817, 4
      %s1819 = scalar_lea.vmem %s2, %s1818
      %p1820 = scmp.lt.s32.totalorder %s22, 1
      %s1821 = scalar_select %p1820, %s22, 1
      %p1822 = scmp.lt.s32.totalorder %s21, 0
      %s1823 = scalar_select %p1822, %s21, 0
      %s1824 = sadd.s32 %s1823, %s1821
      %s1825 = scalar_lea.vmem %s3, %s1824
      %p1826 = scmp.lt.s32.totalorder %s22, 1
      %s1827 = scalar_select %p1826, %s22, 1
      %p1828 = scmp.lt.s32.totalorder %s21, 0
      %s1829 = scalar_select %p1828, %s21, 0
      %s1830 = sadd.s32 %s1829, %s1827
      %s1831 = scalar_lea.vmem %s4, %s1830
      // Predicated region
      $region37: #{basic_block_forward.5} parent=27 // pred_check
        %p1832 = pneg %p111
      $region38: #{basic_block_forward.5} parent=27 // pred_check_branch
        %1834 = sbr.rel (%p1832) target = $region40
      $region39: #{basic_block_forward.5} parent=27 // pred_region
        %s1835 = smul.u32 4, %s23
      $region40: #{basic_block_forward.5} parent=27 // pred_fallthru
        _
      // Predicated region
      $region41: #{basic_block_forward.5} parent=27 // pred_check
        %p1836 = pneg %p139
      $region42: #{basic_block_forward.5} parent=27 // pred_check_branch
        %1838 = sbr.rel (%p1836) target = $region44
      $region43: #{basic_block_forward.5} parent=27 // pred_region
        _
      $region44: #{basic_block_forward.5} parent=27 // pred_fallthru
        _
      // Predicated region
      $region45: #{basic_block_forward.5} parent=27 // pred_check
        %p1839 = pneg %p167
      $region46: #{basic_block_forward.5} parent=27 // pred_check_branch
        %1841 = sbr.rel (%p1839) target = $region48
      $region47: #{basic_block_forward.5} parent=27 // pred_region
        _
      $region48: #{basic_block_forward.5} parent=27 // pred_fallthru
        _
    $region28: #{basic_block_forward.5} parent=5 // pred_fallthru
      _
    %p1842 = scmp.le.s32.totalorder 2, %s11
    // Predicated region
    $region49: #{basic_block_forward.5} parent=5 // pred_check
      %p1843 = pneg %p1842
    $region50: #{basic_block_forward.5} parent=5 // pred_check_branch
      %1845 = sbr.rel (%p1843) target = $region52
    $region51: #{basic_block_forward.5} parent=5 // pred_region
      %s1846 = ssub.s32 %s11, 2
      // Predicated region
      $region53: #{basic_block_forward.5} parent=51 // pred_check
        %p1847 = pneg %p117
      $region54: #{basic_block_forward.5} parent=51 // pred_check_branch
        %1849 = sbr.rel (%p1847) target = $region56
      $region55: #{basic_block_forward.5} parent=51 // pred_region
        %s1850 = smul.u32 4, %s26
        %p1851 = scmp.lt.s32.totalorder %s25, 1
        %s1852 = scalar_select %p1851, %s25, 1
        %p1853 = scmp.lt.s32.totalorder %s1850, 7
        %s1854 = scalar_select %p1853, %s1850, 7
        %p1855 = scmp.lt.s32.totalorder %s24, 0
        %s1856 = scalar_select %p1855, %s24, 0
        %s1857 = sadd.s32 %s1856, %s1854
        %s1858 = smul.addr %s1852, 8
        %s1859 = sadd.s32 %s1857, %s1858
        %s1860 = smul.addr %s1859, 4
        %s1861 = scalar_lea.vmem %s2, %s1860
      $region56: #{basic_block_forward.5} parent=51 // pred_fallthru
        _
      // Predicated region
      $region57: #{basic_block_forward.5} parent=51 // pred_check
        %p1862 = pneg %p145
      $region58: #{basic_block_forward.5} parent=51 // pred_check_branch
        %1864 = sbr.rel (%p1862) target = $region60
      $region59: #{basic_block_forward.5} parent=51 // pred_region
        %p1865 = scmp.lt.s32.totalorder %s25, 1
        %s1866 = scalar_select %p1865, %s25, 1
        %p1867 = scmp.lt.s32.totalorder %s24, 0
        %s1868 = scalar_select %p1867, %s24, 0
        %s1869 = sadd.s32 %s1868, %s1866
        %s1870 = scalar_lea.vmem %s3, %s1869
      $region60: #{basic_block_forward.5} parent=51 // pred_fallthru
        _
      // Predicated region
      $region61: #{basic_block_forward.5} parent=51 // pred_check
        %p1871 = pneg %p173
      $region62: #{basic_block_forward.5} parent=51 // pred_check_branch
        %1873 = sbr.rel (%p1871) target = $region64
      $region63: #{basic_block_forward.5} parent=51 // pred_region
        %p1874 = scmp.lt.s32.totalorder %s25, 1
        %s1875 = scalar_select %p1874, %s25, 1
        %p1876 = scmp.lt.s32.totalorder %s24, 0
        %s1877 = scalar_select %p1876, %s24, 0
        %s1878 = sadd.s32 %s1877, %s1875
        %s1879 = scalar_lea.vmem %s4, %s1878
      $region64: #{basic_block_forward.5} parent=51 // pred_fallthru
        _
    $region52: #{basic_block_forward.5} parent=5 // pred_fallthru
      _
  $region6: #{basic_block_forward.5} parent=0 // loop_footer
    %s15 = sadd.s32 1, %s11
  $region7: #{basic_block_forward.5} parent=0 // loop_footer_branch
    %10 = sbr.rel target = $region3
  $region8: #{basic_block_forward.5} parent=0 // loop_exit
    _

// kernel: basic_block_forward.7
$region0: #{basic_block_forward.7}
  #allocation0 [shape = 'u32[]', space=smem, size = 0x4, offset = 0x4, fixed_abs, tag = 'smem constant byte address 0x4 - core index']
  #allocation1 [shape = 'u32[144,128]{1,0:T(1,128)}', space=vmem, size = 0x12000, scoped, tag = 'internal scratch']
  #allocation2 [shape = 'f32[32,128]{1,0:T(8,128)}', space=vmem, size = 0x4000, scoped, tag = 'scratch operand']
  %s0 = inlined_call_operand.vmem [shape: bf16[2,2,6,10,128], index: 0, kind: input, shape index: {}]
  %s1 = inlined_call_operand.vmem [shape: bf16[9,128,128], index: 1, kind: input, shape index: {}]
  %s2 = inlined_call_operand.vmem [shape: bf16[2,64,128], index: 2, kind: output, shape index: {0}]
  %s3 = inlined_call_operand.vmem [shape: f32[2,1,128], index: 3, kind: output, shape index: {1}]
  %s4 = inlined_call_operand.vmem [shape: f32[2,1,128], index: 4, kind: output, shape index: {2}]
  %5 = xla_tuple %s2, %s3, %s4
  %s6 = sld [smem:[#allocation0]]
  $region65: #{basic_block_forward.7} parent=0
    _
  %s8 = ssub.s32 1, %s6
  %s9 = scalar_select 0, %s8, %s6
  loop: start=0, step=1, limit=6
  $region2: #{basic_block_forward.7} parent=0 // loop_pre_header
    _
  $region3: #{basic_block_forward.7} parent=0 // loop_header
    %s11 = sphi 0, %s15
    %p12 = scmp.ge.s32.totalorder %s11, 6
    %s18 = sphi 0, %s37
    %s19 = sphi 0, %s33
    %s20 = sphi 0, %s29
    %s21 = sphi 0, %s18
    %s22 = sphi 0, %s19
    %s23 = sphi 0, %s20
    %s24 = sphi 0, %s21
    %s25 = sphi 0, %s22
    %s26 = sphi 0, %s23
    %s42 = sphi 0, %s44
    %s45 = sphi 0, %s42
    %s46 = sphi 0, %s45
    %s62 = sphi 0, %s46
    %s68 = sphi 0, %s70
    %s71 = sphi 0, %s68
    %s72 = sphi 0, %s71
    %s88 = sphi 0, %s72
    %s98 = sphi 0, %s100
    %s101 = sphi 0, %s98
    %s102 = sphi 0, %s101
    %s118 = sphi 0, %s102
    %s126 = sphi 0, %s128
    %s129 = sphi 0, %s126
    %s130 = sphi 0, %s129
    %s146 = sphi 0, %s130
    %s154 = sphi 0, %s156
    %s157 = sphi 0, %s154
    %s158 = sphi 0, %s157
    %s174 = sphi 0, %s158
  $region4: #{basic_block_forward.7} parent=0 // loop_header_branch
    %14 = sbr.rel (%p12) target = $region8
  $region5: #{basic_block_forward.7} parent=0 // loop_body
    %s16 = ssub.s32 %s11, 1
    %s17 = ssub.s32 %s11, 2
    %s27 = sadd.s32 1, %s20
    %p28 = scmp.ge.s32.totalorder %s27, 2
    %s29 = scalar_select %p28, 0, %s27
    %s30 = sadd.s32 1, %s19
    %s31 = scalar_select %p28, %s30, %s19
    %p32 = scmp.ge.s32.totalorder %s31, 2
    %s33 = scalar_select %p32, 0, %s31
    %s34 = sadd.s32 1, %s18
    %s35 = scalar_select %p32, %s34, %s18
    %p36 = scmp.ge.s32.totalorder %s35, 1
    %s37 = scalar_select %p36, 0, %s35
    %s38 = ssub.s32 %s19, %s33
    %s39 = ssub.s32 %s20, %s29
    %s40 = sor.u32 %s38, %s39
    %p41 = scmp.eq.s32.totalorder %s40, 0
    %s43 = sadd.s32 %s42, 1
    %s44 = scalar_select %p41, %s42, %s43
    %p47 = pneg %p41
    %p48 = scmp.eq.s32.totalorder %s11, 3
    %p49 = por %p47, %p48
    %p50 = scmp.ne.s32.totalorder %s42, %s45
    %p51 = scmp.eq.s32.totalorder %s11, 0
    %p52 = por %p50, %p51
    %p53 = scmp.ne.s32.totalorder %s42, %s45
    %p54 = scmp.eq.s32.totalorder %s16, 3
    %p55 = por %p53, %p54
    %p56 = scmp.ne.s32.totalorder %s45, %s46
    %p57 = scmp.eq.s32.totalorder %s16, 0
    %p58 = por %p56, %p57
    %p59 = scmp.ne.s32.totalorder %s45, %s46
    %p60 = scmp.eq.s32.totalorder %s17, 3
    %p61 = por %p59, %p60
    %p63 = scmp.ne.s32.totalorder %s46, %s62
    %p64 = scmp.eq.s32.totalorder %s17, 0
    %p65 = por %p63, %p64
    %s66 = ssub.s32 %s18, %s37
    %p67 = scmp.eq.s32.totalorder %s66, 0
    %s69 = sadd.s32 %s68, 1
    %s70 = scalar_select %p67, %s68, %s69
    %p73 = pneg %p67
    %p74 = scmp.eq.s32.totalorder %s11, 3
    %p75 = por %p73, %p74
    %p76 = scmp.ne.s32.totalorder %s68, %s71
    %p77 = scmp.eq.s32.totalorder %s11, 0
    %p78 = por %p76, %p77
    %p79 = scmp.ne.s32.totalorder %s68, %s71
    %p80 = scmp.eq.s32.totalorder %s16, 3
    %p81 = por %p79, %p80
    %p82 = scmp.ne.s32.totalorder %s71, %s72
    %p83 = scmp.eq.s32.totalorder %s16, 0
    %p84 = por %p82, %p83
    %p85 = scmp.ne.s32.totalorder %s71, %s72
    %p86 = scmp.eq.s32.totalorder %s17, 3
    %p87 = por %p85, %p86
    %p89 = scmp.ne.s32.totalorder %s72, %s88
    %p90 = scmp.eq.s32.totalorder %s17, 0
    %p91 = por %p89, %p90
    %s92 = ssub.s32 %s19, %s33
    %s93 = ssub.s32 %s20, %s29
    %s94 = sor.u32 %s92, %s93
    %s95 = ssub.s32 %s18, %s37
    %s96 = sor.u32 %s94, %s95
    %p97 = scmp.eq.s32.totalorder %s96, 0
    %s99 = sadd.s32 %s98, 1
    %s100 = scalar_select %p97, %s98, %s99
    %p103 = pneg %p97
    %p104 = scmp.eq.s32.totalorder %s11, 3
    %p105 = por %p103, %p104
    %p106 = scmp.ne.s32.totalorder %s98, %s101
    %p107 = scmp.eq.s32.totalorder %s11, 0
    %p108 = por %p106, %p107
    %p109 = scmp.ne.s32.totalorder %s98, %s101
    %p110 = scmp.eq.s32.totalorder %s16, 3
    %p111 = por %p109, %p110
    %p112 = scmp.ne.s32.totalorder %s101, %s102
    %p113 = scmp.eq.s32.totalorder %s16, 0
    %p114 = por %p112, %p113
    %p115 = scmp.ne.s32.totalorder %s101, %s102
    %p116 = scmp.eq.s32.totalorder %s17, 3
    %p117 = por %p115, %p116
    %p119 = scmp.ne.s32.totalorder %s102, %s118
    %p120 = scmp.eq.s32.totalorder %s17, 0
    %p121 = por %p119, %p120
    %s122 = ssub.s32 %s19, %s33
    %s123 = ssub.s32 %s18, %s37
    %s124 = sor.u32 %s122, %s123
    %p125 = scmp.eq.s32.totalorder %s124, 0
    %s127 = sadd.s32 %s126, 1
    %s128 = scalar_select %p125, %s126, %s127
    %p131 = pneg %p125
    %p132 = scmp.eq.s32.totalorder %s11, 3
    %p133 = por %p131, %p132
    %p134 = scmp.ne.s32.totalorder %s126, %s129
    %p135 = scmp.eq.s32.totalorder %s11, 0
    %p136 = por %p134, %p135
    %p137 = scmp.ne.s32.totalorder %s126, %s129
    %p138 = scmp.eq.s32.totalorder %s16, 3
    %p139 = por %p137, %p138
    %p140 = scmp.ne.s32.totalorder %s129, %s130
    %p141 = scmp.eq.s32.totalorder %s16, 0
    %p142 = por %p140, %p141
    %p143 = scmp.ne.s32.totalorder %s129, %s130
    %p144 = scmp.eq.s32.totalorder %s17, 3
    %p145 = por %p143, %p144
    %p147 = scmp.ne.s32.totalorder %s130, %s146
    %p148 = scmp.eq.s32.totalorder %s17, 0
    %p149 = por %p147, %p148
    %s150 = ssub.s32 %s19, %s33
    %s151 = ssub.s32 %s18, %s37
    %s152 = sor.u32 %s150, %s151
    %p153 = scmp.eq.s32.totalorder %s152, 0
    %s155 = sadd.s32 %s154, 1
    %s156 = scalar_select %p153, %s154, %s155
    %p159 = pneg %p153
    %p160 = scmp.eq.s32.totalorder %s11, 3
    %p161 = por %p159, %p160
    %p162 = scmp.ne.s32.totalorder %s154, %s157
    %p163 = scmp.eq.s32.totalorder %s11, 0
    %p164 = por %p162, %p163
    %p165 = scmp.ne.s32.totalorder %s154, %s157
    %p166 = scmp.eq.s32.totalorder %s16, 3
    %p167 = por %p165, %p166
    %p168 = scmp.ne.s32.totalorder %s157, %s158
    %p169 = scmp.eq.s32.totalorder %s16, 0
    %p170 = por %p168, %p169
    %p171 = scmp.ne.s32.totalorder %s157, %s158
    %p172 = scmp.eq.s32.totalorder %s17, 3
    %p173 = por %p171, %p172
    %p175 = scmp.ne.s32.totalorder %s158, %s174
    %p176 = scmp.eq.s32.totalorder %s17, 0
    %p177 = por %p175, %p176
    %p178 = scmp.le.s32.totalorder 1, %s11
    %p179 = scmp.lt.s32.totalorder %s11, 5
    %p180 = pnand %p178, %p179
    %p181 = pneg %p180
    // Predicated region
    $region9: #{basic_block_forward.7} parent=5 // pred_check
      _
    $region10: #{basic_block_forward.7} parent=5 // pred_check_branch
      %183 = sbr.rel (%p180) target = $region12
    $region11: #{basic_block_forward.7} parent=5 // pred_region
      %s184 = ssub.s32 %s11, 1
      // Predicated region
      $region13: #{basic_block_forward.7} parent=11 // pred_check
        %p185 = pneg %p84
      $region14: #{basic_block_forward.7} parent=11 // pred_check_branch
        %187 = sbr.rel (%p185) target = $region16
      $region15: #{basic_block_forward.7} parent=11 // pred_region
        %p188 = scmp.lt.s32.totalorder %s21, 0
        %s189 = scalar_select %p188, %s21, 0
        %s190 = smul.addr %s189, 4
        %s191 = scalar_lea.vmem %s1, %s190
      $region16: #{basic_block_forward.7} parent=11 // pred_fallthru
        _
    $region12: #{basic_block_forward.7} parent=5 // pred_fallthru
      _
    %p192 = scmp.lt.s32.totalorder %s11, 4
    // Predicated region
    $region17: #{basic_block_forward.7} parent=5 // pred_check
      %p193 = pneg %p192
    $region18: #{basic_block_forward.7} parent=5 // pred_check_branch
      %195 = sbr.rel (%p193) target = $region20
    $region19: #{basic_block_forward.7} parent=5 // pred_region
      // Predicated region
      $region21: #{basic_block_forward.7} parent=19 // pred_check
        %p196 = pneg %p52
      $region22: #{basic_block_forward.7} parent=19 // pred_check_branch
        %198 = sbr.rel (%p196) target = $region24
      $region23: #{basic_block_forward.7} parent=19 // pred_region
        %p199 = scmp.lt.s32.totalorder %s19, 1
        %s200 = scalar_select %p199, %s19, 1
        %p201 = scmp.lt.s32.totalorder %s20, 1
        %s202 = scalar_select %p201, %s20, 1
        %s203 = smul.addr %s202, 12
        %s204 = smul.addr %s200, 24
        %s205 = sadd.s32 %s203, %s204
        %s206 = smul.addr %s205, 4
        %s207 = scalar_lea.vmem %s0, %s206
      $region24: #{basic_block_forward.7} parent=19 // pred_fallthru
        _
    $region20: #{basic_block_forward.7} parent=5 // pred_fallthru
      _
    %p208 = scmp.le.s32.totalorder 1, %s11
    %p209 = scmp.lt.s32.totalorder %s11, 5
    %p210 = pnand %p208, %p209
    %p211 = pneg %p210
    // Predicated region
    $region25: #{basic_block_forward.7} parent=5 // pred_check
      _
    $region26: #{basic_block_forward.7} parent=5 // pred_check_branch
      %213 = sbr.rel (%p210) target = $region28
    $region27: #{basic_block_forward.7} parent=5 // pred_region
      %s214 = ssub.s32 %s11, 1
      %p215 = scmp.lt.s32.totalorder %s22, 1
      %s216 = scalar_select %p215, %s22, 1
      %p217 = scmp.lt.s32.totalorder %s23, 1
      %s218 = scalar_select %p217, %s23, 1
      %s219 = smul.addr %s218, 12
      %s220 = smul.addr %s216, 24
      %s221 = sadd.s32 %s219, %s220
      %s222 = smul.addr %s221, 4
      %s223 = scalar_lea.vmem %s0, %s222
      %p224 = pneg %p58
      %p225 = pneg %p55
      %p226 = scmp.lt.s32.totalorder %s21, 0
      %s227 = scalar_select %p226, %s21, 0
      %s228 = smul.addr %s227, 4
      %s229 = scalar_lea.vmem %s1, %s228
      %p230 = pneg %p84
      %p231 = pneg %p81
      %p232 = pneg %p114
      %p233 = pneg %p111
      %s234 = smul.u32 4, %s23
      %p235 = scmp.lt.s32.totalorder %s22, 1
      %s236 = scalar_select %p235, %s22, 1
      %p237 = scmp.lt.s32.totalorder %s234, 7
      %s238 = scalar_select %p237, %s234, 7
      %p239 = scmp.lt.s32.totalorder %s21, 0
      %s240 = scalar_select %p239, %s21, 0
      %s241 = sadd.s32 %s240, %s238
      %s242 = smul.addr %s236, 8
      %s243 = sadd.s32 %s241, %s242
      %s244 = smul.addr %s243, 4
      %s245 = scalar_lea.vmem %s2, %s244
      %p246 = pneg %p142
      %p247 = pneg %p139
      %p248 = scmp.lt.s32.totalorder %s22, 1
      %s249 = scalar_select %p248, %s22, 1
      %p250 = scmp.lt.s32.totalorder %s21, 0
      %s251 = scalar_select %p250, %s21, 0
      %s252 = sadd.s32 %s251, %s249
      %s253 = scalar_lea.vmem %s3, %s252
      %p254 = pneg %p170
      %p255 = pneg %p167
      %p256 = scmp.lt.s32.totalorder %s22, 1
      %s257 = scalar_select %p256, %s22, 1
      %p258 = scmp.lt.s32.totalorder %s21, 0
      %s259 = scalar_select %p258, %s21, 0
      %s260 = sadd.s32 %s259, %s257
      %s261 = scalar_lea.vmem %s4, %s260
      %p262 = scmp.lt.s32.totalorder %s22, 1
      %s263 = scalar_select %p262, %s22, 1
      %p264 = scmp.lt.s32.totalorder %s23, 1
      %s265 = scalar_select %p264, %s23, 1
      %s266 = smul.addr %s265, 12
      %s267 = smul.addr %s263, 24
      %s268 = sadd.s32 %s266, %s267
      %s269 = smul.addr %s268, 4
      %s270 = scalar_lea.vmem %s0, %s269
      %p271 = scmp.lt.s32.totalorder %s21, 0
      %s272 = scalar_select %p271, %s21, 0
      %s273 = smul.addr %s272, 4
      %s274 = scalar_lea.vmem %s1, %s273
      %s275 = smul.u32 4, %s23
      %p276 = scmp.lt.s32.totalorder %s22, 1
      %s277 = scalar_select %p276, %s22, 1
      %p278 = scmp.lt.s32.totalorder %s275, 7
      %s279 = scalar_select %p278, %s275, 7
      %p280 = scmp.lt.s32.totalorder %s21, 0
      %s281 = scalar_select %p280, %s21, 0
      %s282 = sadd.s32 %s281, %s279
      %s283 = smul.addr %s277, 8
      %s284 = sadd.s32 %s282, %s283
      %s285 = smul.addr %s284, 4
      %s286 = scalar_lea.vmem %s2, %s285
      %s287 = smul.u32 4, %s23
      %p288 = scmp.lt.s32.totalorder %s22, 1
      %s289 = scalar_select %p288, %s22, 1
      %p290 = scmp.lt.s32.totalorder %s21, 0
      %s291 = scalar_select %p290, %s21, 0
      %s292 = sadd.s32 %s291, %s289
      %s293 = scalar_lea.vmem %s3, %s292
      %p294 = scmp.lt.s32.totalorder %s22, 1
      %s295 = scalar_select %p294, %s22, 1
      %p296 = scmp.lt.s32.totalorder %s21, 0
      %s297 = scalar_select %p296, %s21, 0
      %s298 = sadd.s32 %s297, %s295
      %s299 = scalar_lea.vmem %s4, %s298
      %v301 = vld [vmem:[%s270] sm:$0xf]
      %v302 = vld [vmem:[%s270 + $0x8] sm:$0xf]
      %v303 = vld [vmem:[%s270 + $0x10] sm:$0xf]
      %v304 = vld [vmem:[%s270 + $0x18] sm:$0xf]
      %v305 = vld [vmem:[%s274] sm:$0xf]
      %v306 = vld [vmem:[%s274 + $0x4] sm:$0xf]
      %v307 = vld [vmem:[%s274 + $0x8] sm:$0xf]
      %v308 = vld [vmem:[%s274 + $0xc] sm:$0xf]
      %v309 = vld [vmem:[%s274 + $0x10] sm:$0xf]
      %v310 = vld [vmem:[%s274 + $0x14] sm:$0xf]
      %v311 = vld [vmem:[%s274 + $0x18] sm:$0xf]
      %v312 = vld [vmem:[%s274 + $0x1c] sm:$0xf]
      %v313 = vld [vmem:[%s274 + $0x20] sm:$0xf]
      %v314 = vld [vmem:[%s274 + $0x24] sm:$0xf]
      %v315 = vld [vmem:[%s274 + $0x28] sm:$0xf]
      %v316 = vld [vmem:[%s274 + $0x2c] sm:$0xf]
      %v317 = vld [vmem:[%s274 + $0x30] sm:$0xf]
      %v318 = vld [vmem:[%s274 + $0x34] sm:$0xf]
      %v319 = vld [vmem:[%s274 + $0x38] sm:$0xf]
      %v320 = vld [vmem:[%s274 + $0x3c] sm:$0xf]
      %v325 = vunpack.c.l.b16 %v301
      %v326 = vunpack.c.l.b16 %v302
      %v327 = vunpack.c.l.b16 %v303
      %v328 = vunpack.c.l.b16 %v304
      %v329 = vpack.c.b16 %v326, %v325
      %v330 = vpack.c.b16 %v328, %v327
      %v349 = vunpack.c.l.b16 %v305
      %v350 = vunpack.c.l.b16 %v306
      %v351 = vunpack.c.l.b16 %v307
      %v352 = vunpack.c.l.b16 %v308
      %v353 = vunpack.c.l.b16 %v309
      %v354 = vunpack.c.l.b16 %v310
      %v355 = vunpack.c.l.b16 %v311
      %v356 = vunpack.c.l.b16 %v312
      %v357 = vunpack.c.l.b16 %v313
      %v358 = vunpack.c.l.b16 %v314
      %v359 = vunpack.c.l.b16 %v315
      %v360 = vunpack.c.l.b16 %v316
      %v361 = vunpack.c.l.b16 %v317
      %v362 = vunpack.c.l.b16 %v318
      %v363 = vunpack.c.l.b16 %v319
      %v364 = vunpack.c.l.b16 %v320
      %v365 = vpack.c.b16 %v350, %v349
      %v366 = vpack.c.b16 %v352, %v351
      %v367 = vpack.c.b16 %v354, %v353
      %v368 = vpack.c.b16 %v356, %v355
      %v369 = vpack.c.b16 %v358, %v357
      %v370 = vpack.c.b16 %v360, %v359
      %v371 = vpack.c.b16 %v362, %v361
      %v372 = vpack.c.b16 %v364, %v363
      %381 = vmatprep.subr.bf16.mxu0 0
      %382 = vmatpush1.bf16.msra.mxu0 %v372
      %383 = vmatprep.subr.bf16.mxu0 0
      %384 = vmatpush1.bf16.msra.mxu0 %v371
      %385 = vmatprep.subr.bf16.mxu0 0
      %386 = vmatpush1.bf16.msra.mxu0 %v370
      %387 = vmatprep.subr.bf16.mxu0 0
      %388 = vmatpush1.bf16.msra.mxu0 %v369
      %389 = vmatprep.subr.bf16.mxu0 0
      %390 = vmatpush1.bf16.msra.mxu0 %v368
      %391 = vmatprep.subr.bf16.mxu0 0
      %392 = vmatpush1.bf16.msra.mxu0 %v367
      %393 = vmatprep.subr.bf16.mxu0 0
      %394 = vmatpush1.bf16.msra.mxu0 %v366
      %395 = vmatprep.subr.bf16.mxu0 0
      %396 = vmatpush1.bf16.msra.mxu0 %v365
      %397 = vmatprep.subr.bf16.mxu0 0
      %398 = vmatpush2.bf16.msra.mxu0 0
      %399 = vmatprep.subr.bf16.mxu0 0
      %400 = vmatpush2.bf16.msra.mxu0 0
      %401 = vmatprep.subr.bf16.mxu0 0
      %402 = vmatpush2.bf16.msra.mxu0 0
      %403 = vmatprep.subr.bf16.mxu0 0
      %404 = vmatpush2.bf16.msra.mxu0 0
      %405 = vmatprep.subr.bf16.mxu0 0
      %406 = vmatpush2.bf16.msra.mxu0 0
      %407 = vmatprep.subr.bf16.mxu0 0
      %408 = vmatpush2.bf16.msra.mxu0 0
      %409 = vmatprep.subr.bf16.mxu0 0
      %410 = vmatpush2.bf16.msra.mxu0 0
      %411 = vmatprep.subr.bf16.mxu0 0
      %412 = vmatpush2.bf16.msra.mxu0 0
      %413 = vmatprep.mubr.bf16.mxu0 0
      %414 = vmatmul.mubr.bf16.gmra.mxu0 %v329
      %v415 = vpop.f32.mrf.mxu0
      %v416 = vadd.f32 0.0, %v415
      %v417 = vpop.f32.mrf.mxu0
      %v418 = vpop.f32.mrf.mxu0
      %v419 = vadd.f32 0.0, %v418
      %v420 = vpop.f32.mrf.mxu0
      %421 = vmatprep.mubr.bf16.mxu0 0
      %422 = vmatmul.mubr.bf16.gmra.mxu0 %v330
      %v423 = vpop.f32.mrf.mxu0
      %v424 = vadd.f32 0.0, %v423
      %v425 = vpop.f32.mrf.mxu0
      %v426 = vpop.f32.mrf.mxu0
      %v427 = vadd.f32 0.0, %v426
      %v428 = vpop.f32.mrf.mxu0
      %429 = vdwg.mxu0
      %430 = vst [vmem:[#allocation2] sm:$0xff] %v416
      %431 = vst [vmem:[#allocation2 + $0x8] sm:$0xff] %v419
      %432 = vst [vmem:[#allocation2 + $0x10] sm:$0xff] %v424
      %433 = vst [vmem:[#allocation2 + $0x18] sm:$0xff] %v427
      %v434 = vld [vmem:[%s270] sm:$0xf]
      %v435 = vld [vmem:[%s270 + $0x4] sm:$0x1]
      %v436 = vld [vmem:[%s270 + $0x8] sm:$0xf]
      %v437 = vld [vmem:[%s270 + $0xc] sm:$0x1]
      %v438 = vld [vmem:[%s270 + $0x10] sm:$0xf]
      %v439 = vld [vmem:[%s270 + $0x14] sm:$0x1]
      %v440 = vld [vmem:[%s270 + $0x18] sm:$0xf]
      %v441 = vld [vmem:[%s270 + $0x1c] sm:$0x1]
      %vm442 = vsmask.f32 3328
      %vm443 = vsmask.f32 7440
      %vm444 = vmor %vm442, %vm443
      %v446 = vshrl.u32 %v434, 16
      %v448 = vrot.slane %v446, 4
      %v449 = vshll.u32 %v434, 16
      %v451 = vrot.slane %v449, 5
      %v452 = vor.u32 %v448, %v451
      %v453 = vrot.slane %v452, 4
      %v455 = vshll.u32 %v435, 16
      %v457 = vrot.slane %v455, 5
      %v458 = vsel %vm444, %v453, %v457
      %v460 = vshrl.u32 %v436, 16
      %v462 = vrot.slane %v460, 4
      %v463 = vshll.u32 %v436, 16
      %v465 = vrot.slane %v463, 5
      %v466 = vor.u32 %v462, %v465
      %v467 = vrot.slane %v466, 4
      %v469 = vshll.u32 %v437, 16
      %v471 = vrot.slane %v469, 5
      %v472 = vsel %vm444, %v467, %v471
      %v474 = vshrl.u32 %v438, 16
      %v476 = vrot.slane %v474, 4
      %v477 = vshll.u32 %v438, 16
      %v479 = vrot.slane %v477, 5
      %v480 = vor.u32 %v476, %v479
      %v481 = vrot.slane %v480, 4
      %v483 = vshll.u32 %v439, 16
      %v485 = vrot.slane %v483, 5
      %v486 = vsel %vm444, %v481, %v485
      %v488 = vshrl.u32 %v440, 16
      %v490 = vrot.slane %v488, 4
      %v491 = vshll.u32 %v440, 16
      %v493 = vrot.slane %v491, 5
      %v494 = vor.u32 %v490, %v493
      %v495 = vrot.slane %v494, 4
      %v497 = vshll.u32 %v441, 16
      %v499 = vrot.slane %v497, 5
      %v500 = vsel %vm444, %v495, %v499
      %s501 = scalar_lea.vmem %s274, 64
      %v502 = vld [vmem:[%s501] sm:$0xf]
      %v503 = vld [vmem:[%s501 + $0x4] sm:$0xf]
      %v504 = vld [vmem:[%s501 + $0x8] sm:$0xf]
      %v505 = vld [vmem:[%s501 + $0xc] sm:$0xf]
      %v506 = vld [vmem:[%s501 + $0x10] sm:$0xf]
      %v507 = vld [vmem:[%s501 + $0x14] sm:$0xf]
      %v508 = vld [vmem:[%s501 + $0x18] sm:$0xf]
      %v509 = vld [vmem:[%s501 + $0x1c] sm:$0xf]
      %v510 = vld [vmem:[%s501 + $0x20] sm:$0xf]
      %v511 = vld [vmem:[%s501 + $0x24] sm:$0xf]
      %v512 = vld [vmem:[%s501 + $0x28] sm:$0xf]
      %v513 = vld [vmem:[%s501 + $0x2c] sm:$0xf]
      %v514 = vld [vmem:[%s501 + $0x30] sm:$0xf]
      %v515 = vld [vmem:[%s501 + $0x34] sm:$0xf]
      %v516 = vld [vmem:[%s501 + $0x38] sm:$0xf]
      %v517 = vld [vmem:[%s501 + $0x3c] sm:$0xf]
      %v518 = vunpack.c.l.b16 %v458
      %v519 = vunpack.c.l.b16 %v472
      %v520 = vunpack.c.l.b16 %v486
      %v521 = vunpack.c.l.b16 %v500
      %v522 = vpack.c.b16 %v519, %v518
      %v523 = vpack.c.b16 %v521, %v520
      %v542 = vunpack.c.l.b16 %v502
      %v543 = vunpack.c.l.b16 %v503
      %v544 = vunpack.c.l.b16 %v504
      %v545 = vunpack.c.l.b16 %v505
      %v546 = vunpack.c.l.b16 %v506
      %v547 = vunpack.c.l.b16 %v507
      %v548 = vunpack.c.l.b16 %v508
      %v549 = vunpack.c.l.b16 %v509
      %v550 = vunpack.c.l.b16 %v510
      %v551 = vunpack.c.l.b16 %v511
      %v552 = vunpack.c.l.b16 %v512
      %v553 = vunpack.c.l.b16 %v513
      %v554 = vunpack.c.l.b16 %v514
      %v555 = vunpack.c.l.b16 %v515
      %v556 = vunpack.c.l.b16 %v516
      %v557 = vunpack.c.l.b16 %v517
      %v558 = vpack.c.b16 %v543, %v542
      %v559 = vpack.c.b16 %v545, %v544
      %v560 = vpack.c.b16 %v547, %v546
      %v561 = vpack.c.b16 %v549, %v548
      %v562 = vpack.c.b16 %v551, %v550
      %v563 = vpack.c.b16 %v553, %v552
      %v564 = vpack.c.b16 %v555, %v554
      %v565 = vpack.c.b16 %v557, %v556
      %574 = vmatprep.subr.bf16.mxu0 0
      %575 = vmatpush1.bf16.msra.mxu0 %v565
      %576 = vmatprep.subr.bf16.mxu0 0
      %577 = vmatpush1.bf16.msra.mxu0 %v564
      %578 = vmatprep.subr.bf16.mxu0 0
      %579 = vmatpush1.bf16.msra.mxu0 %v563
      %580 = vmatprep.subr.bf16.mxu0 0
      %581 = vmatpush1.bf16.msra.mxu0 %v562
      %582 = vmatprep.subr.bf16.mxu0 0
      %583 = vmatpush1.bf16.msra.mxu0 %v561
      %584 = vmatprep.subr.bf16.mxu0 0
      %585 = vmatpush1.bf16.msra.mxu0 %v560
      %586 = vmatprep.subr.bf16.mxu0 0
      %587 = vmatpush1.bf16.msra.mxu0 %v559
      %588 = vmatprep.subr.bf16.mxu0 0
      %589 = vmatpush1.bf16.msra.mxu0 %v558
      %590 = vmatprep.subr.bf16.mxu0 0
      %591 = vmatpush2.bf16.msra.mxu0 0
      %592 = vmatprep.subr.bf16.mxu0 0
      %593 = vmatpush2.bf16.msra.mxu0 0
      %594 = vmatprep.subr.bf16.mxu0 0
      %595 = vmatpush2.bf16.msra.mxu0 0
      %596 = vmatprep.subr.bf16.mxu0 0
      %597 = vmatpush2.bf16.msra.mxu0 0
      %598 = vmatprep.subr.bf16.mxu0 0
      %599 = vmatpush2.bf16.msra.mxu0 0
      %600 = vmatprep.subr.bf16.mxu0 0
      %601 = vmatpush2.bf16.msra.mxu0 0
      %602 = vmatprep.subr.bf16.mxu0 0
      %603 = vmatpush2.bf16.msra.mxu0 0
      %604 = vmatprep.subr.bf16.mxu0 0
      %605 = vmatpush2.bf16.msra.mxu0 0
      %606 = vmatprep.mubr.bf16.mxu0 0
      %607 = vmatmul.mubr.bf16.gmra.mxu0 %v522
      %v608 = vpop.f32.mrf.mxu0
      %v609 = vadd.f32 0.0, %v608
      %v610 = vpop.f32.mrf.mxu0
      %v611 = vpop.f32.mrf.mxu0
      %v612 = vadd.f32 0.0, %v611
      %v613 = vpop.f32.mrf.mxu0
      %614 = vmatprep.mubr.bf16.mxu0 0
      %615 = vmatmul.mubr.bf16.gmra.mxu0 %v523
      %v616 = vpop.f32.mrf.mxu0
      %v617 = vadd.f32 0.0, %v616
      %v618 = vpop.f32.mrf.mxu0
      %v619 = vpop.f32.mrf.mxu0
      %v620 = vadd.f32 0.0, %v619
      %v621 = vpop.f32.mrf.mxu0
      %622 = vdwg.mxu0
      %v623 = vld [vmem:[#allocation2] sm:$0xff]
      %v624 = vld [vmem:[#allocation2 + $0x8] sm:$0xff]
      %v625 = vld [vmem:[#allocation2 + $0x10] sm:$0xff]
      %v626 = vld [vmem:[#allocation2 + $0x18] sm:$0xff]
      %v627 = vadd.f32 %v623, %v609
      %v628 = vadd.f32 %v624, %v612
      %v629 = vadd.f32 %v625, %v617
      %v630 = vadd.f32 %v626, %v620
      %631 = vst [vmem:[#allocation2] sm:$0xff] %v627
      %632 = vst [vmem:[#allocation2 + $0x8] sm:$0xff] %v628
      %633 = vst [vmem:[#allocation2 + $0x10] sm:$0xff] %v629
      %634 = vst [vmem:[#allocation2 + $0x18] sm:$0xff] %v630
      %v635 = vld [vmem:[%s270] sm:$0xe]
      %v636 = vld [vmem:[%s270 + $0x4] sm:$0x1]
      %v637 = vld [vmem:[%s270 + $0x8] sm:$0xe]
      %v638 = vld [vmem:[%s270 + $0xc] sm:$0x1]
      %v639 = vld [vmem:[%s270 + $0x10] sm:$0xe]
      %v640 = vld [vmem:[%s270 + $0x14] sm:$0x1]
      %v641 = vld [vmem:[%s270 + $0x18] sm:$0xe]
      %v642 = vld [vmem:[%s270 + $0x1c] sm:$0x1]
      %vm651 = vcmask 1042432
      %vm652 = vcmask 1046532
      %vm653 = vmor %vm651, %vm652
      %v654 = vrot.slane %v635, 5
      %v655 = vrot.slane %v654, 4
      %v656 = vrot.slane %v636, 5
      %v657 = vsel %vm653, %v655, %v656
      %v658 = vrot.slane %v637, 5
      %v659 = vrot.slane %v658, 4
      %v660 = vrot.slane %v638, 5
      %v661 = vsel %vm653, %v659, %v660
      %v662 = vrot.slane %v639, 5
      %v663 = vrot.slane %v662, 4
      %v664 = vrot.slane %v640, 5
      %v665 = vsel %vm653, %v663, %v664
      %v666 = vrot.slane %v641, 5
      %v667 = vrot.slane %v666, 4
      %v668 = vrot.slane %v642, 5
      %v669 = vsel %vm653, %v667, %v668
      %s670 = scalar_lea.vmem %s274, 128
      %v671 = vld [vmem:[%s670] sm:$0xf]
      %v672 = vld [vmem:[%s670 + $0x4] sm:$0xf]
      %v673 = vld [vmem:[%s670 + $0x8] sm:$0xf]
      %v674 = vld [vmem:[%s670 + $0xc] sm:$0xf]
      %v675 = vld [vmem:[%s670 + $0x10] sm:$0xf]
      %v676 = vld [vmem:[%s670 + $0x14] sm:$0xf]
      %v677 = vld [vmem:[%s670 + $0x18] sm:$0xf]
      %v678 = vld [vmem:[%s670 + $0x1c] sm:$0xf]
      %v679 = vld [vmem:[%s670 + $0x20] sm:$0xf]
      %v680 = vld [vmem:[%s670 + $0x24] sm:$0xf]
      %v681 = vld [vmem:[%s670 + $0x28] sm:$0xf]
      %v682 = vld [vmem:[%s670 + $0x2c] sm:$0xf]
      %v683 = vld [vmem:[%s670 + $0x30] sm:$0xf]
      %v684 = vld [vmem:[%s670 + $0x34] sm:$0xf]
      %v685 = vld [vmem:[%s670 + $0x38] sm:$0xf]
      %v686 = vld [vmem:[%s670 + $0x3c] sm:$0xf]
      %v687 = vunpack.c.l.b16 %v657
      %v688 = vunpack.c.l.b16 %v661
      %v689 = vunpack.c.l.b16 %v665
      %v690 = vunpack.c.l.b16 %v669
      %v691 = vpack.c.b16 %v688, %v687
      %v692 = vpack.c.b16 %v690, %v689
      %v711 = vunpack.c.l.b16 %v671
      %v712 = vunpack.c.l.b16 %v672
      %v713 = vunpack.c.l.b16 %v673
      %v714 = vunpack.c.l.b16 %v674
      %v715 = vunpack.c.l.b16 %v675
      %v716 = vunpack.c.l.b16 %v676
      %v717 = vunpack.c.l.b16 %v677
      %v718 = vunpack.c.l.b16 %v678
      %v719 = vunpack.c.l.b16 %v679
      %v720 = vunpack.c.l.b16 %v680
      %v721 = vunpack.c.l.b16 %v681
      %v722 = vunpack.c.l.b16 %v682
      %v723 = vunpack.c.l.b16 %v683
      %v724 = vunpack.c.l.b16 %v684
      %v725 = vunpack.c.l.b16 %v685
      %v726 = vunpack.c.l.b16 %v686
      %v727 = vpack.c.b16 %v712, %v711
      %v728 = vpack.c.b16 %v714, %v713
      %v729 = vpack.c.b16 %v716, %v715
      %v730 = vpack.c.b16 %v718, %v717
      %v731 = vpack.c.b16 %v720, %v719
      %v732 = vpack.c.b16 %v722, %v721
      %v733 = vpack.c.b16 %v724, %v723
      %v734 = vpack.c.b16 %v726, %v725
      %743 = vmatprep.subr.bf16.mxu0 0
      %744 = vmatpush1.bf16.msra.mxu0 %v734
      %745 = vmatprep.subr.bf16.mxu0 0
      %746 = vmatpush1.bf16.msra.mxu0 %v733
      %747 = vmatprep.subr.bf16.mxu0 0
      %748 = vmatpush1.bf16.msra.mxu0 %v732
      %749 = vmatprep.subr.bf16.mxu0 0
      %750 = vmatpush1.bf16.msra.mxu0 %v731
      %751 = vmatprep.subr.bf16.mxu0 0
      %752 = vmatpush1.bf16.msra.mxu0 %v730
      %753 = vmatprep.subr.bf16.mxu0 0
      %754 = vmatpush1.bf16.msra.mxu0 %v729
      %755 = vmatprep.subr.bf16.mxu0 0
      %756 = vmatpush1.bf16.msra.mxu0 %v728
      %757 = vmatprep.subr.bf16.mxu0 0
      %758 = vmatpush1.bf16.msra.mxu0 %v727
      %759 = vmatprep.subr.bf16.mxu0 0
      %760 = vmatpush2.bf16.msra.mxu0 0
      %761 = vmatprep.subr.bf16.mxu0 0
      %762 = vmatpush2.bf16.msra.mxu0 0
      %763 = vmatprep.subr.bf16.mxu0 0
      %764 = vmatpush2.bf16.msra.mxu0 0
      %765 = vmatprep.subr.bf16.mxu0 0
      %766 = vmatpush2.bf16.msra.mxu0 0
      %767 = vmatprep.subr.bf16.mxu0 0
      %768 = vmatpush2.bf16.msra.mxu0 0
      %769 = vmatprep.subr.bf16.mxu0 0
      %770 = vmatpush2.bf16.msra.mxu0 0
      %771 = vmatprep.subr.bf16.mxu0 0
      %772 = vmatpush2.bf16.msra.mxu0 0
      %773 = vmatprep.subr.bf16.mxu0 0
      %774 = vmatpush2.bf16.msra.mxu0 0
      %775 = vmatprep.mubr.bf16.mxu0 0
      %776 = vmatmul.mubr.bf16.gmra.mxu0 %v691
      %v777 = vpop.f32.mrf.mxu0
      %v778 = vadd.f32 0.0, %v777
      %v779 = vpop.f32.mrf.mxu0
      %v780 = vpop.f32.mrf.mxu0
      %v781 = vadd.f32 0.0, %v780
      %v782 = vpop.f32.mrf.mxu0
      %783 = vmatprep.mubr.bf16.mxu0 0
      %784 = vmatmul.mubr.bf16.gmra.mxu0 %v692
      %v785 = vpop.f32.mrf.mxu0
      %v786 = vadd.f32 0.0, %v785
      %v787 = vpop.f32.mrf.mxu0
      %v788 = vpop.f32.mrf.mxu0
      %v789 = vadd.f32 0.0, %v788
      %v790 = vpop.f32.mrf.mxu0
      %791 = vdwg.mxu0
      %v792 = vld [vmem:[#allocation2] sm:$0xff]
      %v793 = vld [vmem:[#allocation2 + $0x8] sm:$0xff]
      %v794 = vld [vmem:[#allocation2 + $0x10] sm:$0xff]
      %v795 = vld [vmem:[#allocation2 + $0x18] sm:$0xff]
      %v796 = vadd.f32 %v792, %v778
      %v797 = vadd.f32 %v793, %v781
      %v798 = vadd.f32 %v794, %v786
      %v799 = vadd.f32 %v795, %v789
      %800 = vst [vmem:[#allocation2] sm:$0xff] %v796
      %801 = vst [vmem:[#allocation2 + $0x8] sm:$0xff] %v797
      %802 = vst [vmem:[#allocation2 + $0x10] sm:$0xff] %v798
      %803 = vst [vmem:[#allocation2 + $0x18] sm:$0xff] %v799
      %s804 = scalar_lea.vmem %s270, 8
      %v805 = vld [vmem:[%s804] sm:$0xf]
      %v806 = vld [vmem:[%s804 + $0x8] sm:$0xf]
      %v807 = vld [vmem:[%s804 + $0x10] sm:$0xf]
      %v808 = vld [vmem:[%s804 + $0x18] sm:$0xf]
      %s809 = scalar_lea.vmem %s274, 192
      %v810 = vld [vmem:[%s809] sm:$0xf]
      %v811 = vld [vmem:[%s809 + $0x4] sm:$0xf]
      %v812 = vld [vmem:[%s809 + $0x8] sm:$0xf]
      %v813 = vld [vmem:[%s809 + $0xc] sm:$0xf]
      %v814 = vld [vmem:[%s809 + $0x10] sm:$0xf]
      %v815 = vld [vmem:[%s809 + $0x14] sm:$0xf]
      %v816 = vld [vmem:[%s809 + $0x18] sm:$0xf]
      %v817 = vld [vmem:[%s809 + $0x1c] sm:$0xf]
      %v818 = vld [vmem:[%s809 + $0x20] sm:$0xf]
      %v819 = vld [vmem:[%s809 + $0x24] sm:$0xf]
      %v820 = vld [vmem:[%s809 + $0x28] sm:$0xf]
      %v821 = vld [vmem:[%s809 + $0x2c] sm:$0xf]
      %v822 = vld [vmem:[%s809 + $0x30] sm:$0xf]
      %v823 = vld [vmem:[%s809 + $0x34] sm:$0xf]
      %v824 = vld [vmem:[%s809 + $0x38] sm:$0xf]
      %v825 = vld [vmem:[%s809 + $0x3c] sm:$0xf]
      %v830 = vunpack.c.l.b16 %v805
      %v831 = vunpack.c.l.b16 %v806
      %v832 = vunpack.c.l.b16 %v807
      %v833 = vunpack.c.l.b16 %v808
      %v834 = vpack.c.b16 %v831, %v830
      %v835 = vpack.c.b16 %v833, %v832
      %v854 = vunpack.c.l.b16 %v810
      %v855 = vunpack.c.l.b16 %v811
      %v856 = vunpack.c.l.b16 %v812
      %v857 = vunpack.c.l.b16 %v813
      %v858 = vunpack.c.l.b16 %v814
      %v859 = vunpack.c.l.b16 %v815
      %v860 = vunpack.c.l.b16 %v816
      %v861 = vunpack.c.l.b16 %v817
      %v862 = vunpack.c.l.b16 %v818
      %v863 = vunpack.c.l.b16 %v819
      %v864 = vunpack.c.l.b16 %v820
      %v865 = vunpack.c.l.b16 %v821
      %v866 = vunpack.c.l.b16 %v822
      %v867 = vunpack.c.l.b16 %v823
      %v868 = vunpack.c.l.b16 %v824
      %v869 = vunpack.c.l.b16 %v825
      %v870 = vpack.c.b16 %v855, %v854
      %v871 = vpack.c.b16 %v857, %v856
      %v872 = vpack.c.b16 %v859, %v858
      %v873 = vpack.c.b16 %v861, %v860
      %v874 = vpack.c.b16 %v863, %v862
      %v875 = vpack.c.b16 %v865, %v864
      %v876 = vpack.c.b16 %v867, %v866
      %v877 = vpack.c.b16 %v869, %v868
      %886 = vmatprep.subr.bf16.mxu0 0
      %887 = vmatpush1.bf16.msra.mxu0 %v877
      %888 = vmatprep.subr.bf16.mxu0 0
      %889 = vmatpush1.bf16.msra.mxu0 %v876
      %890 = vmatprep.subr.bf16.mxu0 0
      %891 = vmatpush1.bf16.msra.mxu0 %v875
      %892 = vmatprep.subr.bf16.mxu0 0
      %893 = vmatpush1.bf16.msra.mxu0 %v874
      %894 = vmatprep.subr.bf16.mxu0 0
      %895 = vmatpush1.bf16.msra.mxu0 %v873
      %896 = vmatprep.subr.bf16.mxu0 0
      %897 = vmatpush1.bf16.msra.mxu0 %v872
      %898 = vmatprep.subr.bf16.mxu0 0
      %899 = vmatpush1.bf16.msra.mxu0 %v871
      %900 = vmatprep.subr.bf16.mxu0 0
      %901 = vmatpush1.bf16.msra.mxu0 %v870
      %902 = vmatprep.subr.bf16.mxu0 0
      %903 = vmatpush2.bf16.msra.mxu0 0
      %904 = vmatprep.subr.bf16.mxu0 0
      %905 = vmatpush2.bf16.msra.mxu0 0
      %906 = vmatprep.subr.bf16.mxu0 0
      %907 = vmatpush2.bf16.msra.mxu0 0
      %908 = vmatprep.subr.bf16.mxu0 0
      %909 = vmatpush2.bf16.msra.mxu0 0
      %910 = vmatprep.subr.bf16.mxu0 0
      %911 = vmatpush2.bf16.msra.mxu0 0
      %912 = vmatprep.subr.bf16.mxu0 0
      %913 = vmatpush2.bf16.msra.mxu0 0
      %914 = vmatprep.subr.bf16.mxu0 0
      %915 = vmatpush2.bf16.msra.mxu0 0
      %916 = vmatprep.subr.bf16.mxu0 0
      %917 = vmatpush2.bf16.msra.mxu0 0
      %918 = vmatprep.mubr.bf16.mxu0 0
      %919 = vmatmul.mubr.bf16.gmra.mxu0 %v834
      %v920 = vpop.f32.mrf.mxu0
      %v921 = vadd.f32 0.0, %v920
      %v922 = vpop.f32.mrf.mxu0
      %v923 = vpop.f32.mrf.mxu0
      %v924 = vadd.f32 0.0, %v923
      %v925 = vpop.f32.mrf.mxu0
      %926 = vmatprep.mubr.bf16.mxu0 0
      %927 = vmatmul.mubr.bf16.gmra.mxu0 %v835
      %v928 = vpop.f32.mrf.mxu0
      %v929 = vadd.f32 0.0, %v928
      %v930 = vpop.f32.mrf.mxu0
      %v931 = vpop.f32.mrf.mxu0
      %v932 = vadd.f32 0.0, %v931
      %v933 = vpop.f32.mrf.mxu0
      %934 = vdwg.mxu0
      %v935 = vld [vmem:[#allocation2] sm:$0xff]
      %v936 = vld [vmem:[#allocation2 + $0x8] sm:$0xff]
      %v937 = vld [vmem:[#allocation2 + $0x10] sm:$0xff]
      %v938 = vld [vmem:[#allocation2 + $0x18] sm:$0xff]
      %v939 = vadd.f32 %v935, %v921
      %v940 = vadd.f32 %v936, %v924
      %v941 = vadd.f32 %v937, %v929
      %v942 = vadd.f32 %v938, %v932
      %943 = vst [vmem:[#allocation2] sm:$0xff] %v939
      %944 = vst [vmem:[#allocation2 + $0x8] sm:$0xff] %v940
      %945 = vst [vmem:[#allocation2 + $0x10] sm:$0xff] %v941
      %946 = vst [vmem:[#allocation2 + $0x18] sm:$0xff] %v942
      %v947 = vld [vmem:[%s804] sm:$0xf]
      %v948 = vld [vmem:[%s804 + $0x4] sm:$0x1]
      %v949 = vld [vmem:[%s804 + $0x8] sm:$0xf]
      %v950 = vld [vmem:[%s804 + $0xc] sm:$0x1]
      %v951 = vld [vmem:[%s804 + $0x10] sm:$0xf]
      %v952 = vld [vmem:[%s804 + $0x14] sm:$0x1]
      %v953 = vld [vmem:[%s804 + $0x18] sm:$0xf]
      %v954 = vld [vmem:[%s804 + $0x1c] sm:$0x1]
      %v956 = vshrl.u32 %v947, 16
      %v958 = vrot.slane %v956, 4
      %v959 = vshll.u32 %v947, 16
      %v961 = vrot.slane %v959, 5
      %v962 = vor.u32 %v958, %v961
      %v963 = vrot.slane %v962, 4
      %v965 = vshll.u32 %v948, 16
      %v967 = vrot.slane %v965, 5
      %v968 = vsel %vm444, %v963, %v967
      %v970 = vshrl.u32 %v949, 16
      %v972 = vrot.slane %v970, 4
      %v973 = vshll.u32 %v949, 16
      %v975 = vrot.slane %v973, 5
      %v976 = vor.u32 %v972, %v975
      %v977 = vrot.slane %v976, 4
      %v979 = vshll.u32 %v950, 16
      %v981 = vrot.slane %v979, 5
      %v982 = vsel %vm444, %v977, %v981
      %v984 = vshrl.u32 %v951, 16
      %v986 = vrot.slane %v984, 4
      %v987 = vshll.u32 %v951, 16
      %v989 = vrot.slane %v987, 5
      %v990 = vor.u32 %v986, %v989
      %v991 = vrot.slane %v990, 4
      %v993 = vshll.u32 %v952, 16
      %v995 = vrot.slane %v993, 5
      %v996 = vsel %vm444, %v991, %v995
      %v998 = vshrl.u32 %v953, 16
      %v1000 = vrot.slane %v998, 4
      %v1001 = vshll.u32 %v953, 16
      %v1003 = vrot.slane %v1001, 5
      %v1004 = vor.u32 %v1000, %v1003
      %v1005 = vrot.slane %v1004, 4
      %v1007 = vshll.u32 %v954, 16
      %v1009 = vrot.slane %v1007, 5
      %v1010 = vsel %vm444, %v1005, %v1009
      %s1011 = scalar_lea.vmem %s274, 256
      %v1012 = vld [vmem:[%s1011] sm:$0xf]
      %v1013 = vld [vmem:[%s1011 + $0x4] sm:$0xf]
      %v1014 = vld [vmem:[%s1011 + $0x8] sm:$0xf]
      %v1015 = vld [vmem:[%s1011 + $0xc] sm:$0xf]
      %v1016 = vld [vmem:[%s1011 + $0x10] sm:$0xf]
      %v1017 = vld [vmem:[%s1011 + $0x14] sm:$0xf]
      %v1018 = vld [vmem:[%s1011 + $0x18] sm:$0xf]
      %v1019 = vld [vmem:[%s1011 + $0x1c] sm:$0xf]
      %v1020 = vld [vmem:[%s1011 + $0x20] sm:$0xf]
      %v1021 = vld [vmem:[%s1011 + $0x24] sm:$0xf]
      %v1022 = vld [vmem:[%s1011 + $0x28] sm:$0xf]
      %v1023 = vld [vmem:[%s1011 + $0x2c] sm:$0xf]
      %v1024 = vld [vmem:[%s1011 + $0x30] sm:$0xf]
      %v1025 = vld [vmem:[%s1011 + $0x34] sm:$0xf]
      %v1026 = vld [vmem:[%s1011 + $0x38] sm:$0xf]
      %v1027 = vld [vmem:[%s1011 + $0x3c] sm:$0xf]
      %v1028 = vunpack.c.l.b16 %v968
      %v1029 = vunpack.c.l.b16 %v982
      %v1030 = vunpack.c.l.b16 %v996
      %v1031 = vunpack.c.l.b16 %v1010
      %v1032 = vpack.c.b16 %v1029, %v1028
      %v1033 = vpack.c.b16 %v1031, %v1030
      %v1052 = vunpack.c.l.b16 %v1012
      %v1053 = vunpack.c.l.b16 %v1013
      %v1054 = vunpack.c.l.b16 %v1014
      %v1055 = vunpack.c.l.b16 %v1015
      %v1056 = vunpack.c.l.b16 %v1016
      %v1057 = vunpack.c.l.b16 %v1017
      %v1058 = vunpack.c.l.b16 %v1018
      %v1059 = vunpack.c.l.b16 %v1019
      %v1060 = vunpack.c.l.b16 %v1020
      %v1061 = vunpack.c.l.b16 %v1021
      %v1062 = vunpack.c.l.b16 %v1022
      %v1063 = vunpack.c.l.b16 %v1023
      %v1064 = vunpack.c.l.b16 %v1024
      %v1065 = vunpack.c.l.b16 %v1025
      %v1066 = vunpack.c.l.b16 %v1026
      %v1067 = vunpack.c.l.b16 %v1027
      %v1068 = vpack.c.b16 %v1053, %v1052
      %v1069 = vpack.c.b16 %v1055, %v1054
      %v1070 = vpack.c.b16 %v1057, %v1056
      %v1071 = vpack.c.b16 %v1059, %v1058
      %v1072 = vpack.c.b16 %v1061, %v1060
      %v1073 = vpack.c.b16 %v1063, %v1062
      %v1074 = vpack.c.b16 %v1065, %v1064
      %v1075 = vpack.c.b16 %v1067, %v1066
      %1084 = vmatprep.subr.bf16.mxu0 0
      %1085 = vmatpush1.bf16.msra.mxu0 %v1075
      %1086 = vmatprep.subr.bf16.mxu0 0
      %1087 = vmatpush1.bf16.msra.mxu0 %v1074
      %1088 = vmatprep.subr.bf16.mxu0 0
      %1089 = vmatpush1.bf16.msra.mxu0 %v1073
      %1090 = vmatprep.subr.bf16.mxu0 0
      %1091 = vmatpush1.bf16.msra.mxu0 %v1072
      %1092 = vmatprep.subr.bf16.mxu0 0
      %1093 = vmatpush1.bf16.msra.mxu0 %v1071
      %1094 = vmatprep.subr.bf16.mxu0 0
      %1095 = vmatpush1.bf16.msra.mxu0 %v1070
      %1096 = vmatprep.subr.bf16.mxu0 0
      %1097 = vmatpush1.bf16.msra.mxu0 %v1069
      %1098 = vmatprep.subr.bf16.mxu0 0
      %1099 = vmatpush1.bf16.msra.mxu0 %v1068
      %1100 = vmatprep.subr.bf16.mxu0 0
      %1101 = vmatpush2.bf16.msra.mxu0 0
      %1102 = vmatprep.subr.bf16.mxu0 0
      %1103 = vmatpush2.bf16.msra.mxu0 0
      %1104 = vmatprep.subr.bf16.mxu0 0
      %1105 = vmatpush2.bf16.msra.mxu0 0
      %1106 = vmatprep.subr.bf16.mxu0 0
      %1107 = vmatpush2.bf16.msra.mxu0 0
      %1108 = vmatprep.subr.bf16.mxu0 0
      %1109 = vmatpush2.bf16.msra.mxu0 0
      %1110 = vmatprep.subr.bf16.mxu0 0
      %1111 = vmatpush2.bf16.msra.mxu0 0
      %1112 = vmatprep.subr.bf16.mxu0 0
      %1113 = vmatpush2.bf16.msra.mxu0 0
      %1114 = vmatprep.subr.bf16.mxu0 0
      %1115 = vmatpush2.bf16.msra.mxu0 0
      %1116 = vmatprep.mubr.bf16.mxu0 0
      %1117 = vmatmul.mubr.bf16.gmra.mxu0 %v1032
      %v1118 = vpop.f32.mrf.mxu0
      %v1119 = vadd.f32 0.0, %v1118
      %v1120 = vpop.f32.mrf.mxu0
      %v1121 = vpop.f32.mrf.mxu0
      %v1122 = vadd.f32 0.0, %v1121
      %v1123 = vpop.f32.mrf.mxu0
      %1124 = vmatprep.mubr.bf16.mxu0 0
      %1125 = vmatmul.mubr.bf16.gmra.mxu0 %v1033
      %v1126 = vpop.f32.mrf.mxu0
      %v1127 = vadd.f32 0.0, %v1126
      %v1128 = vpop.f32.mrf.mxu0
      %v1129 = vpop.f32.mrf.mxu0
      %v1130 = vadd.f32 0.0, %v1129
      %v1131 = vpop.f32.mrf.mxu0
      %1132 = vdwg.mxu0
      %v1133 = vld [vmem:[#allocation2] sm:$0xff]
      %v1134 = vld [vmem:[#allocation2 + $0x8] sm:$0xff]
      %v1135 = vld [vmem:[#allocation2 + $0x10] sm:$0xff]
      %v1136 = vld [vmem:[#allocation2 + $0x18] sm:$0xff]
      %v1137 = vadd.f32 %v1133, %v1119
      %v1138 = vadd.f32 %v1134, %v1122
      %v1139 = vadd.f32 %v1135, %v1127
      %v1140 = vadd.f32 %v1136, %v1130
      %1141 = vst [vmem:[#allocation2] sm:$0xff] %v1137
      %1142 = vst [vmem:[#allocation2 + $0x8] sm:$0xff] %v1138
      %1143 = vst [vmem:[#allocation2 + $0x10] sm:$0xff] %v1139
      %1144 = vst [vmem:[#allocation2 + $0x18] sm:$0xff] %v1140
      %v1145 = vld [vmem:[%s804] sm:$0xe]
      %v1146 = vld [vmem:[%s804 + $0x4] sm:$0x1]
      %v1147 = vld [vmem:[%s804 + $0x8] sm:$0xe]
      %v1148 = vld [vmem:[%s804 + $0xc] sm:$0x1]
      %v1149 = vld [vmem:[%s804 + $0x10] sm:$0xe]
      %v1150 = vld [vmem:[%s804 + $0x14] sm:$0x1]
      %v1151 = vld [vmem:[%s804 + $0x18] sm:$0xe]
      %v1152 = vld [vmem:[%s804 + $0x1c] sm:$0x1]
      %v1161 = vrot.slane %v1145, 5
      %v1162 = vrot.slane %v1161, 4
      %v1163 = vrot.slane %v1146, 5
      %v1164 = vsel %vm653, %v1162, %v1163
      %v1165 = vrot.slane %v1147, 5
      %v1166 = vrot.slane %v1165, 4
      %v1167 = vrot.slane %v1148, 5
      %v1168 = vsel %vm653, %v1166, %v1167
      %v1169 = vrot.slane %v1149, 5
      %v1170 = vrot.slane %v1169, 4
      %v1171 = vrot.slane %v1150, 5
      %v1172 = vsel %vm653, %v1170, %v1171
      %v1173 = vrot.slane %v1151, 5
      %v1174 = vrot.slane %v1173, 4
      %v1175 = vrot.slane %v1152, 5
      %v1176 = vsel %vm653, %v1174, %v1175
      %s1177 = scalar_lea.vmem %s274, 320
      %v1178 = vld [vmem:[%s1177] sm:$0xf]
      %v1179 = vld [vmem:[%s1177 + $0x4] sm:$0xf]
      %v1180 = vld [vmem:[%s1177 + $0x8] sm:$0xf]
      %v1181 = vld [vmem:[%s1177 + $0xc] sm:$0xf]
      %v1182 = vld [vmem:[%s1177 + $0x10] sm:$0xf]
      %v1183 = vld [vmem:[%s1177 + $0x14] sm:$0xf]
      %v1184 = vld [vmem:[%s1177 + $0x18] sm:$0xf]
      %v1185 = vld [vmem:[%s1177 + $0x1c] sm:$0xf]
      %v1186 = vld [vmem:[%s1177 + $0x20] sm:$0xf]
      %v1187 = vld [vmem:[%s1177 + $0x24] sm:$0xf]
      %v1188 = vld [vmem:[%s1177 + $0x28] sm:$0xf]
      %v1189 = vld [vmem:[%s1177 + $0x2c] sm:$0xf]
      %v1190 = vld [vmem:[%s1177 + $0x30] sm:$0xf]
      %v1191 = vld [vmem:[%s1177 + $0x34] sm:$0xf]
      %v1192 = vld [vmem:[%s1177 + $0x38] sm:$0xf]
      %v1193 = vld [vmem:[%s1177 + $0x3c] sm:$0xf]
      %v1194 = vunpack.c.l.b16 %v1164
      %v1195 = vunpack.c.l.b16 %v1168
      %v1196 = vunpack.c.l.b16 %v1172
      %v1197 = vunpack.c.l.b16 %v1176
      %v1198 = vpack.c.b16 %v1195, %v1194
      %v1199 = vpack.c.b16 %v1197, %v1196
      %v1218 = vunpack.c.l.b16 %v1178
      %v1219 = vunpack.c.l.b16 %v1179
      %v1220 = vunpack.c.l.b16 %v1180
      %v1221 = vunpack.c.l.b16 %v1181
      %v1222 = vunpack.c.l.b16 %v1182
      %v1223 = vunpack.c.l.b16 %v1183
      %v1224 = vunpack.c.l.b16 %v1184
      %v1225 = vunpack.c.l.b16 %v1185
      %v1226 = vunpack.c.l.b16 %v1186
      %v1227 = vunpack.c.l.b16 %v1187
      %v1228 = vunpack.c.l.b16 %v1188
      %v1229 = vunpack.c.l.b16 %v1189
      %v1230 = vunpack.c.l.b16 %v1190
      %v1231 = vunpack.c.l.b16 %v1191
      %v1232 = vunpack.c.l.b16 %v1192
      %v1233 = vunpack.c.l.b16 %v1193
      %v1234 = vpack.c.b16 %v1219, %v1218
      %v1235 = vpack.c.b16 %v1221, %v1220
      %v1236 = vpack.c.b16 %v1223, %v1222
      %v1237 = vpack.c.b16 %v1225, %v1224
      %v1238 = vpack.c.b16 %v1227, %v1226
      %v1239 = vpack.c.b16 %v1229, %v1228
      %v1240 = vpack.c.b16 %v1231, %v1230
      %v1241 = vpack.c.b16 %v1233, %v1232
      %1250 = vmatprep.subr.bf16.mxu0 0
      %1251 = vmatpush1.bf16.msra.mxu0 %v1241
      %1252 = vmatprep.subr.bf16.mxu0 0
      %1253 = vmatpush1.bf16.msra.mxu0 %v1240
      %1254 = vmatprep.subr.bf16.mxu0 0
      %1255 = vmatpush1.bf16.msra.mxu0 %v1239
      %1256 = vmatprep.subr.bf16.mxu0 0
      %1257 = vmatpush1.bf16.msra.mxu0 %v1238
      %1258 = vmatprep.subr.bf16.mxu0 0
      %1259 = vmatpush1.bf16.msra.mxu0 %v1237
      %1260 = vmatprep.subr.bf16.mxu0 0
      %1261 = vmatpush1.bf16.msra.mxu0 %v1236
      %1262 = vmatprep.subr.bf16.mxu0 0
      %1263 = vmatpush1.bf16.msra.mxu0 %v1235
      %1264 = vmatprep.subr.bf16.mxu0 0
      %1265 = vmatpush1.bf16.msra.mxu0 %v1234
      %1266 = vmatprep.subr.bf16.mxu0 0
      %1267 = vmatpush2.bf16.msra.mxu0 0
      %1268 = vmatprep.subr.bf16.mxu0 0
      %1269 = vmatpush2.bf16.msra.mxu0 0
      %1270 = vmatprep.subr.bf16.mxu0 0
      %1271 = vmatpush2.bf16.msra.mxu0 0
      %1272 = vmatprep.subr.bf16.mxu0 0
      %1273 = vmatpush2.bf16.msra.mxu0 0
      %1274 = vmatprep.subr.bf16.mxu0 0
      %1275 = vmatpush2.bf16.msra.mxu0 0
      %1276 = vmatprep.subr.bf16.mxu0 0
      %1277 = vmatpush2.bf16.msra.mxu0 0
      %1278 = vmatprep.subr.bf16.mxu0 0
      %1279 = vmatpush2.bf16.msra.mxu0 0
      %1280 = vmatprep.subr.bf16.mxu0 0
      %1281 = vmatpush2.bf16.msra.mxu0 0
      %1282 = vmatprep.mubr.bf16.mxu0 0
      %1283 = vmatmul.mubr.bf16.gmra.mxu0 %v1198
      %v1284 = vpop.f32.mrf.mxu0
      %v1285 = vadd.f32 0.0, %v1284
      %v1286 = vpop.f32.mrf.mxu0
      %v1287 = vpop.f32.mrf.mxu0
      %v1288 = vadd.f32 0.0, %v1287
      %v1289 = vpop.f32.mrf.mxu0
      %1290 = vmatprep.mubr.bf16.mxu0 0
      %1291 = vmatmul.mubr.bf16.gmra.mxu0 %v1199
      %v1292 = vpop.f32.mrf.mxu0
      %v1293 = vadd.f32 0.0, %v1292
      %v1294 = vpop.f32.mrf.mxu0
      %v1295 = vpop.f32.mrf.mxu0
      %v1296 = vadd.f32 0.0, %v1295
      %v1297 = vpop.f32.mrf.mxu0
      %1298 = vdwg.mxu0
      %v1299 = vld [vmem:[#allocation2] sm:$0xff]
      %v1300 = vld [vmem:[#allocation2 + $0x8] sm:$0xff]
      %v1301 = vld [vmem:[#allocation2 + $0x10] sm:$0xff]
      %v1302 = vld [vmem:[#allocation2 + $0x18] sm:$0xff]
      %v1303 = vadd.f32 %v1299, %v1285
      %v1304 = vadd.f32 %v1300, %v1288
      %v1305 = vadd.f32 %v1301, %v1293
      %v1306 = vadd.f32 %v1302, %v1296
      %1307 = vst [vmem:[#allocation2] sm:$0xff] %v1303
      %1308 = vst [vmem:[#allocation2 + $0x8] sm:$0xff] %v1304
      %1309 = vst [vmem:[#allocation2 + $0x10] sm:$0xff] %v1305
      %1310 = vst [vmem:[#allocation2 + $0x18] sm:$0xff] %v1306
      %s1311 = scalar_lea.vmem %s270, 16
      %v1312 = vld [vmem:[%s1311] sm:$0xf]
      %v1313 = vld [vmem:[%s1311 + $0x8] sm:$0xf]
      %v1314 = vld [vmem:[%s1311 + $0x10] sm:$0xf]
      %v1315 = vld [vmem:[%s1311 + $0x18] sm:$0xf]
      %s1316 = scalar_lea.vmem %s274, 384
      %v1317 = vld [vmem:[%s1316] sm:$0xf]
      %v1318 = vld [vmem:[%s1316 + $0x4] sm:$0xf]
      %v1319 = vld [vmem:[%s1316 + $0x8] sm:$0xf]
      %v1320 = vld [vmem:[%s1316 + $0xc] sm:$0xf]
      %v1321 = vld [vmem:[%s1316 + $0x10] sm:$0xf]
      %v1322 = vld [vmem:[%s1316 + $0x14] sm:$0xf]
      %v1323 = vld [vmem:[%s1316 + $0x18] sm:$0xf]
      %v1324 = vld [vmem:[%s1316 + $0x1c] sm:$0xf]
      %v1325 = vld [vmem:[%s1316 + $0x20] sm:$0xf]
      %v1326 = vld [vmem:[%s1316 + $0x24] sm:$0xf]
      %v1327 = vld [vmem:[%s1316 + $0x28] sm:$0xf]
      %v1328 = vld [vmem:[%s1316 + $0x2c] sm:$0xf]
      %v1329 = vld [vmem:[%s1316 + $0x30] sm:$0xf]
      %v1330 = vld [vmem:[%s1316 + $0x34] sm:$0xf]
      %v1331 = vld [vmem:[%s1316 + $0x38] sm:$0xf]
      %v1332 = vld [vmem:[%s1316 + $0x3c] sm:$0xf]
      %v1337 = vunpack.c.l.b16 %v1312
      %v1338 = vunpack.c.l.b16 %v1313
      %v1339 = vunpack.c.l.b16 %v1314
      %v1340 = vunpack.c.l.b16 %v1315
      %v1341 = vpack.c.b16 %v1338, %v1337
      %v1342 = vpack.c.b16 %v1340, %v1339
      %v1361 = vunpack.c.l.b16 %v1317
      %v1362 = vunpack.c.l.b16 %v1318
      %v1363 = vunpack.c.l.b16 %v1319
      %v1364 = vunpack.c.l.b16 %v1320
      %v1365 = vunpack.c.l.b16 %v1321
      %v1366 = vunpack.c.l.b16 %v1322
      %v1367 = vunpack.c.l.b16 %v1323
      %v1368 = vunpack.c.l.b16 %v1324
      %v1369 = vunpack.c.l.b16 %v1325
      %v1370 = vunpack.c.l.b16 %v1326
      %v1371 = vunpack.c.l.b16 %v1327
      %v1372 = vunpack.c.l.b16 %v1328
      %v1373 = vunpack.c.l.b16 %v1329
      %v1374 = vunpack.c.l.b16 %v1330
      %v1375 = vunpack.c.l.b16 %v1331
      %v1376 = vunpack.c.l.b16 %v1332
      %v1377 = vpack.c.b16 %v1362, %v1361
      %v1378 = vpack.c.b16 %v1364, %v1363
      %v1379 = vpack.c.b16 %v1366, %v1365
      %v1380 = vpack.c.b16 %v1368, %v1367
      %v1381 = vpack.c.b16 %v1370, %v1369
      %v1382 = vpack.c.b16 %v1372, %v1371
      %v1383 = vpack.c.b16 %v1374, %v1373
      %v1384 = vpack.c.b16 %v1376, %v1375
      %1393 = vmatprep.subr.bf16.mxu0 0
      %1394 = vmatpush1.bf16.msra.mxu0 %v1384
      %1395 = vmatprep.subr.bf16.mxu0 0
      %1396 = vmatpush1.bf16.msra.mxu0 %v1383
      %1397 = vmatprep.subr.bf16.mxu0 0
      %1398 = vmatpush1.bf16.msra.mxu0 %v1382
      %1399 = vmatprep.subr.bf16.mxu0 0
      %1400 = vmatpush1.bf16.msra.mxu0 %v1381
      %1401 = vmatprep.subr.bf16.mxu0 0
      %1402 = vmatpush1.bf16.msra.mxu0 %v1380
      %1403 = vmatprep.subr.bf16.mxu0 0
      %1404 = vmatpush1.bf16.msra.mxu0 %v1379
      %1405 = vmatprep.subr.bf16.mxu0 0
      %1406 = vmatpush1.bf16.msra.mxu0 %v1378
      %1407 = vmatprep.subr.bf16.mxu0 0
      %1408 = vmatpush1.bf16.msra.mxu0 %v1377
      %1409 = vmatprep.subr.bf16.mxu0 0
      %1410 = vmatpush2.bf16.msra.mxu0 0
      %1411 = vmatprep.subr.bf16.mxu0 0
      %1412 = vmatpush2.bf16.msra.mxu0 0
      %1413 = vmatprep.subr.bf16.mxu0 0
      %1414 = vmatpush2.bf16.msra.mxu0 0
      %1415 = vmatprep.subr.bf16.mxu0 0
      %1416 = vmatpush2.bf16.msra.mxu0 0
      %1417 = vmatprep.subr.bf16.mxu0 0
      %1418 = vmatpush2.bf16.msra.mxu0 0
      %1419 = vmatprep.subr.bf16.mxu0 0
      %1420 = vmatpush2.bf16.msra.mxu0 0
      %1421 = vmatprep.subr.bf16.mxu0 0
      %1422 = vmatpush2.bf16.msra.mxu0 0
      %1423 = vmatprep.subr.bf16.mxu0 0
      %1424 = vmatpush2.bf16.msra.mxu0 0
      %1425 = vmatprep.mubr.bf16.mxu0 0
      %1426 = vmatmul.mubr.bf16.gmra.mxu0 %v1341
      %v1427 = vpop.f32.mrf.mxu0
      %v1428 = vadd.f32 0.0, %v1427
      %v1429 = vpop.f32.mrf.mxu0
      %v1430 = vpop.f32.mrf.mxu0
      %v1431 = vadd.f32 0.0, %v1430
      %v1432 = vpop.f32.mrf.mxu0
      %1433 = vmatprep.mubr.bf16.mxu0 0
      %1434 = vmatmul.mubr.bf16.gmra.mxu0 %v1342
      %v1435 = vpop.f32.mrf.mxu0
      %v1436 = vadd.f32 0.0, %v1435
      %v1437 = vpop.f32.mrf.mxu0
      %v1438 = vpop.f32.mrf.mxu0
      %v1439 = vadd.f32 0.0, %v1438
      %v1440 = vpop.f32.mrf.mxu0
      %1441 = vdwg.mxu0
      %v1442 = vld [vmem:[#allocation2] sm:$0xff]
      %v1443 = vld [vmem:[#allocation2 + $0x8] sm:$0xff]
      %v1444 = vld [vmem:[#allocation2 + $0x10] sm:$0xff]
      %v1445 = vld [vmem:[#allocation2 + $0x18] sm:$0xff]
      %v1446 = vadd.f32 %v1442, %v1428
      %v1447 = vadd.f32 %v1443, %v1431
      %v1448 = vadd.f32 %v1444, %v1436
      %v1449 = vadd.f32 %v1445, %v1439
      %1450 = vst [vmem:[#allocation2] sm:$0xff] %v1446
      %1451 = vst [vmem:[#allocation2 + $0x8] sm:$0xff] %v1447
      %1452 = vst [vmem:[#allocation2 + $0x10] sm:$0xff] %v1448
      %1453 = vst [vmem:[#allocation2 + $0x18] sm:$0xff] %v1449
      %v1454 = vld [vmem:[%s1311] sm:$0xf]
      %v1455 = vld [vmem:[%s1311 + $0x4] sm:$0x1]
      %v1456 = vld [vmem:[%s1311 + $0x8] sm:$0xf]
      %v1457 = vld [vmem:[%s1311 + $0xc] sm:$0x1]
      %v1458 = vld [vmem:[%s1311 + $0x10] sm:$0xf]
      %v1459 = vld [vmem:[%s1311 + $0x14] sm:$0x1]
      %v1460 = vld [vmem:[%s1311 + $0x18] sm:$0xf]
      %v1461 = vld [vmem:[%s1311 + $0x1c] sm:$0x1]
      %v1463 = vshrl.u32 %v1454, 16
      %v1465 = vrot.slane %v1463, 4
      %v1466 = vshll.u32 %v1454, 16
      %v1468 = vrot.slane %v1466, 5
      %v1469 = vor.u32 %v1465, %v1468
      %v1470 = vrot.slane %v1469, 4
      %v1472 = vshll.u32 %v1455, 16
      %v1474 = vrot.slane %v1472, 5
      %v1475 = vsel %vm444, %v1470, %v1474
      %v1477 = vshrl.u32 %v1456, 16
      %v1479 = vrot.slane %v1477, 4
      %v1480 = vshll.u32 %v1456, 16
      %v1482 = vrot.slane %v1480, 5
      %v1483 = vor.u32 %v1479, %v1482
      %v1484 = vrot.slane %v1483, 4
      %v1486 = vshll.u32 %v1457, 16
      %v1488 = vrot.slane %v1486, 5
      %v1489 = vsel %vm444, %v1484, %v1488
      %v1491 = vshrl.u32 %v1458, 16
      %v1493 = vrot.slane %v1491, 4
      %v1494 = vshll.u32 %v1458, 16
      %v1496 = vrot.slane %v1494, 5
      %v1497 = vor.u32 %v1493, %v1496
      %v1498 = vrot.slane %v1497, 4
      %v1500 = vshll.u32 %v1459, 16
      %v1502 = vrot.slane %v1500, 5
      %v1503 = vsel %vm444, %v1498, %v1502
      %v1505 = vshrl.u32 %v1460, 16
      %v1507 = vrot.slane %v1505, 4
      %v1508 = vshll.u32 %v1460, 16
      %v1510 = vrot.slane %v1508, 5
      %v1511 = vor.u32 %v1507, %v1510
      %v1512 = vrot.slane %v1511, 4
      %v1514 = vshll.u32 %v1461, 16
      %v1516 = vrot.slane %v1514, 5
      %v1517 = vsel %vm444, %v1512, %v1516
      %s1518 = scalar_lea.vmem %s274, 448
      %v1519 = vld [vmem:[%s1518] sm:$0xf]
      %v1520 = vld [vmem:[%s1518 + $0x4] sm:$0xf]
      %v1521 = vld [vmem:[%s1518 + $0x8] sm:$0xf]
      %v1522 = vld [vmem:[%s1518 + $0xc] sm:$0xf]
      %v1523 = vld [vmem:[%s1518 + $0x10] sm:$0xf]
      %v1524 = vld [vmem:[%s1518 + $0x14] sm:$0xf]
      %v1525 = vld [vmem:[%s1518 + $0x18] sm:$0xf]
      %v1526 = vld [vmem:[%s1518 + $0x1c] sm:$0xf]
      %v1527 = vld [vmem:[%s1518 + $0x20] sm:$0xf]
      %v1528 = vld [vmem:[%s1518 + $0x24] sm:$0xf]
      %v1529 = vld [vmem:[%s1518 + $0x28] sm:$0xf]
      %v1530 = vld [vmem:[%s1518 + $0x2c] sm:$0xf]
      %v1531 = vld [vmem:[%s1518 + $0x30] sm:$0xf]
      %v1532 = vld [vmem:[%s1518 + $0x34] sm:$0xf]
      %v1533 = vld [vmem:[%s1518 + $0x38] sm:$0xf]
      %v1534 = vld [vmem:[%s1518 + $0x3c] sm:$0xf]
      %v1535 = vunpack.c.l.b16 %v1475
      %v1536 = vunpack.c.l.b16 %v1489
      %v1537 = vunpack.c.l.b16 %v1503
      %v1538 = vunpack.c.l.b16 %v1517
      %v1539 = vpack.c.b16 %v1536, %v1535
      %v1540 = vpack.c.b16 %v1538, %v1537
      %v1559 = vunpack.c.l.b16 %v1519
      %v1560 = vunpack.c.l.b16 %v1520
      %v1561 = vunpack.c.l.b16 %v1521
      %v1562 = vunpack.c.l.b16 %v1522
      %v1563 = vunpack.c.l.b16 %v1523
      %v1564 = vunpack.c.l.b16 %v1524
      %v1565 = vunpack.c.l.b16 %v1525
      %v1566 = vunpack.c.l.b16 %v1526
      %v1567 = vunpack.c.l.b16 %v1527
      %v1568 = vunpack.c.l.b16 %v1528
      %v1569 = vunpack.c.l.b16 %v1529
      %v1570 = vunpack.c.l.b16 %v1530
      %v1571 = vunpack.c.l.b16 %v1531
      %v1572 = vunpack.c.l.b16 %v1532
      %v1573 = vunpack.c.l.b16 %v1533
      %v1574 = vunpack.c.l.b16 %v1534
      %v1575 = vpack.c.b16 %v1560, %v1559
      %v1576 = vpack.c.b16 %v1562, %v1561
      %v1577 = vpack.c.b16 %v1564, %v1563
      %v1578 = vpack.c.b16 %v1566, %v1565
      %v1579 = vpack.c.b16 %v1568, %v1567
      %v1580 = vpack.c.b16 %v1570, %v1569
      %v1581 = vpack.c.b16 %v1572, %v1571
      %v1582 = vpack.c.b16 %v1574, %v1573
      %1591 = vmatprep.subr.bf16.mxu0 0
      %1592 = vmatpush1.bf16.msra.mxu0 %v1582
      %1593 = vmatprep.subr.bf16.mxu0 0
      %1594 = vmatpush1.bf16.msra.mxu0 %v1581
      %1595 = vmatprep.subr.bf16.mxu0 0
      %1596 = vmatpush1.bf16.msra.mxu0 %v1580
      %1597 = vmatprep.subr.bf16.mxu0 0
      %1598 = vmatpush1.bf16.msra.mxu0 %v1579
      %1599 = vmatprep.subr.bf16.mxu0 0
      %1600 = vmatpush1.bf16.msra.mxu0 %v1578
      %1601 = vmatprep.subr.bf16.mxu0 0
      %1602 = vmatpush1.bf16.msra.mxu0 %v1577
      %1603 = vmatprep.subr.bf16.mxu0 0
      %1604 = vmatpush1.bf16.msra.mxu0 %v1576
      %1605 = vmatprep.subr.bf16.mxu0 0
      %1606 = vmatpush1.bf16.msra.mxu0 %v1575
      %1607 = vmatprep.subr.bf16.mxu0 0
      %1608 = vmatpush2.bf16.msra.mxu0 0
      %1609 = vmatprep.subr.bf16.mxu0 0
      %1610 = vmatpush2.bf16.msra.mxu0 0
      %1611 = vmatprep.subr.bf16.mxu0 0
      %1612 = vmatpush2.bf16.msra.mxu0 0
      %1613 = vmatprep.subr.bf16.mxu0 0
      %1614 = vmatpush2.bf16.msra.mxu0 0
      %1615 = vmatprep.subr.bf16.mxu0 0
      %1616 = vmatpush2.bf16.msra.mxu0 0
      %1617 = vmatprep.subr.bf16.mxu0 0
      %1618 = vmatpush2.bf16.msra.mxu0 0
      %1619 = vmatprep.subr.bf16.mxu0 0
      %1620 = vmatpush2.bf16.msra.mxu0 0
      %1621 = vmatprep.subr.bf16.mxu0 0
      %1622 = vmatpush2.bf16.msra.mxu0 0
      %1623 = vmatprep.mubr.bf16.mxu0 0
      %1624 = vmatmul.mubr.bf16.gmra.mxu0 %v1539
      %v1625 = vpop.f32.mrf.mxu0
      %v1626 = vadd.f32 0.0, %v1625
      %v1627 = vpop.f32.mrf.mxu0
      %v1628 = vpop.f32.mrf.mxu0
      %v1629 = vadd.f32 0.0, %v1628
      %v1630 = vpop.f32.mrf.mxu0
      %1631 = vmatprep.mubr.bf16.mxu0 0
      %1632 = vmatmul.mubr.bf16.gmra.mxu0 %v1540
      %v1633 = vpop.f32.mrf.mxu0
      %v1634 = vadd.f32 0.0, %v1633
      %v1635 = vpop.f32.mrf.mxu0
      %v1636 = vpop.f32.mrf.mxu0
      %v1637 = vadd.f32 0.0, %v1636
      %v1638 = vpop.f32.mrf.mxu0
      %1639 = vdwg.mxu0
      %v1640 = vld [vmem:[#allocation2] sm:$0xff]
      %v1641 = vld [vmem:[#allocation2 + $0x8] sm:$0xff]
      %v1642 = vld [vmem:[#allocation2 + $0x10] sm:$0xff]
      %v1643 = vld [vmem:[#allocation2 + $0x18] sm:$0xff]
      %v1644 = vadd.f32 %v1640, %v1626
      %v1645 = vadd.f32 %v1641, %v1629
      %v1646 = vadd.f32 %v1642, %v1634
      %v1647 = vadd.f32 %v1643, %v1637
      %1648 = vst [vmem:[#allocation2] sm:$0xff] %v1644
      %1649 = vst [vmem:[#allocation2 + $0x8] sm:$0xff] %v1645
      %1650 = vst [vmem:[#allocation2 + $0x10] sm:$0xff] %v1646
      %1651 = vst [vmem:[#allocation2 + $0x18] sm:$0xff] %v1647
      %v1652 = vld [vmem:[%s1311] sm:$0xe]
      %v1653 = vld [vmem:[%s1311 + $0x4] sm:$0x1]
      %v1654 = vld [vmem:[%s1311 + $0x8] sm:$0xe]
      %v1655 = vld [vmem:[%s1311 + $0xc] sm:$0x1]
      %v1656 = vld [vmem:[%s1311 + $0x10] sm:$0xe]
      %v1657 = vld [vmem:[%s1311 + $0x14] sm:$0x1]
      %v1658 = vld [vmem:[%s1311 + $0x18] sm:$0xe]
      %v1659 = vld [vmem:[%s1311 + $0x1c] sm:$0x1]
      %v1668 = vrot.slane %v1652, 5
      %v1669 = vrot.slane %v1668, 4
      %v1670 = vrot.slane %v1653, 5
      %v1671 = vsel %vm653, %v1669, %v1670
      %v1672 = vrot.slane %v1654, 5
      %v1673 = vrot.slane %v1672, 4
      %v1674 = vrot.slane %v1655, 5
      %v1675 = vsel %vm653, %v1673, %v1674
      %v1676 = vrot.slane %v1656, 5
      %v1677 = vrot.slane %v1676, 4
      %v1678 = vrot.slane %v1657, 5
      %v1679 = vsel %vm653, %v1677, %v1678
      %v1680 = vrot.slane %v1658, 5
      %v1681 = vrot.slane %v1680, 4
      %v1682 = vrot.slane %v1659, 5
      %v1683 = vsel %vm653, %v1681, %v1682
      %s1684 = scalar_lea.vmem %s274, 512
      %v1685 = vld [vmem:[%s1684] sm:$0xf]
      %v1686 = vld [vmem:[%s1684 + $0x4] sm:$0xf]
      %v1687 = vld [vmem:[%s1684 + $0x8] sm:$0xf]
      %v1688 = vld [vmem:[%s1684 + $0xc] sm:$0xf]
      %v1689 = vld [vmem:[%s1684 + $0x10] sm:$0xf]
      %v1690 = vld [vmem:[%s1684 + $0x14] sm:$0xf]
      %v1691 = vld [vmem:[%s1684 + $0x18] sm:$0xf]
      %v1692 = vld [vmem:[%s1684 + $0x1c] sm:$0xf]
      %v1693 = vld [vmem:[%s1684 + $0x20] sm:$0xf]
      %v1694 = vld [vmem:[%s1684 + $0x24] sm:$0xf]
      %v1695 = vld [vmem:[%s1684 + $0x28] sm:$0xf]
      %v1696 = vld [vmem:[%s1684 + $0x2c] sm:$0xf]
      %v1697 = vld [vmem:[%s1684 + $0x30] sm:$0xf]
      %v1698 = vld [vmem:[%s1684 + $0x34] sm:$0xf]
      %v1699 = vld [vmem:[%s1684 + $0x38] sm:$0xf]
      %v1700 = vld [vmem:[%s1684 + $0x3c] sm:$0xf]
      %v1701 = vunpack.c.l.b16 %v1671
      %v1702 = vunpack.c.l.b16 %v1675
      %v1703 = vunpack.c.l.b16 %v1679
      %v1704 = vunpack.c.l.b16 %v1683
      %v1705 = vpack.c.b16 %v1702, %v1701
      %v1706 = vpack.c.b16 %v1704, %v1703
      %v1725 = vunpack.c.l.b16 %v1685
      %v1726 = vunpack.c.l.b16 %v1686
      %v1727 = vunpack.c.l.b16 %v1687
      %v1728 = vunpack.c.l.b16 %v1688
      %v1729 = vunpack.c.l.b16 %v1689
      %v1730 = vunpack.c.l.b16 %v1690
      %v1731 = vunpack.c.l.b16 %v1691
      %v1732 = vunpack.c.l.b16 %v1692
      %v1733 = vunpack.c.l.b16 %v1693
      %v1734 = vunpack.c.l.b16 %v1694
      %v1735 = vunpack.c.l.b16 %v1695
      %v1736 = vunpack.c.l.b16 %v1696
      %v1737 = vunpack.c.l.b16 %v1697
      %v1738 = vunpack.c.l.b16 %v1698
      %v1739 = vunpack.c.l.b16 %v1699
      %v1740 = vunpack.c.l.b16 %v1700
      %v1741 = vpack.c.b16 %v1726, %v1725
      %v1742 = vpack.c.b16 %v1728, %v1727
      %v1743 = vpack.c.b16 %v1730, %v1729
      %v1744 = vpack.c.b16 %v1732, %v1731
      %v1745 = vpack.c.b16 %v1734, %v1733
      %v1746 = vpack.c.b16 %v1736, %v1735
      %v1747 = vpack.c.b16 %v1738, %v1737
      %v1748 = vpack.c.b16 %v1740, %v1739
      %1757 = vmatprep.subr.bf16.mxu0 0
      %1758 = vmatpush1.bf16.msra.mxu0 %v1748
      %1759 = vmatprep.subr.bf16.mxu0 0
      %1760 = vmatpush1.bf16.msra.mxu0 %v1747
      %1761 = vmatprep.subr.bf16.mxu0 0
      %1762 = vmatpush1.bf16.msra.mxu0 %v1746
      %1763 = vmatprep.subr.bf16.mxu0 0
      %1764 = vmatpush1.bf16.msra.mxu0 %v1745
      %1765 = vmatprep.subr.bf16.mxu0 0
      %1766 = vmatpush1.bf16.msra.mxu0 %v1744
      %1767 = vmatprep.subr.bf16.mxu0 0
      %1768 = vmatpush1.bf16.msra.mxu0 %v1743
      %1769 = vmatprep.subr.bf16.mxu0 0
      %1770 = vmatpush1.bf16.msra.mxu0 %v1742
      %1771 = vmatprep.subr.bf16.mxu0 0
      %1772 = vmatpush1.bf16.msra.mxu0 %v1741
      %1773 = vmatprep.subr.bf16.mxu0 0
      %1774 = vmatpush2.bf16.msra.mxu0 0
      %1775 = vmatprep.subr.bf16.mxu0 0
      %1776 = vmatpush2.bf16.msra.mxu0 0
      %1777 = vmatprep.subr.bf16.mxu0 0
      %1778 = vmatpush2.bf16.msra.mxu0 0
      %1779 = vmatprep.subr.bf16.mxu0 0
      %1780 = vmatpush2.bf16.msra.mxu0 0
      %1781 = vmatprep.subr.bf16.mxu0 0
      %1782 = vmatpush2.bf16.msra.mxu0 0
      %1783 = vmatprep.subr.bf16.mxu0 0
      %1784 = vmatpush2.bf16.msra.mxu0 0
      %1785 = vmatprep.subr.bf16.mxu0 0
      %1786 = vmatpush2.bf16.msra.mxu0 0
      %1787 = vmatprep.subr.bf16.mxu0 0
      %1788 = vmatpush2.bf16.msra.mxu0 0
      %1789 = vmatprep.mubr.bf16.mxu0 0
      %1790 = vmatmul.mubr.bf16.gmra.mxu0 %v1705
      %v1791 = vpop.f32.mrf.mxu0
      %v1792 = vadd.f32 0.0, %v1791
      %v1793 = vpop.f32.mrf.mxu0
      %v1794 = vpop.f32.mrf.mxu0
      %v1795 = vadd.f32 0.0, %v1794
      %v1796 = vpop.f32.mrf.mxu0
      %1797 = vmatprep.mubr.bf16.mxu0 0
      %1798 = vmatmul.mubr.bf16.gmra.mxu0 %v1706
      %v1799 = vpop.f32.mrf.mxu0
      %v1800 = vadd.f32 0.0, %v1799
      %v1801 = vpop.f32.mrf.mxu0
      %v1802 = vpop.f32.mrf.mxu0
      %v1803 = vadd.f32 0.0, %v1802
      %v1804 = vpop.f32.mrf.mxu0
      %1805 = vdwg.mxu0
      %v1806 = vld [vmem:[#allocation2] sm:$0xff]
      %v1807 = vld [vmem:[#allocation2 + $0x8] sm:$0xff]
      %v1808 = vld [vmem:[#allocation2 + $0x10] sm:$0xff]
      %v1809 = vld [vmem:[#allocation2 + $0x18] sm:$0xff]
      %v1810 = vadd.f32 %v1806, %v1792
      %v1811 = vadd.f32 %v1807, %v1795
      %v1812 = vadd.f32 %v1808, %v1800
      %v1813 = vadd.f32 %v1809, %v1803
      %1814 = vst [vmem:[#allocation2] sm:$0xff] %v1810
      %1815 = vst [vmem:[#allocation2 + $0x8] sm:$0xff] %v1811
      %1816 = vst [vmem:[#allocation2 + $0x10] sm:$0xff] %v1812
      %1817 = vst [vmem:[#allocation2 + $0x18] sm:$0xff] %v1813
      %v1818 = vld [vmem:[#allocation2] sm:$0xff]
      %v1819 = vld [vmem:[#allocation2 + $0x8] sm:$0xff]
      %v1820 = vld [vmem:[#allocation2 + $0x10] sm:$0xff]
      %v1821 = vld [vmem:[#allocation2 + $0x18] sm:$0xff]
      %v1822 = vpack.c.bf16 %v1819, %v1818
      %v1823 = vpack.c.bf16 %v1821, %v1820
      %v1826 = vunpack.c.l.b16 %v1822
      %v1827 = vunpack.c.h.b16 %v1822
      %v1828 = vunpack.c.l.b16 %v1823
      %v1829 = vunpack.c.h.b16 %v1823
      %v1830 = vpack.c.b16 %v1826, %v1826
      %v1831 = vpack.c.b16 %v1827, %v1827
      %v1832 = vpack.c.b16 %v1828, %v1828
      %v1833 = vpack.c.b16 %v1829, %v1829
      %1838 = vst [vmem:[%s286] sm:$0xf] %v1830
      %1839 = vst [vmem:[%s286 + $0x4] sm:$0xf] %v1831
      %1840 = vst [vmem:[%s286 + $0x8] sm:$0xf] %v1832
      %1841 = vst [vmem:[%s286 + $0xc] sm:$0xf] %v1833
      %v1842 = vadd.f32 %v1818, %v1819
      %v1843 = vadd.f32 %v1842, %v1820
      %v1844 = vadd.f32 %v1843, %v1821
      %v1845 = vrot.slane %v1844, 4
      %v1846 = vadd.f32 %v1844, %v1845
      %v1847 = vrot.slane %v1846, 2
      %v1848 = vadd.f32 %v1846, %v1847
      %v1849 = vrot.slane %v1848, 1
      %v1850 = vadd.f32 %v1848, %v1849
      %v1851 = vmul.f32 %v1818, %v1818
      %v1852 = vmul.f32 %v1819, %v1819
      %v1853 = vmul.f32 %v1820, %v1820
      %v1854 = vmul.f32 %v1821, %v1821
      %v1855 = vadd.f32 %v1851, %v1852
      %v1856 = vadd.f32 %v1855, %v1853
      %v1857 = vadd.f32 %v1856, %v1854
      %v1858 = vrot.slane %v1857, 4
      %v1859 = vadd.f32 %v1857, %v1858
      %v1860 = vrot.slane %v1859, 2
      %v1861 = vadd.f32 %v1859, %v1860
      %v1862 = vrot.slane %v1861, 1
      %v1863 = vadd.f32 %v1861, %v1862
      %p1864 = scmp.eq.s32.totalorder %s23, 0
      // Predicated region
      $region29: #{basic_block_forward.7} parent=27 // pred_check
        %p1865 = pneg %p1864
      $region30: #{basic_block_forward.7} parent=27 // pred_check_branch
        %1867 = sbr.rel (%p1865) target = $region32
      $region31: #{basic_block_forward.7} parent=27 // pred_region
        %1868 = vst [vmem:[%s293] sm:$0x1] %v1850
        %1869 = vst [vmem:[%s299] sm:$0x1] %v1863
      $region32: #{basic_block_forward.7} parent=27 // pred_fallthru
        _
      %p1870 = scmp.gt.s32.totalorder %s23, 0
      // Predicated region
      $region33: #{basic_block_forward.7} parent=27 // pred_check
        %p1871 = pneg %p1870
      $region34: #{basic_block_forward.7} parent=27 // pred_check_branch
        %1873 = sbr.rel (%p1871) target = $region36
      $region35: #{basic_block_forward.7} parent=27 // pred_region
        %v1874 = vld [vmem:[%s293] sm:$0x1]
        %v1875 = vadd.f32 %v1874, %v1850
        %1876 = vst [vmem:[%s293] sm:$0x1] %v1875
        %v1877 = vld [vmem:[%s299] sm:$0x1]
        %v1878 = vadd.f32 %v1877, %v1863
        %1879 = vst [vmem:[%s299] sm:$0x1] %v1878
      $region36: #{basic_block_forward.7} parent=27 // pred_fallthru
        _
      %s1880 = smul.u32 4, %s23
      %p1881 = scmp.lt.s32.totalorder %s22, 1
      %s1882 = scalar_select %p1881, %s22, 1
      %p1883 = scmp.lt.s32.totalorder %s1880, 7
      %s1884 = scalar_select %p1883, %s1880, 7
      %p1885 = scmp.lt.s32.totalorder %s21, 0
      %s1886 = scalar_select %p1885, %s21, 0
      %s1887 = sadd.s32 %s1886, %s1884
      %s1888 = smul.addr %s1882, 8
      %s1889 = sadd.s32 %s1887, %s1888
      %s1890 = smul.addr %s1889, 4
      %s1891 = scalar_lea.vmem %s2, %s1890
      %p1892 = scmp.lt.s32.totalorder %s22, 1
      %s1893 = scalar_select %p1892, %s22, 1
      %p1894 = scmp.lt.s32.totalorder %s21, 0
      %s1895 = scalar_select %p1894, %s21, 0
      %s1896 = sadd.s32 %s1895, %s1893
      %s1897 = scalar_lea.vmem %s3, %s1896
      %p1898 = scmp.lt.s32.totalorder %s22, 1
      %s1899 = scalar_select %p1898, %s22, 1
      %p1900 = scmp.lt.s32.totalorder %s21, 0
      %s1901 = scalar_select %p1900, %s21, 0
      %s1902 = sadd.s32 %s1901, %s1899
      %s1903 = scalar_lea.vmem %s4, %s1902
      // Predicated region
      $region37: #{basic_block_forward.7} parent=27 // pred_check
        %p1904 = pneg %p111
      $region38: #{basic_block_forward.7} parent=27 // pred_check_branch
        %1906 = sbr.rel (%p1904) target = $region40
      $region39: #{basic_block_forward.7} parent=27 // pred_region
        %s1907 = smul.u32 4, %s23
      $region40: #{basic_block_forward.7} parent=27 // pred_fallthru
        _
      // Predicated region
      $region41: #{basic_block_forward.7} parent=27 // pred_check
        %p1908 = pneg %p139
      $region42: #{basic_block_forward.7} parent=27 // pred_check_branch
        %1910 = sbr.rel (%p1908) target = $region44
      $region43: #{basic_block_forward.7} parent=27 // pred_region
        _
      $region44: #{basic_block_forward.7} parent=27 // pred_fallthru
        _
      // Predicated region
      $region45: #{basic_block_forward.7} parent=27 // pred_check
        %p1911 = pneg %p167
      $region46: #{basic_block_forward.7} parent=27 // pred_check_branch
        %1913 = sbr.rel (%p1911) target = $region48
      $region47: #{basic_block_forward.7} parent=27 // pred_region
        _
      $region48: #{basic_block_forward.7} parent=27 // pred_fallthru
        _
    $region28: #{basic_block_forward.7} parent=5 // pred_fallthru
      _
    %p1914 = scmp.le.s32.totalorder 2, %s11
    // Predicated region
    $region49: #{basic_block_forward.7} parent=5 // pred_check
      %p1915 = pneg %p1914
    $region50: #{basic_block_forward.7} parent=5 // pred_check_branch
      %1917 = sbr.rel (%p1915) target = $region52
    $region51: #{basic_block_forward.7} parent=5 // pred_region
      %s1918 = ssub.s32 %s11, 2
      // Predicated region
      $region53: #{basic_block_forward.7} parent=51 // pred_check
        %p1919 = pneg %p117
      $region54: #{basic_block_forward.7} parent=51 // pred_check_branch
        %1921 = sbr.rel (%p1919) target = $region56
      $region55: #{basic_block_forward.7} parent=51 // pred_region
        %s1922 = smul.u32 4, %s26
        %p1923 = scmp.lt.s32.totalorder %s25, 1
        %s1924 = scalar_select %p1923, %s25, 1
        %p1925 = scmp.lt.s32.totalorder %s1922, 7
        %s1926 = scalar_select %p1925, %s1922, 7
        %p1927 = scmp.lt.s32.totalorder %s24, 0
        %s1928 = scalar_select %p1927, %s24, 0
        %s1929 = sadd.s32 %s1928, %s1926
        %s1930 = smul.addr %s1924, 8
        %s1931 = sadd.s32 %s1929, %s1930
        %s1932 = smul.addr %s1931, 4
        %s1933 = scalar_lea.vmem %s2, %s1932
      $region56: #{basic_block_forward.7} parent=51 // pred_fallthru
        _
      // Predicated region
      $region57: #{basic_block_forward.7} parent=51 // pred_check
        %p1934 = pneg %p145
      $region58: #{basic_block_forward.7} parent=51 // pred_check_branch
        %1936 = sbr.rel (%p1934) target = $region60
      $region59: #{basic_block_forward.7} parent=51 // pred_region
        %p1937 = scmp.lt.s32.totalorder %s25, 1
        %s1938 = scalar_select %p1937, %s25, 1
        %p1939 = scmp.lt.s32.totalorder %s24, 0
        %s1940 = scalar_select %p1939, %s24, 0
        %s1941 = sadd.s32 %s1940, %s1938
        %s1942 = scalar_lea.vmem %s3, %s1941
      $region60: #{basic_block_forward.7} parent=51 // pred_fallthru
        _
      // Predicated region
      $region61: #{basic_block_forward.7} parent=51 // pred_check
        %p1943 = pneg %p173
      $region62: #{basic_block_forward.7} parent=51 // pred_check_branch
        %1945 = sbr.rel (%p1943) target = $region64
      $region63: #{basic_block_forward.7} parent=51 // pred_region
        %p1946 = scmp.lt.s32.totalorder %s25, 1
        %s1947 = scalar_select %p1946, %s25, 1
        %p1948 = scmp.lt.s32.totalorder %s24, 0
        %s1949 = scalar_select %p1948, %s24, 0
        %s1950 = sadd.s32 %s1949, %s1947
        %s1951 = scalar_lea.vmem %s4, %s1950
      $region64: #{basic_block_forward.7} parent=51 // pred_fallthru
        _
    $region52: #{basic_block_forward.7} parent=5 // pred_fallthru
      _
  $region6: #{basic_block_forward.7} parent=0 // loop_footer
    %s15 = sadd.s32 1, %s11
  $region7: #{basic_block_forward.7} parent=0 // loop_footer_branch
    %10 = sbr.rel target = $region3
  $region8: #{basic_block_forward.7} parent=0 // loop_exit
    _

</llo_original>
